<compile_context>
chip_gen: v7x
topology: tpu7x:2x2x1
jax: 0.10.0
libtpu: 0.0.40
codegen_flags: <defaults>
</compile_context>

<pallas_src>
import math
import functools

import jax
import jax.numpy as jnp
from jax import lax
from jax.experimental import pallas as pl
from jax.experimental.pallas import tpu as pltpu

NEG_INF = -1e30  # causal / padding mask fill


def _layernorm(x, w, b, eps=1e-5):
    mu = jnp.mean(x, axis=-1, keepdims=True)
    xc = x - mu
    var = jnp.mean(xc * xc, axis=-1, keepdims=True)
    return xc * lax.rsqrt(var + eps) * w + b


def _text_encoder_kernel(num_heads, batch_block, mlp_chunk_seqs,
                         eot_ref,                  # (B,)   int32 SMEM (scalar prefetch)
                         x0_ref,                   # (bb, S, D) f32  prompt block
                         pos_ref,                  # (S, D)  f32  (grid-invariant)
                         mask_ref,                 # (S, S)  f32  causal+pad mask (grid-invariant)
                         ln1_w_ref, ln1_b_ref,     # (1, 1, D)  f32
                         qkv_w_ref,                # (1, D, 3D) bf16
                         qkv_b_ref,                # (1, 1, 3D) f32
                         out_w_ref,                # (1, D, D)  bf16
                         out_b_ref,                # (1, 1, D)  f32
                         ln2_w_ref, ln2_b_ref,     # (1, 1, D)  f32
                         fc_w_ref,                 # (1, D, 4D) bf16
                         fc_b_ref,                 # (1, 1, 4D) f32
                         proj_w_ref,               # (1, 4D, D) bf16
                         proj_b_ref,               # (1, 1, D)  f32
                         lnf_w_ref, lnf_b_ref,     # (1, D) f32
                         tproj_ref,                # (D, E) bf16
                         o_ref,                    # (1, bb, E) f32
                         x_res):                   # VMEM (bb, S, D) f32 residual carry
    pb = pl.program_id(0)                  # batch-block index ("parallel")
    li = pl.program_id(1)                  # layer index ("arbitrary", weights streamed)
    S, D = pos_ref.shape
    E = tproj_ref.shape[1]
    bb = batch_block
    H = num_heads
    Hd = D // H
    scale = 1.0 / math.sqrt(Hd)
    bf16 = jnp.bfloat16
    f32 = jnp.float32

    # ---- first layer step: build the residual stream (prompts + pos) ----
    @pl.when(li == 0)
    def _init():
        x_res[...] = x0_ref[...] + pos_ref[...]          # broadcast add, no tile

    x = x_res[...].reshape(bb * S, D)                    # free collapse (S % 8 == 0)

    # ---- multi-head self-attention block ----
    h1 = _layernorm(x, ln1_w_ref[0], ln1_b_ref[0])
    qkv = jnp.dot(h1.astype(bf16), qkv_w_ref[0],
                  preferred_element_type=f32) + qkv_b_ref[0]
    q3 = (qkv[:, 0 * D:1 * D] * scale).astype(bf16).reshape(bb, S, D)  # fold 1/sqrt(Hd) into q
    k3 = qkv[:, 1 * D:2 * D].astype(bf16).reshape(bb, S, D)
    v3 = qkv[:, 2 * D:3 * D].astype(bf16).reshape(bb, S, D)

    mask = mask_ref[...]                                 # (S, S), loaded once
    head_out = []
    for h in range(H):                                   # static unroll over heads only
        cs = slice(h * Hd, (h + 1) * Hd)
        s = jnp.einsum('bqd,bkd->bqk', q3[:, :, cs], k3[:, :, cs],
                       preferred_element_type=f32)       # (bb, S, S) f32
        s = s + mask
        s = s - jnp.max(s, axis=-1, keepdims=True)
        p = jnp.exp(s)
        p = p * pl.reciprocal(jnp.sum(p, axis=-1, keepdims=True), approx=True)
        head_out.append(jnp.einsum('bqk,bkd->bqd', p.astype(bf16), v3[:, :, cs],
                                   preferred_element_type=f32))
    attn = head_out[0] if H == 1 else jnp.concatenate(head_out, axis=-1)  # (bb, S, D)
    attn = attn.reshape(bb * S, D)
    attn = jnp.dot(attn.astype(bf16), out_w_ref[0],
                   preferred_element_type=f32) + out_b_ref[0]
    x = x + attn
    x_res[...] = x.reshape(bb, S, D)                     # post-attention residual

    # ---- MLP block (c_fc -> QuickGELU -> c_proj), chunked over sequences ----
    cb = mlp_chunk_seqs
    n_chunks = bb // cb

    def _mlp_chunk(c):
        start = c * cb
        xc = x_res[pl.ds(start, cb)].reshape(cb * S, D)
        h2 = _layernorm(xc, ln2_w_ref[0], ln2_b_ref[0])
        fc = jnp.dot(h2.astype(bf16), fc_w_ref[0],
                     preferred_element_type=f32) + fc_b_ref[0]
        fc = (fc * jax.nn.sigmoid(1.702 * fc)).astype(bf16)      # QuickGELU, bf16 into proj
        mlp = jnp.dot(fc, proj_w_ref[0],
                      preferred_element_type=f32) + proj_b_ref[0]
        x_res[pl.ds(start, cb)] = (xc + mlp).reshape(cb, S, D)

    if n_chunks == 1:
        _mlp_chunk(0)                                    # static offset, no loop machinery
    else:
        pl.loop(0, n_chunks)(_mlp_chunk)                 # bounds live ranges / VMEM

    # ---- last layer step: EOT gather -> ln_final -> text projection ----
    @pl.when(li == pl.num_programs(1) - 1)
    def _finalize():
        rows = []
        for b in range(bb):                              # dynamic row read of EOT token
            e = eot_ref[pb * bb + b]
            rows.append(x_res[b, pl.ds(e, 1), :])        # (1, D)
        pooled = rows[0] if bb == 1 else jnp.concatenate(rows, axis=0)   # (bb, D)
        pooled = _layernorm(pooled, lnf_w_ref[...], lnf_b_ref[...])      # LN on bb rows only
        out = jnp.dot(pooled.astype(bf16), tproj_ref[...],
                      preferred_element_type=f32)                        # (bb, E)
        o_ref[...] = out.reshape(1, bb, E)


def _default_vmem_limit():
    try:
        cap = int(pltpu.get_tpu_info().vmem_capacity_bytes)
    except Exception:
        cap = 128 * 1024 * 1024
    # ~5/8 of physical VMEM, capped: 40 MiB on v7x (64 MiB), 80 MiB on v5e/v6e.
    return min(cap * 5 // 8, 80 * 1024 * 1024)


def text_encoder(prompts, tokenized_prompts, params, *, batch_block=None,
                 max_rows_per_block=2048, mlp_chunk_bytes=4 << 20):
    """prompts: (B, S, D) f32; tokenized_prompts: (B, S) int -> (B, E) f32."""
    B, S, D = prompts.shape
    L = params["ln1_w"].shape[0]
    H = params["num_heads"]
    E = params["text_projection"].shape[1]
    bf16 = jnp.bfloat16

    # --- pad the sequence dim to a multiple of 8 (sublane alignment) ---
    S_pad = ((S + 7) // 8) * 8
    pos = params["positional_embedding"].astype(jnp.float32)
    x0 = prompts.astype(jnp.float32)
    if S_pad != S:
        x0 = jnp.pad(x0, ((0, 0), (0, S_pad - S), (0, 0)))
        pos = jnp.pad(pos, ((0, S_pad - S), (0, 0)))

    # causal mask (+ padded key columns masked), built once outside the kernel
    i = jnp.arange(S_pad)
    mask = jnp.where((i[None, :] <= i[:, None]) & (i[None, :] < S),
                     0.0, NEG_INF).astype(jnp.float32)

    # glue: EOT index = argmax over token ids (scalar prefetch -> SMEM)
    eot_idx = jnp.argmax(tokenized_prompts, axis=-1).astype(jnp.int32)

    # --- batch block: bound the activation working set; NB > 1 uses both v7x TCs ---
    if batch_block is None:
        batch_block = 1
        for cand in range(1, B + 1):
            if B % cand == 0 and cand * S_pad <= max_rows_per_block:
                batch_block = cand
    assert B % batch_block == 0
    bb = batch_block
    NB = B // bb

    # --- MLP chunk (sequences per chunk) so the f32 fc temp stays bounded ---
    cb = 1
    for cand in range(1, bb + 1):
        if bb % cand == 0 and cand * S_pad * (4 * D) * 4 <= mlp_chunk_bytes:
            cb = cand

    def per_layer_vec(a):            # (L, n) -> (L, 1, n) for (8,128)-rule-safe blocks
        return a.reshape(L, 1, a.shape[-1])

    weights = [
        per_layer_vec(params["ln1_w"]), per_layer_vec(params["ln1_b"]),
        params["qkv_w"].astype(bf16),   per_layer_vec(params["qkv_b"]),
        params["out_w"].astype(bf16),   per_layer_vec(params["out_b"]),
        per_layer_vec(params["ln2_w"]), per_layer_vec(params["ln2_b"]),
        params["fc_w"].astype(bf16),    per_layer_vec(params["fc_b"]),
        params["proj_w"].astype(bf16),  per_layer_vec(params["proj_b"]),
    ]
    finals = [params["lnf_w"].astype(jnp.float32),
              params["lnf_b"].astype(jnp.float32),
              params["text_projection"].astype(bf16)]

    def layer_spec(a):               # stream one layer tile per grid step along L
        nd = a.ndim
        return pl.BlockSpec((1,) + a.shape[1:],
                            lambda pb, l, eot, _nd=nd: (l,) + (0,) * (_nd - 1))

    def invariant_spec(a):           # grid-invariant block (fetched once, stays resident)
        nd = a.ndim
        return pl.BlockSpec(a.shape, lambda pb, l, eot, _nd=nd: (0,) * _nd)

    in_specs = (
        [pl.BlockSpec((bb, S_pad, D), lambda pb, l, eot: (pb, 0, 0)),   # prompt block
         invariant_spec(pos),
         invariant_spec(mask)]
        + [layer_spec(w) for w in weights]
        + [invariant_spec(w) for w in finals]
    )

    kernel = functools.partial(_text_encoder_kernel, H, bb, cb)

    out = pl.pallas_call(
        kernel,
        out_shape=jax.ShapeDtypeStruct((NB, bb, E), jnp.float32),
        grid_spec=pltpu.PrefetchScalarGridSpec(
            num_scalar_prefetch=1,
            grid=(NB, L),
            in_specs=in_specs,
            out_specs=pl.BlockSpec((1, bb, E), lambda pb, l, eot: (pb, 0, 0)),
            scratch_shapes=[pltpu.VMEM((bb, S_pad, D), jnp.float32)],
        ),
        compiler_params=pltpu.CompilerParams(
            dimension_semantics=("parallel", "arbitrary"),
            vmem_limit_bytes=_default_vmem_limit(),
        ),
    )(eot_idx, x0, pos, mask, *weights, *finals)

    return out.reshape(B, E)


def text_encoder_ref(prompts, tokenized_prompts, params):
    """Pure-JAX f32 reference mirroring the PyTorch TextEncoder forward."""
    B, S, D = prompts.shape
    L = params["ln1_w"].shape[0]
    H = params["num_heads"]
    Hd = D // H

    def ln(y, w, b, eps=1e-5):
        mu = y.mean(-1, keepdims=True)
        var = ((y - mu) ** 2).mean(-1, keepdims=True)
        return (y - mu) / jnp.sqrt(var + eps) * w + b

    x = prompts + params["positional_embedding"][None]
    i = jnp.arange(S)
    causal = jnp.where(i[None, :] <= i[:, None], 0.0, NEG_INF)

    def heads(t):
        return t.reshape(B, S, H, Hd).transpose(0, 2, 1, 3)

    for l in range(L):
        h1 = ln(x, params["ln1_w"][l], params["ln1_b"][l])
        qkv = h1 @ params["qkv_w"][l] + params["qkv_b"][l]
        q, k, v = jnp.split(qkv, 3, axis=-1)
        s = jnp.einsum("bhqd,bhkd->bhqk", heads(q), heads(k)) / math.sqrt(Hd) + causal
        p = jax.nn.softmax(s, axis=-1)
        a = jnp.einsum("bhqk,bhkd->bhqd", p, heads(v)).transpose(0, 2, 1, 3)
        a = a.reshape(B, S, D)
        x = x + a @ params["out_w"][l] + params["out_b"][l]
        h2 = ln(x, params["ln2_w"][l], params["ln2_b"][l])
        fc = h2 @ params["fc_w"][l] + params["fc_b"][l]
        fc = fc * jax.nn.sigmoid(1.702 * fc)
        x = x + fc @ params["proj_w"][l] + params["proj_b"][l]

    x = ln(x, params["lnf_w"][0], params["lnf_b"][0])
    eot = jnp.argmax(tokenized_prompts, axis=-1)
    pooled = x[jnp.arange(B), eot]
    return pooled @ params["text_projection"]


def make_params(key, L, S, D, H, E):
    """Deterministic synthetic CLIP text-transformer params.

    Linear weights are stored pre-transposed to (in, out) so the kernel does
    x @ W directly (PyTorch nn.Linear stores (out, in) and does x @ W.T).
    """
    ks = jax.random.split(key, 12)
    s = 0.02
    params = {
        "num_heads": H,
        "positional_embedding": s * jax.random.normal(ks[0], (S, D), jnp.float32),
        "ln1_w": jnp.ones((L, D), jnp.float32),
        "ln1_b": jnp.zeros((L, D), jnp.float32),
        "qkv_w": s * jax.random.normal(ks[1], (L, D, 3 * D), jnp.float32),
        "qkv_b": s * jax.random.normal(ks[2], (L, 3 * D), jnp.float32),
        "out_w": s * jax.random.normal(ks[3], (L, D, D), jnp.float32),
        "out_b": s * jax.random.normal(ks[4], (L, D), jnp.float32),
        "ln2_w": jnp.ones((L, D), jnp.float32),
        "ln2_b": jnp.zeros((L, D), jnp.float32),
        "fc_w": s * jax.random.normal(ks[5], (L, D, 4 * D), jnp.float32),
        "fc_b": s * jax.random.normal(ks[6], (L, 4 * D), jnp.float32),
        "proj_w": s * jax.random.normal(ks[7], (L, 4 * D, D), jnp.float32),
        "proj_b": s * jax.random.normal(ks[8], (L, D), jnp.float32),
        "lnf_w": jnp.ones((1, D), jnp.float32),
        "lnf_b": jnp.zeros((1, D), jnp.float32),
        "text_projection": s * jax.random.normal(ks[9], (D, E), jnp.float32),
    }
    return params


if __name__ == "__main__":
    # small CLIP-like shapes; S=7 deliberately exercises the sequence-padding path
    B, S, D, H, L, E = 2, 7, 32, 4, 2, 64

    key = jax.random.PRNGKey(0)
    k_prompt, k_param = jax.random.split(key)

    params = make_params(k_param, L, S, D, H, E)

    # "prompts" are learned context embeddings concatenated with token embeds
    prompts = 0.1 * jax.random.normal(k_prompt, (B, S, D), jnp.float32)

    # synthetic tokenized prompts: EOT token (largest id) at different positions
    tokenized_prompts = jnp.tile(jnp.arange(S, dtype=jnp.int32)[None, :] + 10, (B, 1))
    tokenized_prompts = tokenized_prompts.at[0, 5].set(49407)
    tokenized_prompts = tokenized_prompts.at[1, 3].set(49407)

    out = text_encoder(prompts, tokenized_prompts, params)
    jax.block_until_ready(out)
    assert out.shape == (B, E) and out.dtype == jnp.float32

    # loose tolerance: kernel runs matmuls in bf16, reference is f32
    ref = text_encoder_ref(prompts, tokenized_prompts, params)
    assert bool(jnp.allclose(out, ref, atol=2e-2, rtol=2e-2)), (
        "max abs err %.4e" % float(jnp.max(jnp.abs(out - ref))))

    print("KERNEL_OK")
</pallas_src>

<mosaic_0001>
module attributes {stable_mosaic.version = 11 : i64} {
  func.func @_text_encoder_kernel(%arg0: i32, %arg1: i32, %arg2: memref<2xi32, #tpu.memory_space<smem>>, %arg3: memref<2x8x32xf32, #tpu.memory_space<vmem>>, %arg4: memref<8x32xf32, #tpu.memory_space<vmem>>, %arg5: memref<8x8xf32, #tpu.memory_space<vmem>>, %arg6: memref<1x1x32xf32, #tpu.memory_space<vmem>>, %arg7: memref<1x1x32xf32, #tpu.memory_space<vmem>>, %arg8: memref<1x32x96xbf16, #tpu.memory_space<vmem>>, %arg9: memref<1x1x96xf32, #tpu.memory_space<vmem>>, %arg10: memref<1x32x32xbf16, #tpu.memory_space<vmem>>, %arg11: memref<1x1x32xf32, #tpu.memory_space<vmem>>, %arg12: memref<1x1x32xf32, #tpu.memory_space<vmem>>, %arg13: memref<1x1x32xf32, #tpu.memory_space<vmem>>, %arg14: memref<1x32x128xbf16, #tpu.memory_space<vmem>>, %arg15: memref<1x1x128xf32, #tpu.memory_space<vmem>>, %arg16: memref<1x128x32xbf16, #tpu.memory_space<vmem>>, %arg17: memref<1x1x32xf32, #tpu.memory_space<vmem>>, %arg18: memref<1x32xf32, #tpu.memory_space<vmem>>, %arg19: memref<1x32xf32, #tpu.memory_space<vmem>>, %arg20: memref<32x64xbf16, #tpu.memory_space<vmem>>, %arg21: memref<1x2x64xf32, #tpu.memory_space<vmem>>, %arg22: memref<2x8x32xf32, #tpu.memory_space<vmem>>) attributes {dimension_semantics = [#tpu.dimension_semantics<parallel>, #tpu.dimension_semantics<arbitrary>], iteration_bounds = array<i64: 1, 2>, scalar_prefetch = 1 : i64, scratch_operands = 1 : i64, tpu.core_type = #tpu.core_type<tc>, window_params = [{transform_indices = @transform_0, window_bounds = array<i64: 2, 8, 32>}, {pipeline_mode = #tpu.pipeline_mode<synchronous>, transform_indices = @transform_1, window_bounds = array<i64: 8, 32>}, {pipeline_mode = #tpu.pipeline_mode<synchronous>, transform_indices = @transform_2, window_bounds = array<i64: 8, 8>}, {transform_indices = @transform_3, window_bounds = array<i64: 1, 1, 32>}, {transform_indices = @transform_4, window_bounds = array<i64: 1, 1, 32>}, {transform_indices = @transform_5, window_bounds = array<i64: 1, 32, 96>}, {transform_indices = @transform_6, window_bounds = array<i64: 1, 1, 96>}, {transform_indices = @transform_7, window_bounds = array<i64: 1, 32, 32>}, {transform_indices = @transform_8, window_bounds = array<i64: 1, 1, 32>}, {transform_indices = @transform_9, window_bounds = array<i64: 1, 1, 32>}, {transform_indices = @transform_10, window_bounds = array<i64: 1, 1, 32>}, {transform_indices = @transform_11, window_bounds = array<i64: 1, 32, 128>}, {transform_indices = @transform_12, window_bounds = array<i64: 1, 1, 128>}, {transform_indices = @transform_13, window_bounds = array<i64: 1, 128, 32>}, {transform_indices = @transform_14, window_bounds = array<i64: 1, 1, 32>}, {pipeline_mode = #tpu.pipeline_mode<synchronous>, transform_indices = @transform_15, window_bounds = array<i64: 1, 32>}, {pipeline_mode = #tpu.pipeline_mode<synchronous>, transform_indices = @transform_16, window_bounds = array<i64: 1, 32>}, {pipeline_mode = #tpu.pipeline_mode<synchronous>, transform_indices = @transform_17, window_bounds = array<i64: 32, 64>}, {transform_indices = @transform_18, window_bounds = array<i64: 1, 2, 64>}]} {
    %c0_i32 = arith.constant 0 : i32
    %0 = arith.cmpi eq, %arg1, %c0_i32 : i32
    %1 = arith.extui %0 : i1 to i32
    %c0_i32_0 = arith.constant 0 : i32
    %2 = arith.cmpi ne, %1, %c0_i32_0 : i32
    scf.if %2 {
      %c0_83 = arith.constant 0 : index
      %c0_84 = arith.constant 0 : index
      %c0_85 = arith.constant 0 : index
      %194 = vector.load %arg3[%c0_83, %c0_84, %c0_85] : memref<2x8x32xf32, #tpu.memory_space<vmem>>, vector<2x8x32xf32>
      %c0_86 = arith.constant 0 : index
      %c0_87 = arith.constant 0 : index
      %195 = vector.load %arg4[%c0_86, %c0_87] : memref<8x32xf32, #tpu.memory_space<vmem>>, vector<8x32xf32>
      %196 = vector.shape_cast %195 : vector<8x32xf32> to vector<1x8x32xf32>
      %197 = vector.broadcast %196 : vector<1x8x32xf32> to vector<2x8x32xf32>
      %198 = arith.addf %194, %197 : vector<2x8x32xf32>
      %c0_88 = arith.constant 0 : index
      %c0_89 = arith.constant 0 : index
      %c0_90 = arith.constant 0 : index
      %199 = vector.load %arg22[%c0_88, %c0_89, %c0_90] : memref<2x8x32xf32, #tpu.memory_space<vmem>>, vector<2x8x32xf32>
      tpu.vector_store %arg22[%c0_88, %c0_89, %c0_90], %198 {strides = array<i32>} : memref<2x8x32xf32, #tpu.memory_space<vmem>>, vector<2x8x32xf32>,
    } else {
    }
    %c0 = arith.constant 0 : index
    %c0_1 = arith.constant 0 : index
    %c0_2 = arith.constant 0 : index
    %3 = vector.load %arg22[%c0, %c0_1, %c0_2] : memref<2x8x32xf32, #tpu.memory_space<vmem>>, vector<2x8x32xf32>
    %4 = vector.shape_cast %3 : vector<2x8x32xf32> to vector<16x32xf32>
    %c0_3 = arith.constant 0 : index
    %c0_4 = arith.constant 0 : index
    %c0_5 = arith.constant 0 : index
    %5 = vector.load %arg6[%c0_3, %c0_4, %c0_5] : memref<1x1x32xf32, #tpu.memory_space<vmem>>, vector<1x1x32xf32>
    %6 = vector.shape_cast %5 : vector<1x1x32xf32> to vector<1x32xf32>
    %c0_6 = arith.constant 0 : index
    %c0_7 = arith.constant 0 : index
    %c0_8 = arith.constant 0 : index
    %7 = vector.load %arg7[%c0_6, %c0_7, %c0_8] : memref<1x1x32xf32, #tpu.memory_space<vmem>>, vector<1x1x32xf32>
    %8 = vector.shape_cast %7 : vector<1x1x32xf32> to vector<1x32xf32>
    %cst = arith.constant dense<0.000000e+00> : vector<16xf32>
    %9 = vector.multi_reduction <add>, %4, %cst [1] : vector<16x32xf32> to vector<16xf32>
    %10 = vector.shape_cast %9 : vector<16xf32> to vector<16x1xf32>
    %cst_9 = arith.constant 3.200000e+01 : f32
    %11 = vector.broadcast %cst_9 : f32 to vector<16x1xf32>
    %12 = arith.divf %10, %11 : vector<16x1xf32>
    %13 = vector.broadcast %12 : vector<16x1xf32> to vector<16x32xf32>
    %14 = arith.subf %4, %13 : vector<16x32xf32>
    %15 = arith.mulf %14, %14 : vector<16x32xf32>
    %cst_10 = arith.constant dense<0.000000e+00> : vector<16xf32>
    %16 = vector.multi_reduction <add>, %15, %cst_10 [1] : vector<16x32xf32> to vector<16xf32>
    %17 = vector.shape_cast %16 : vector<16xf32> to vector<16x1xf32>
    %cst_11 = arith.constant 3.200000e+01 : f32
    %18 = vector.broadcast %cst_11 : f32 to vector<16x1xf32>
    %19 = arith.divf %17, %18 : vector<16x1xf32>
    %cst_12 = arith.constant 9.99999974E-6 : f32
    %20 = vector.broadcast %cst_12 : f32 to vector<16x1xf32>
    %21 = arith.addf %19, %20 : vector<16x1xf32>
    %22 = math.rsqrt %21 : vector<16x1xf32>
    %23 = vector.broadcast %22 : vector<16x1xf32> to vector<16x32xf32>
    %24 = arith.mulf %14, %23 : vector<16x32xf32>
    %25 = vector.broadcast %6 : vector<1x32xf32> to vector<16x32xf32>
    %26 = arith.mulf %24, %25 : vector<16x32xf32>
    %27 = vector.broadcast %8 : vector<1x32xf32> to vector<16x32xf32>
    %28 = arith.addf %26, %27 : vector<16x32xf32>
    %29 = arith.truncf %28 : vector<16x32xf32> to vector<16x32xbf16>
    %c0_13 = arith.constant 0 : index
    %c0_14 = arith.constant 0 : index
    %c0_15 = arith.constant 0 : index
    %30 = vector.load %arg8[%c0_13, %c0_14, %c0_15] : memref<1x32x96xbf16, #tpu.memory_space<vmem>>, vector<1x32x96xbf16>
    %31 = vector.shape_cast %30 : vector<1x32x96xbf16> to vector<32x96xbf16>
    %cst_16 = arith.constant dense<0.000000e+00> : vector<16x96xf32>
    %32 = tpu.matmul %29, %31, %cst_16 {dimension_numbers = #tpu.dot_dimension_numbers<[1], [0], [0], [1], [0, 0, 1, 1], [], []>} : vector<16x32xbf16>, vector<32x96xbf16>, vector<16x96xf32> -> vector<16x96xf32>
    %c0_17 = arith.constant 0 : index
    %c0_18 = arith.constant 0 : index
    %c0_19 = arith.constant 0 : index
    %33 = vector.load %arg9[%c0_17, %c0_18, %c0_19] : memref<1x1x96xf32, #tpu.memory_space<vmem>>, vector<1x1x96xf32>
    %34 = vector.shape_cast %33 : vector<1x1x96xf32> to vector<1x96xf32>
    %35 = vector.broadcast %34 : vector<1x96xf32> to vector<16x96xf32>
    %36 = arith.addf %32, %35 : vector<16x96xf32>
    %37 = vector.extract_strided_slice %36 {offsets = [0, 0], sizes = [16, 32], strides = [1, 1]} : vector<16x96xf32> to vector<16x32xf32>
    %cst_20 = arith.constant 0.353553385 : f32
    %38 = vector.broadcast %cst_20 : f32 to vector<16x32xf32>
    %39 = arith.mulf %37, %38 : vector<16x32xf32>
    %40 = arith.truncf %39 : vector<16x32xf32> to vector<16x32xbf16>
    %41 = vector.shape_cast %40 : vector<16x32xbf16> to vector<2x8x32xbf16>
    %42 = vector.extract_strided_slice %36 {offsets = [0, 32], sizes = [16, 32], strides = [1, 1]} : vector<16x96xf32> to vector<16x32xf32>
    %43 = arith.truncf %42 : vector<16x32xf32> to vector<16x32xbf16>
    %44 = vector.shape_cast %43 : vector<16x32xbf16> to vector<2x8x32xbf16>
    %45 = vector.extract_strided_slice %36 {offsets = [0, 64], sizes = [16, 32], strides = [1, 1]} : vector<16x96xf32> to vector<16x32xf32>
    %46 = arith.truncf %45 : vector<16x32xf32> to vector<16x32xbf16>
    %47 = vector.shape_cast %46 : vector<16x32xbf16> to vector<2x8x32xbf16>
    %c0_21 = arith.constant 0 : index
    %c0_22 = arith.constant 0 : index
    %48 = vector.load %arg5[%c0_21, %c0_22] : memref<8x8xf32, #tpu.memory_space<vmem>>, vector<8x8xf32>
    %49 = vector.extract_strided_slice %41 {offsets = [0, 0, 0], sizes = [2, 8, 8], strides = [1, 1, 1]} : vector<2x8x32xbf16> to vector<2x8x8xbf16>
    %50 = vector.extract_strided_slice %44 {offsets = [0, 0, 0], sizes = [2, 8, 8], strides = [1, 1, 1]} : vector<2x8x32xbf16> to vector<2x8x8xbf16>
    "tpu.trace_start"() <{level = 10 : i32, message = "bqd,bkd->bqk"}> : () -> ()
    %cst_23 = arith.constant dense<0.000000e+00> : vector<2x8x8xf32>
    %51 = tpu.matmul %49, %50, %cst_23 {dimension_numbers = #tpu.dot_dimension_numbers<[2], [2], [1], [1], [0, 0, 0, 1, 1, 1], [0], [0]>} : vector<2x8x8xbf16>, vector<2x8x8xbf16>, vector<2x8x8xf32> -> vector<2x8x8xf32>
    "tpu.trace_stop"() : () -> ()
    %52 = vector.shape_cast %48 : vector<8x8xf32> to vector<1x8x8xf32>
    %53 = vector.broadcast %52 : vector<1x8x8xf32> to vector<2x8x8xf32>
    %54 = arith.addf %51, %53 : vector<2x8x8xf32>
    %cst_24 = arith.constant dense<0xFF800000> : vector<2x8xf32>
    %55 = vector.multi_reduction <maximumf>, %54, %cst_24 [2] : vector<2x8x8xf32> to vector<2x8xf32>
    %56 = vector.shape_cast %55 : vector<2x8xf32> to vector<2x8x1xf32>
    %57 = vector.broadcast %56 : vector<2x8x1xf32> to vector<2x8x8xf32>
    %58 = arith.subf %54, %57 : vector<2x8x8xf32>
    %59 = math.exp %58 : vector<2x8x8xf32>
    %cst_25 = arith.constant dense<0.000000e+00> : vector<2x8xf32>
    %60 = vector.multi_reduction <add>, %59, %cst_25 [2] : vector<2x8x8xf32> to vector<2x8xf32>
    %61 = vector.shape_cast %60 : vector<2x8xf32> to vector<2x8x1xf32>
    %62 = tpu.reciprocal %61 {approx = true} : vector<2x8x1xf32> -> vector<2x8x1xf32>
    %63 = vector.broadcast %62 : vector<2x8x1xf32> to vector<2x8x8xf32>
    %64 = arith.mulf %59, %63 : vector<2x8x8xf32>
    %65 = arith.truncf %64 : vector<2x8x8xf32> to vector<2x8x8xbf16>
    %66 = vector.extract_strided_slice %47 {offsets = [0, 0, 0], sizes = [2, 8, 8], strides = [1, 1, 1]} : vector<2x8x32xbf16> to vector<2x8x8xbf16>
    "tpu.trace_start"() <{level = 10 : i32, message = "bqk,bkd->bqd"}> : () -> ()
    %cst_26 = arith.constant dense<0.000000e+00> : vector<2x8x8xf32>
    %67 = tpu.matmul %65, %66, %cst_26 {dimension_numbers = #tpu.dot_dimension_numbers<[2], [1], [1], [2], [0, 0, 0, 1, 1, 2], [0], [0]>} : vector<2x8x8xbf16>, vector<2x8x8xbf16>, vector<2x8x8xf32> -> vector<2x8x8xf32>
    "tpu.trace_stop"() : () -> ()
    %68 = vector.extract_strided_slice %41 {offsets = [0, 0, 8], sizes = [2, 8, 8], strides = [1, 1, 1]} : vector<2x8x32xbf16> to vector<2x8x8xbf16>
    %69 = vector.extract_strided_slice %44 {offsets = [0, 0, 8], sizes = [2, 8, 8], strides = [1, 1, 1]} : vector<2x8x32xbf16> to vector<2x8x8xbf16>
    "tpu.trace_start"() <{level = 10 : i32, message = "bqd,bkd->bqk"}> : () -> ()
    %cst_27 = arith.constant dense<0.000000e+00> : vector<2x8x8xf32>
    %70 = tpu.matmul %68, %69, %cst_27 {dimension_numbers = #tpu.dot_dimension_numbers<[2], [2], [1], [1], [0, 0, 0, 1, 1, 1], [0], [0]>} : vector<2x8x8xbf16>, vector<2x8x8xbf16>, vector<2x8x8xf32> -> vector<2x8x8xf32>
    "tpu.trace_stop"() : () -> ()
    %71 = vector.shape_cast %48 : vector<8x8xf32> to vector<1x8x8xf32>
    %72 = vector.broadcast %71 : vector<1x8x8xf32> to vector<2x8x8xf32>
    %73 = arith.addf %70, %72 : vector<2x8x8xf32>
    %cst_28 = arith.constant dense<0xFF800000> : vector<2x8xf32>
    %74 = vector.multi_reduction <maximumf>, %73, %cst_28 [2] : vector<2x8x8xf32> to vector<2x8xf32>
    %75 = vector.shape_cast %74 : vector<2x8xf32> to vector<2x8x1xf32>
    %76 = vector.broadcast %75 : vector<2x8x1xf32> to vector<2x8x8xf32>
    %77 = arith.subf %73, %76 : vector<2x8x8xf32>
    %78 = math.exp %77 : vector<2x8x8xf32>
    %cst_29 = arith.constant dense<0.000000e+00> : vector<2x8xf32>
    %79 = vector.multi_reduction <add>, %78, %cst_29 [2] : vector<2x8x8xf32> to vector<2x8xf32>
    %80 = vector.shape_cast %79 : vector<2x8xf32> to vector<2x8x1xf32>
    %81 = tpu.reciprocal %80 {approx = true} : vector<2x8x1xf32> -> vector<2x8x1xf32>
    %82 = vector.broadcast %81 : vector<2x8x1xf32> to vector<2x8x8xf32>
    %83 = arith.mulf %78, %82 : vector<2x8x8xf32>
    %84 = arith.truncf %83 : vector<2x8x8xf32> to vector<2x8x8xbf16>
    %85 = vector.extract_strided_slice %47 {offsets = [0, 0, 8], sizes = [2, 8, 8], strides = [1, 1, 1]} : vector<2x8x32xbf16> to vector<2x8x8xbf16>
    "tpu.trace_start"() <{level = 10 : i32, message = "bqk,bkd->bqd"}> : () -> ()
    %cst_30 = arith.constant dense<0.000000e+00> : vector<2x8x8xf32>
    %86 = tpu.matmul %84, %85, %cst_30 {dimension_numbers = #tpu.dot_dimension_numbers<[2], [1], [1], [2], [0, 0, 0, 1, 1, 2], [0], [0]>} : vector<2x8x8xbf16>, vector<2x8x8xbf16>, vector<2x8x8xf32> -> vector<2x8x8xf32>
    "tpu.trace_stop"() : () -> ()
    %87 = vector.extract_strided_slice %41 {offsets = [0, 0, 16], sizes = [2, 8, 8], strides = [1, 1, 1]} : vector<2x8x32xbf16> to vector<2x8x8xbf16>
    %88 = vector.extract_strided_slice %44 {offsets = [0, 0, 16], sizes = [2, 8, 8], strides = [1, 1, 1]} : vector<2x8x32xbf16> to vector<2x8x8xbf16>
    "tpu.trace_start"() <{level = 10 : i32, message = "bqd,bkd->bqk"}> : () -> ()
    %cst_31 = arith.constant dense<0.000000e+00> : vector<2x8x8xf32>
    %89 = tpu.matmul %87, %88, %cst_31 {dimension_numbers = #tpu.dot_dimension_numbers<[2], [2], [1], [1], [0, 0, 0, 1, 1, 1], [0], [0]>} : vector<2x8x8xbf16>, vector<2x8x8xbf16>, vector<2x8x8xf32> -> vector<2x8x8xf32>
    "tpu.trace_stop"() : () -> ()
    %90 = vector.shape_cast %48 : vector<8x8xf32> to vector<1x8x8xf32>
    %91 = vector.broadcast %90 : vector<1x8x8xf32> to vector<2x8x8xf32>
    %92 = arith.addf %89, %91 : vector<2x8x8xf32>
    %cst_32 = arith.constant dense<0xFF800000> : vector<2x8xf32>
    %93 = vector.multi_reduction <maximumf>, %92, %cst_32 [2] : vector<2x8x8xf32> to vector<2x8xf32>
    %94 = vector.shape_cast %93 : vector<2x8xf32> to vector<2x8x1xf32>
    %95 = vector.broadcast %94 : vector<2x8x1xf32> to vector<2x8x8xf32>
    %96 = arith.subf %92, %95 : vector<2x8x8xf32>
    %97 = math.exp %96 : vector<2x8x8xf32>
    %cst_33 = arith.constant dense<0.000000e+00> : vector<2x8xf32>
    %98 = vector.multi_reduction <add>, %97, %cst_33 [2] : vector<2x8x8xf32> to vector<2x8xf32>
    %99 = vector.shape_cast %98 : vector<2x8xf32> to vector<2x8x1xf32>
    %100 = tpu.reciprocal %99 {approx = true} : vector<2x8x1xf32> -> vector<2x8x1xf32>
    %101 = vector.broadcast %100 : vector<2x8x1xf32> to vector<2x8x8xf32>
    %102 = arith.mulf %97, %101 : vector<2x8x8xf32>
    %103 = arith.truncf %102 : vector<2x8x8xf32> to vector<2x8x8xbf16>
    %104 = vector.extract_strided_slice %47 {offsets = [0, 0, 16], sizes = [2, 8, 8], strides = [1, 1, 1]} : vector<2x8x32xbf16> to vector<2x8x8xbf16>
    "tpu.trace_start"() <{level = 10 : i32, message = "bqk,bkd->bqd"}> : () -> ()
    %cst_34 = arith.constant dense<0.000000e+00> : vector<2x8x8xf32>
    %105 = tpu.matmul %103, %104, %cst_34 {dimension_numbers = #tpu.dot_dimension_numbers<[2], [1], [1], [2], [0, 0, 0, 1, 1, 2], [0], [0]>} : vector<2x8x8xbf16>, vector<2x8x8xbf16>, vector<2x8x8xf32> -> vector<2x8x8xf32>
    "tpu.trace_stop"() : () -> ()
    %106 = vector.extract_strided_slice %41 {offsets = [0, 0, 24], sizes = [2, 8, 8], strides = [1, 1, 1]} : vector<2x8x32xbf16> to vector<2x8x8xbf16>
    %107 = vector.extract_strided_slice %44 {offsets = [0, 0, 24], sizes = [2, 8, 8], strides = [1, 1, 1]} : vector<2x8x32xbf16> to vector<2x8x8xbf16>
    "tpu.trace_start"() <{level = 10 : i32, message = "bqd,bkd->bqk"}> : () -> ()
    %cst_35 = arith.constant dense<0.000000e+00> : vector<2x8x8xf32>
    %108 = tpu.matmul %106, %107, %cst_35 {dimension_numbers = #tpu.dot_dimension_numbers<[2], [2], [1], [1], [0, 0, 0, 1, 1, 1], [0], [0]>} : vector<2x8x8xbf16>, vector<2x8x8xbf16>, vector<2x8x8xf32> -> vector<2x8x8xf32>
    "tpu.trace_stop"() : () -> ()
    %109 = vector.shape_cast %48 : vector<8x8xf32> to vector<1x8x8xf32>
    %110 = vector.broadcast %109 : vector<1x8x8xf32> to vector<2x8x8xf32>
    %111 = arith.addf %108, %110 : vector<2x8x8xf32>
    %cst_36 = arith.constant dense<0xFF800000> : vector<2x8xf32>
    %112 = vector.multi_reduction <maximumf>, %111, %cst_36 [2] : vector<2x8x8xf32> to vector<2x8xf32>
    %113 = vector.shape_cast %112 : vector<2x8xf32> to vector<2x8x1xf32>
    %114 = vector.broadcast %113 : vector<2x8x1xf32> to vector<2x8x8xf32>
    %115 = arith.subf %111, %114 : vector<2x8x8xf32>
    %116 = math.exp %115 : vector<2x8x8xf32>
    %cst_37 = arith.constant dense<0.000000e+00> : vector<2x8xf32>
    %117 = vector.multi_reduction <add>, %116, %cst_37 [2] : vector<2x8x8xf32> to vector<2x8xf32>
    %118 = vector.shape_cast %117 : vector<2x8xf32> to vector<2x8x1xf32>
    %119 = tpu.reciprocal %118 {approx = true} : vector<2x8x1xf32> -> vector<2x8x1xf32>
    %120 = vector.broadcast %119 : vector<2x8x1xf32> to vector<2x8x8xf32>
    %121 = arith.mulf %116, %120 : vector<2x8x8xf32>
    %122 = arith.truncf %121 : vector<2x8x8xf32> to vector<2x8x8xbf16>
    %123 = vector.extract_strided_slice %47 {offsets = [0, 0, 24], sizes = [2, 8, 8], strides = [1, 1, 1]} : vector<2x8x32xbf16> to vector<2x8x8xbf16>
    "tpu.trace_start"() <{level = 10 : i32, message = "bqk,bkd->bqd"}> : () -> ()
    %cst_38 = arith.constant dense<0.000000e+00> : vector<2x8x8xf32>
    %124 = tpu.matmul %122, %123, %cst_38 {dimension_numbers = #tpu.dot_dimension_numbers<[2], [1], [1], [2], [0, 0, 0, 1, 1, 2], [0], [0]>} : vector<2x8x8xbf16>, vector<2x8x8xbf16>, vector<2x8x8xf32> -> vector<2x8x8xf32>
    "tpu.trace_stop"() : () -> ()
    %125 = tpu.concatenate %67, %86, %105, %124 in 2 : vector<2x8x8xf32>, vector<2x8x8xf32>, vector<2x8x8xf32>, vector<2x8x8xf32> -> vector<2x8x32xf32>
    %126 = vector.shape_cast %125 : vector<2x8x32xf32> to vector<16x32xf32>
    %127 = arith.truncf %126 : vector<16x32xf32> to vector<16x32xbf16>
    %c0_39 = arith.constant 0 : index
    %c0_40 = arith.constant 0 : index
    %c0_41 = arith.constant 0 : index
    %128 = vector.load %arg10[%c0_39, %c0_40, %c0_41] : memref<1x32x32xbf16, #tpu.memory_space<vmem>>, vector<1x32x32xbf16>
    %129 = vector.shape_cast %128 : vector<1x32x32xbf16> to vector<32x32xbf16>
    %cst_42 = arith.constant dense<0.000000e+00> : vector<16x32xf32>
    %130 = tpu.matmul %127, %129, %cst_42 {dimension_numbers = #tpu.dot_dimension_numbers<[1], [0], [0], [1], [0, 0, 1, 1], [], []>} : vector<16x32xbf16>, vector<32x32xbf16>, vector<16x32xf32> -> vector<16x32xf32>
    %c0_43 = arith.constant 0 : index
    %c0_44 = arith.constant 0 : index
    %c0_45 = arith.constant 0 : index
    %131 = vector.load %arg11[%c0_43, %c0_44, %c0_45] : memref<1x1x32xf32, #tpu.memory_space<vmem>>, vector<1x1x32xf32>
    %132 = vector.shape_cast %131 : vector<1x1x32xf32> to vector<1x32xf32>
    %133 = vector.broadcast %132 : vector<1x32xf32> to vector<16x32xf32>
    %134 = arith.addf %130, %133 : vector<16x32xf32>
    %135 = arith.addf %4, %134 : vector<16x32xf32>
    %136 = vector.shape_cast %135 : vector<16x32xf32> to vector<2x8x32xf32>
    %c0_46 = arith.constant 0 : index
    %c0_47 = arith.constant 0 : index
    %c0_48 = arith.constant 0 : index
    %137 = vector.load %arg22[%c0_46, %c0_47, %c0_48] : memref<2x8x32xf32, #tpu.memory_space<vmem>>, vector<2x8x32xf32>
    tpu.vector_store %arg22[%c0_46, %c0_47, %c0_48], %136 {strides = array<i32>} : memref<2x8x32xf32, #tpu.memory_space<vmem>>, vector<2x8x32xf32>,
    %c0_49 = arith.constant 0 : index
    %c0_50 = arith.constant 0 : index
    %c0_51 = arith.constant 0 : index
    %138 = vector.load %arg22[%c0_49, %c0_50, %c0_51] : memref<2x8x32xf32, #tpu.memory_space<vmem>>, vector<2x8x32xf32>
    %139 = vector.shape_cast %138 : vector<2x8x32xf32> to vector<16x32xf32>
    %c0_52 = arith.constant 0 : index
    %c0_53 = arith.constant 0 : index
    %c0_54 = arith.constant 0 : index
    %140 = vector.load %arg12[%c0_52, %c0_53, %c0_54] : memref<1x1x32xf32, #tpu.memory_space<vmem>>, vector<1x1x32xf32>
    %141 = vector.shape_cast %140 : vector<1x1x32xf32> to vector<1x32xf32>
    %c0_55 = arith.constant 0 : index
    %c0_56 = arith.constant 0 : index
    %c0_57 = arith.constant 0 : index
    %142 = vector.load %arg13[%c0_55, %c0_56, %c0_57] : memref<1x1x32xf32, #tpu.memory_space<vmem>>, vector<1x1x32xf32>
    %143 = vector.shape_cast %142 : vector<1x1x32xf32> to vector<1x32xf32>
    %cst_58 = arith.constant dense<0.000000e+00> : vector<16xf32>
    %144 = vector.multi_reduction <add>, %139, %cst_58 [1] : vector<16x32xf32> to vector<16xf32>
    %145 = vector.shape_cast %144 : vector<16xf32> to vector<16x1xf32>
    %cst_59 = arith.constant 3.200000e+01 : f32
    %146 = vector.broadcast %cst_59 : f32 to vector<16x1xf32>
    %147 = arith.divf %145, %146 : vector<16x1xf32>
    %148 = vector.broadcast %147 : vector<16x1xf32> to vector<16x32xf32>
    %149 = arith.subf %139, %148 : vector<16x32xf32>
    %150 = arith.mulf %149, %149 : vector<16x32xf32>
    %cst_60 = arith.constant dense<0.000000e+00> : vector<16xf32>
    %151 = vector.multi_reduction <add>, %150, %cst_60 [1] : vector<16x32xf32> to vector<16xf32>
    %152 = vector.shape_cast %151 : vector<16xf32> to vector<16x1xf32>
    %cst_61 = arith.constant 3.200000e+01 : f32
    %153 = vector.broadcast %cst_61 : f32 to vector<16x1xf32>
    %154 = arith.divf %152, %153 : vector<16x1xf32>
    %cst_62 = arith.constant 9.99999974E-6 : f32
    %155 = vector.broadcast %cst_62 : f32 to vector<16x1xf32>
    %156 = arith.addf %154, %155 : vector<16x1xf32>
    %157 = math.rsqrt %156 : vector<16x1xf32>
    %158 = vector.broadcast %157 : vector<16x1xf32> to vector<16x32xf32>
    %159 = arith.mulf %149, %158 : vector<16x32xf32>
    %160 = vector.broadcast %141 : vector<1x32xf32> to vector<16x32xf32>
    %161 = arith.mulf %159, %160 : vector<16x32xf32>
    %162 = vector.broadcast %143 : vector<1x32xf32> to vector<16x32xf32>
    %163 = arith.addf %161, %162 : vector<16x32xf32>
    %164 = arith.truncf %163 : vector<16x32xf32> to vector<16x32xbf16>
    %c0_63 = arith.constant 0 : index
    %c0_64 = arith.constant 0 : index
    %c0_65 = arith.constant 0 : index
    %165 = vector.load %arg14[%c0_63, %c0_64, %c0_65] : memref<1x32x128xbf16, #tpu.memory_space<vmem>>, vector<1x32x128xbf16>
    %166 = vector.shape_cast %165 : vector<1x32x128xbf16> to vector<32x128xbf16>
    %cst_66 = arith.constant dense<0.000000e+00> : vector<16x128xf32>
    %167 = tpu.matmul %164, %166, %cst_66 {dimension_numbers = #tpu.dot_dimension_numbers<[1], [0], [0], [1], [0, 0, 1, 1], [], []>} : vector<16x32xbf16>, vector<32x128xbf16>, vector<16x128xf32> -> vector<16x128xf32>
    %c0_67 = arith.constant 0 : index
    %c0_68 = arith.constant 0 : index
    %c0_69 = arith.constant 0 : index
    %168 = vector.load %arg15[%c0_67, %c0_68, %c0_69] : memref<1x1x128xf32, #tpu.memory_space<vmem>>, vector<1x1x128xf32>
    %169 = vector.shape_cast %168 : vector<1x1x128xf32> to vector<1x128xf32>
    %170 = vector.broadcast %169 : vector<1x128xf32> to vector<16x128xf32>
    %171 = arith.addf %167, %170 : vector<16x128xf32>
    %cst_70 = arith.constant 1.702000e+00 : f32
    %172 = vector.broadcast %cst_70 : f32 to vector<16x128xf32>
    %173 = arith.mulf %172, %171 : vector<16x128xf32>
    %174 = arith.negf %173 : vector<16x128xf32>
    %175 = math.exp %174 : vector<16x128xf32>
    %cst_71 = arith.constant 1.000000e+00 : f32
    %176 = vector.broadcast %cst_71 : f32 to vector<16x128xf32>
    %177 = arith.addf %176, %175 : vector<16x128xf32>
    %178 = arith.divf %176, %177 : vector<16x128xf32>
    %179 = arith.mulf %171, %178 : vector<16x128xf32>
    %180 = arith.truncf %179 : vector<16x128xf32> to vector<16x128xbf16>
    %c0_72 = arith.constant 0 : index
    %c0_73 = arith.constant 0 : index
    %c0_74 = arith.constant 0 : index
    %181 = vector.load %arg16[%c0_72, %c0_73, %c0_74] : memref<1x128x32xbf16, #tpu.memory_space<vmem>>, vector<1x128x32xbf16>
    %182 = vector.shape_cast %181 : vector<1x128x32xbf16> to vector<128x32xbf16>
    %cst_75 = arith.constant dense<0.000000e+00> : vector<16x32xf32>
    %183 = tpu.matmul %180, %182, %cst_75 {dimension_numbers = #tpu.dot_dimension_numbers<[1], [0], [0], [1], [0, 0, 1, 1], [], []>} : vector<16x128xbf16>, vector<128x32xbf16>, vector<16x32xf32> -> vector<16x32xf32>
    %c0_76 = arith.constant 0 : index
    %c0_77 = arith.constant 0 : index
    %c0_78 = arith.constant 0 : index
    %184 = vector.load %arg17[%c0_76, %c0_77, %c0_78] : memref<1x1x32xf32, #tpu.memory_space<vmem>>, vector<1x1x32xf32>
    %185 = vector.shape_cast %184 : vector<1x1x32xf32> to vector<1x32xf32>
    %186 = vector.broadcast %185 : vector<1x32xf32> to vector<16x32xf32>
    %187 = arith.addf %183, %186 : vector<16x32xf32>
    %188 = arith.addf %139, %187 : vector<16x32xf32>
    %189 = vector.shape_cast %188 : vector<16x32xf32> to vector<2x8x32xf32>
    %c0_79 = arith.constant 0 : index
    %c0_80 = arith.constant 0 : index
    %c0_81 = arith.constant 0 : index
    %190 = vector.load %arg22[%c0_79, %c0_80, %c0_81] : memref<2x8x32xf32, #tpu.memory_space<vmem>>, vector<2x8x32xf32>
    tpu.vector_store %arg22[%c0_79, %c0_80, %c0_81], %189 {strides = array<i32>} : memref<2x8x32xf32, #tpu.memory_space<vmem>>, vector<2x8x32xf32>,
    %c1_i32 = arith.constant 1 : i32
    %191 = arith.cmpi eq, %arg1, %c1_i32 : i32
    %192 = arith.extui %191 : i1 to i32
    %c0_i32_82 = arith.constant 0 : i32
    %193 = arith.cmpi ne, %192, %c0_i32_82 : i32
    scf.if %193 {
      %c2_i32 = arith.constant 2 : i32
      %194 = arith.muli %arg0, %c2_i32 : i32
      %c0_i32_83 = arith.constant 0 : i32
      %195 = arith.addi %194, %c0_i32_83 : i32
      %196 = arith.index_cast %195 : i32 to index
      %197 = memref.load %arg2[%196] : memref<2xi32, #tpu.memory_space<smem>>
      %c0_84 = arith.constant 0 : index
      %198 = arith.index_cast %197 : i32 to index
      %c0_85 = arith.constant 0 : index
      %199 = vector.load %arg22[%c0_84, %198, %c0_85] : memref<2x8x32xf32, #tpu.memory_space<vmem>>, vector<1x1x32xf32>
      %200 = vector.shape_cast %199 : vector<1x1x32xf32> to vector<1x32xf32>
      %c2_i32_86 = arith.constant 2 : i32
      %201 = arith.muli %arg0, %c2_i32_86 : i32
      %c1_i32_87 = arith.constant 1 : i32
      %202 = arith.addi %201, %c1_i32_87 : i32
      %203 = arith.index_cast %202 : i32 to index
      %204 = memref.load %arg2[%203] : memref<2xi32, #tpu.memory_space<smem>>
      %c1 = arith.constant 1 : index
      %205 = arith.index_cast %204 : i32 to index
      %c0_88 = arith.constant 0 : index
      %206 = vector.load %arg22[%c1, %205, %c0_88] : memref<2x8x32xf32, #tpu.memory_space<vmem>>, vector<1x1x32xf32>
      %207 = vector.shape_cast %206 : vector<1x1x32xf32> to vector<1x32xf32>
      %208 = tpu.concatenate %200, %207 in 0 : vector<1x32xf32>, vector<1x32xf32> -> vector<2x32xf32>
      %c0_89 = arith.constant 0 : index
      %c0_90 = arith.constant 0 : index
      %209 = vector.load %arg18[%c0_89, %c0_90] : memref<1x32xf32, #tpu.memory_space<vmem>>, vector<1x32xf32>
      %c0_91 = arith.constant 0 : index
      %c0_92 = arith.constant 0 : index
      %210 = vector.load %arg19[%c0_91, %c0_92] : memref<1x32xf32, #tpu.memory_space<vmem>>, vector<1x32xf32>
      %cst_93 = arith.constant dense<0.000000e+00> : vector<2xf32>
      %211 = vector.multi_reduction <add>, %208, %cst_93 [1] : vector<2x32xf32> to vector<2xf32>
      %212 = vector.shape_cast %211 : vector<2xf32> to vector<2x1xf32>
      %cst_94 = arith.constant 3.200000e+01 : f32
      %213 = vector.broadcast %cst_94 : f32 to vector<2x1xf32>
      %214 = arith.divf %212, %213 : vector<2x1xf32>
      %215 = vector.broadcast %214 : vector<2x1xf32> to vector<2x32xf32>
      %216 = arith.subf %208, %215 : vector<2x32xf32>
      %217 = arith.mulf %216, %216 : vector<2x32xf32>
      %cst_95 = arith.constant dense<0.000000e+00> : vector<2xf32>
      %218 = vector.multi_reduction <add>, %217, %cst_95 [1] : vector<2x32xf32> to vector<2xf32>
      %219 = vector.shape_cast %218 : vector<2xf32> to vector<2x1xf32>
      %cst_96 = arith.constant 3.200000e+01 : f32
      %220 = vector.broadcast %cst_96 : f32 to vector<2x1xf32>
      %221 = arith.divf %219, %220 : vector<2x1xf32>
      %cst_97 = arith.constant 9.99999974E-6 : f32
      %222 = vector.broadcast %cst_97 : f32 to vector<2x1xf32>
      %223 = arith.addf %221, %222 : vector<2x1xf32>
      %224 = math.rsqrt %223 : vector<2x1xf32>
      %225 = vector.broadcast %224 : vector<2x1xf32> to vector<2x32xf32>
      %226 = arith.mulf %216, %225 : vector<2x32xf32>
      %227 = vector.broadcast %209 : vector<1x32xf32> to vector<2x32xf32>
      %228 = arith.mulf %226, %227 : vector<2x32xf32>
      %229 = vector.broadcast %210 : vector<1x32xf32> to vector<2x32xf32>
      %230 = arith.addf %228, %229 : vector<2x32xf32>
      %231 = arith.truncf %230 : vector<2x32xf32> to vector<2x32xbf16>
      %c0_98 = arith.constant 0 : index
      %c0_99 = arith.constant 0 : index
      %232 = vector.load %arg20[%c0_98, %c0_99] : memref<32x64xbf16, #tpu.memory_space<vmem>>, vector<32x64xbf16>
      %cst_100 = arith.constant dense<0.000000e+00> : vector<2x64xf32>
      %233 = tpu.matmul %231, %232, %cst_100 {dimension_numbers = #tpu.dot_dimension_numbers<[1], [0], [0], [1], [0, 0, 1, 1], [], []>} : vector<2x32xbf16>, vector<32x64xbf16>, vector<2x64xf32> -> vector<2x64xf32>
      %234 = vector.shape_cast %233 : vector<2x64xf32> to vector<1x2x64xf32>
      %c0_101 = arith.constant 0 : index
      %c0_102 = arith.constant 0 : index
      %c0_103 = arith.constant 0 : index
      %235 = vector.load %arg21[%c0_101, %c0_102, %c0_103] : memref<1x2x64xf32, #tpu.memory_space<vmem>>, vector<1x2x64xf32>
      tpu.vector_store %arg21[%c0_101, %c0_102, %c0_103], %234 {strides = array<i32>} : memref<1x2x64xf32, #tpu.memory_space<vmem>>, vector<1x2x64xf32>,
    } else {
    }
    return
  }
  func.func @transform_0(%arg0: i32, %arg1: i32, %arg2: memref<2xi32, #tpu.memory_space<smem>>) -> (i32, i32, i32) {
    %c0_i32 = arith.constant 0 : i32
    %c0_i32_0 = arith.constant 0 : i32
    %c0_i32_1 = arith.constant 0 : i32
    return %arg0, %c0_i32, %c0_i32_0 : i32, i32, i32
  }
  func.func @transform_1(%arg0: i32, %arg1: i32, %arg2: memref<2xi32, #tpu.memory_space<smem>>) -> (i32, i32) {
    %c0_i32 = arith.constant 0 : i32
    %c0_i32_0 = arith.constant 0 : i32
    %c0_i32_1 = arith.constant 0 : i32
    return %c0_i32, %c0_i32_0 : i32, i32
  }
  func.func @transform_2(%arg0: i32, %arg1: i32, %arg2: memref<2xi32, #tpu.memory_space<smem>>) -> (i32, i32) {
    %c0_i32 = arith.constant 0 : i32
    %c0_i32_0 = arith.constant 0 : i32
    %c0_i32_1 = arith.constant 0 : i32
    return %c0_i32, %c0_i32_0 : i32, i32
  }
  func.func @transform_3(%arg0: i32, %arg1: i32, %arg2: memref<2xi32, #tpu.memory_space<smem>>) -> (i32, i32, i32) {
    %c0_i32 = arith.constant 0 : i32
    %c0_i32_0 = arith.constant 0 : i32
    %c0_i32_1 = arith.constant 0 : i32
    return %arg1, %c0_i32, %c0_i32_0 : i32, i32, i32
  }
  func.func @transform_4(%arg0: i32, %arg1: i32, %arg2: memref<2xi32, #tpu.memory_space<smem>>) -> (i32, i32, i32) {
    %c0_i32 = arith.constant 0 : i32
    %c0_i32_0 = arith.constant 0 : i32
    %c0_i32_1 = arith.constant 0 : i32
    return %arg1, %c0_i32, %c0_i32_0 : i32, i32, i32
  }
  func.func @transform_5(%arg0: i32, %arg1: i32, %arg2: memref<2xi32, #tpu.memory_space<smem>>) -> (i32, i32, i32) {
    %c0_i32 = arith.constant 0 : i32
    %c0_i32_0 = arith.constant 0 : i32
    %c0_i32_1 = arith.constant 0 : i32
    return %arg1, %c0_i32, %c0_i32_0 : i32, i32, i32
  }
  func.func @transform_6(%arg0: i32, %arg1: i32, %arg2: memref<2xi32, #tpu.memory_space<smem>>) -> (i32, i32, i32) {
    %c0_i32 = arith.constant 0 : i32
    %c0_i32_0 = arith.constant 0 : i32
    %c0_i32_1 = arith.constant 0 : i32
    return %arg1, %c0_i32, %c0_i32_0 : i32, i32, i32
  }
  func.func @transform_7(%arg0: i32, %arg1: i32, %arg2: memref<2xi32, #tpu.memory_space<smem>>) -> (i32, i32, i32) {
    %c0_i32 = arith.constant 0 : i32
    %c0_i32_0 = arith.constant 0 : i32
    %c0_i32_1 = arith.constant 0 : i32
    return %arg1, %c0_i32, %c0_i32_0 : i32, i32, i32
  }
  func.func @transform_8(%arg0: i32, %arg1: i32, %arg2: memref<2xi32, #tpu.memory_space<smem>>) -> (i32, i32, i32) {
    %c0_i32 = arith.constant 0 : i32
    %c0_i32_0 = arith.constant 0 : i32
    %c0_i32_1 = arith.constant 0 : i32
    return %arg1, %c0_i32, %c0_i32_0 : i32, i32, i32
  }
  func.func @transform_9(%arg0: i32, %arg1: i32, %arg2: memref<2xi32, #tpu.memory_space<smem>>) -> (i32, i32, i32) {
    %c0_i32 = arith.constant 0 : i32
    %c0_i32_0 = arith.constant 0 : i32
    %c0_i32_1 = arith.constant 0 : i32
    return %arg1, %c0_i32, %c0_i32_0 : i32, i32, i32
  }
  func.func @transform_10(%arg0: i32, %arg1: i32, %arg2: memref<2xi32, #tpu.memory_space<smem>>) -> (i32, i32, i32) {
    %c0_i32 = arith.constant 0 : i32
    %c0_i32_0 = arith.constant 0 : i32
    %c0_i32_1 = arith.constant 0 : i32
    return %arg1, %c0_i32, %c0_i32_0 : i32, i32, i32
  }
  func.func @transform_11(%arg0: i32, %arg1: i32, %arg2: memref<2xi32, #tpu.memory_space<smem>>) -> (i32, i32, i32) {
    %c0_i32 = arith.constant 0 : i32
    %c0_i32_0 = arith.constant 0 : i32
    %c0_i32_1 = arith.constant 0 : i32
    return %arg1, %c0_i32, %c0_i32_0 : i32, i32, i32
  }
  func.func @transform_12(%arg0: i32, %arg1: i32, %arg2: memref<2xi32, #tpu.memory_space<smem>>) -> (i32, i32, i32) {
    %c0_i32 = arith.constant 0 : i32
    %c0_i32_0 = arith.constant 0 : i32
    %c0_i32_1 = arith.constant 0 : i32
    return %arg1, %c0_i32, %c0_i32_0 : i32, i32, i32
  }
  func.func @transform_13(%arg0: i32, %arg1: i32, %arg2: memref<2xi32, #tpu.memory_space<smem>>) -> (i32, i32, i32) {
    %c0_i32 = arith.constant 0 : i32
    %c0_i32_0 = arith.constant 0 : i32
    %c0_i32_1 = arith.constant 0 : i32
    return %arg1, %c0_i32, %c0_i32_0 : i32, i32, i32
  }
  func.func @transform_14(%arg0: i32, %arg1: i32, %arg2: memref<2xi32, #tpu.memory_space<smem>>) -> (i32, i32, i32) {
    %c0_i32 = arith.constant 0 : i32
    %c0_i32_0 = arith.constant 0 : i32
    %c0_i32_1 = arith.constant 0 : i32
    return %arg1, %c0_i32, %c0_i32_0 : i32, i32, i32
  }
  func.func @transform_15(%arg0: i32, %arg1: i32, %arg2: memref<2xi32, #tpu.memory_space<smem>>) -> (i32, i32) {
    %c0_i32 = arith.constant 0 : i32
    %c0_i32_0 = arith.constant 0 : i32
    %c0_i32_1 = arith.constant 0 : i32
    return %c0_i32, %c0_i32_0 : i32, i32
  }
  func.func @transform_16(%arg0: i32, %arg1: i32, %arg2: memref<2xi32, #tpu.memory_space<smem>>) -> (i32, i32) {
    %c0_i32 = arith.constant 0 : i32
    %c0_i32_0 = arith.constant 0 : i32
    %c0_i32_1 = arith.constant 0 : i32
    return %c0_i32, %c0_i32_0 : i32, i32
  }
  func.func @transform_17(%arg0: i32, %arg1: i32, %arg2: memref<2xi32, #tpu.memory_space<smem>>) -> (i32, i32) {
    %c0_i32 = arith.constant 0 : i32
    %c0_i32_0 = arith.constant 0 : i32
    %c0_i32_1 = arith.constant 0 : i32
    return %c0_i32, %c0_i32_0 : i32, i32
  }
  func.func @transform_18(%arg0: i32, %arg1: i32, %arg2: memref<2xi32, #tpu.memory_space<smem>>) -> (i32, i32, i32) {
    %c0_i32 = arith.constant 0 : i32
    %c0_i32_0 = arith.constant 0 : i32
    %c0_i32_1 = arith.constant 0 : i32
    return %arg0, %c0_i32, %c0_i32_0 : i32, i32, i32
  }
}

</mosaic_0001>

<llo_original>
// kernel: tpu_custom_call.1
$region0: #{tpu_custom_call.1}
  #allocation0 [shape = 'u32[]', space=smem, size = 0x4, offset = 0x4, fixed_abs, tag = 'smem constant byte address 0x4 - core index']
  #allocation1 [shape = 'u32[144,128]{1,0:T(1,128)}', space=vmem, size = 0x12000, scoped, tag = 'internal scratch']
  #allocation2 [shape = 'f32[2,8,32]{2,1,0:T(8,128)}', space=vmem, size = 0x2000, scoped, tag = 'scratch operand']
  #allocation3 [shape = 's32[1]{0}', space=sflag, size = 0x4, scoped, tag = 'scoped memory for tpu_custom_call.1']
  #allocation4 [shape = 'u8[512]{0}', space=smem, size = 0x200, scoped, tag = 'prefetched SMEM operand 0']
  %s0 = inlined_call_operand.hbm [shape: s32[2], index: 0, kind: input, shape index: {}]
  %s1 = inlined_call_operand.hbm [shape: f32[2,8,32], index: 1, kind: input, shape index: {}]
  %s2 = inlined_call_operand.hbm [shape: f32[8,32], index: 2, kind: input, shape index: {}]
  %s3 = inlined_call_operand.hbm [shape: f32[8,8], index: 3, kind: input, shape index: {}]
  %s4 = inlined_call_operand.hbm [shape: f32[2,1,32], index: 4, kind: input, shape index: {}]
  %s5 = inlined_call_operand.hbm [shape: f32[2,1,32], index: 5, kind: input, shape index: {}]
  %s6 = inlined_call_operand.hbm [shape: bf16[2,32,96], index: 6, kind: input, shape index: {}]
  %s7 = inlined_call_operand.hbm [shape: f32[2,1,96], index: 7, kind: input, shape index: {}]
  %s8 = inlined_call_operand.hbm [shape: bf16[2,32,32], index: 8, kind: input, shape index: {}]
  %s9 = inlined_call_operand.hbm [shape: f32[2,1,32], index: 9, kind: input, shape index: {}]
  %s10 = inlined_call_operand.hbm [shape: f32[2,1,32], index: 10, kind: input, shape index: {}]
  %s11 = inlined_call_operand.hbm [shape: f32[2,1,32], index: 11, kind: input, shape index: {}]
  %s12 = inlined_call_operand.hbm [shape: bf16[2,32,128], index: 12, kind: input, shape index: {}]
  %s13 = inlined_call_operand.hbm [shape: f32[2,1,128], index: 13, kind: input, shape index: {}]
  %s14 = inlined_call_operand.hbm [shape: bf16[2,128,32], index: 14, kind: input, shape index: {}]
  %s15 = inlined_call_operand.hbm [shape: f32[2,1,32], index: 15, kind: input, shape index: {}]
  %s16 = inlined_call_operand.hbm [shape: f32[1,32], index: 16, kind: input, shape index: {}]
  %s17 = inlined_call_operand.hbm [shape: f32[1,32], index: 17, kind: input, shape index: {}]
  %s18 = inlined_call_operand.hbm [shape: bf16[32,64], index: 18, kind: input, shape index: {}]
  %s19 = inlined_call_operand.hbm [shape: f32[1,2,64], index: 19, kind: output, shape index: {}]
  %s20 = sld [smem:[#allocation0]]
  $region185: #{tpu_custom_call.1} parent=0
    _
  %s22 = ssub.s32 1, %s20
  %s23 = scalar_select 0, %s22, %s20
  %25 = dma.hbm_to_smem %s0, 16, [#allocation4], [#allocation3]
  %26 = dma.done [#allocation3], 16
  %27 = sfence
  $region1: #{tpu_custom_call.1} parent=0
    #allocation5 [shape = 'u8[8192]{0}', space=vmem, size = 0x2000, scoped, tag = 'input window, operand 1, single buffered']
    #allocation6 [shape = 's32[2]{0}', space=sflag, size = 0x8, scoped, tag = 'scoped memory for tpu_custom_call.1']
    #allocation7 [shape = 's32[2]{0}', space=sflag, size = 0x8, scoped, tag = 'scoped memory for tpu_custom_call.1']
    #allocation8 [shape = 'u8[4096]{0}', space=vmem, size = 0x1000, scoped, tag = 'input window, operand 2, single buffered']
    #allocation9 [shape = 's32[1]{0}', space=sflag, size = 0x4, scoped, tag = 'scoped memory for tpu_custom_call.1']
    #allocation10 [shape = 'u8[4096]{0}', space=vmem, size = 0x1000, scoped, tag = 'input window, operand 3, single buffered']
    #allocation11 [shape = 'u8[1024]{0}', space=vmem, size = 0x400, scoped, tag = 'input window, operand 4']
    #allocation12 [shape = 's32[2]{0}', space=sflag, size = 0x8, scoped, tag = 'scoped memory for tpu_custom_call.1']
    #allocation13 [shape = 'u8[1024]{0}', space=vmem, size = 0x400, scoped, tag = 'input window, operand 5']
    #allocation14 [shape = 'u8[16384]{0}', space=vmem, size = 0x4000, scoped, tag = 'input window, operand 6']
    #allocation15 [shape = 's32[2]{0}', space=sflag, size = 0x8, scoped, tag = 'scoped memory for tpu_custom_call.1']
    #allocation16 [shape = 'u8[1024]{0}', space=vmem, size = 0x400, scoped, tag = 'input window, operand 7']
    #allocation17 [shape = 'u8[16384]{0}', space=vmem, size = 0x4000, scoped, tag = 'input window, operand 8']
    #allocation18 [shape = 's32[2]{0}', space=sflag, size = 0x8, scoped, tag = 'scoped memory for tpu_custom_call.1']
    #allocation19 [shape = 'u8[1024]{0}', space=vmem, size = 0x400, scoped, tag = 'input window, operand 9']
    #allocation20 [shape = 'u8[1024]{0}', space=vmem, size = 0x400, scoped, tag = 'input window, operand 10']
    #allocation21 [shape = 's32[2]{0}', space=sflag, size = 0x8, scoped, tag = 'scoped memory for tpu_custom_call.1']
    #allocation22 [shape = 'u8[1024]{0}', space=vmem, size = 0x400, scoped, tag = 'input window, operand 11']
    #allocation23 [shape = 'u8[16384]{0}', space=vmem, size = 0x4000, scoped, tag = 'input window, operand 12']
    #allocation24 [shape = 's32[2]{0}', space=sflag, size = 0x8, scoped, tag = 'scoped memory for tpu_custom_call.1']
    #allocation25 [shape = 'u8[1024]{0}', space=vmem, size = 0x400, scoped, tag = 'input window, operand 13']
    #allocation26 [shape = 'u8[65536]{0}', space=vmem, size = 0x10000, scoped, tag = 'input window, operand 14']
    #allocation27 [shape = 's32[2]{0}', space=sflag, size = 0x8, scoped, tag = 'scoped memory for tpu_custom_call.1']
    #allocation28 [shape = 'u8[1024]{0}', space=vmem, size = 0x400, scoped, tag = 'input window, operand 15']
    #allocation29 [shape = 'u8[512]{0}', space=vmem, size = 0x400, scoped, tag = 'input window, operand 16, single buffered']
    #allocation30 [shape = 's32[1]{0}', space=sflag, size = 0x4, scoped, tag = 'scoped memory for tpu_custom_call.1']
    #allocation31 [shape = 'u8[512]{0}', space=vmem, size = 0x400, scoped, tag = 'input window, operand 17, single buffered']
    #allocation32 [shape = 'u8[8192]{0}', space=vmem, size = 0x2000, scoped, tag = 'input window, operand 18, single buffered']
    #allocation33 [shape = 's32[1]{0}', space=sflag, size = 0x4, scoped, tag = 'scoped memory for tpu_custom_call.1']
    #allocation34 [shape = 'u8[1024]{0}', space=vmem, size = 0x400, scoped, tag = 'output window, operand 0, single buffered']
    %28 = vsyncpa [#allocation6], 0
    %29 = vsyncpa [#allocation9], 0
    %30 = vsyncpa [#allocation12], 0
    %s31 = scalar_lea.sflag [#allocation12], 1
    %32 = vsyncpa %s31, 0
    %33 = vsyncpa [#allocation15], 0
    %s34 = scalar_lea.sflag [#allocation15], 1
    %35 = vsyncpa %s34, 0
    %36 = vsyncpa [#allocation18], 0
    %s37 = scalar_lea.sflag [#allocation18], 1
    %38 = vsyncpa %s37, 0
    %39 = vsyncpa [#allocation21], 0
    %s40 = scalar_lea.sflag [#allocation21], 1
    %41 = vsyncpa %s40, 0
    %42 = vsyncpa [#allocation24], 0
    %s43 = scalar_lea.sflag [#allocation24], 1
    %44 = vsyncpa %s43, 0
    %45 = vsyncpa [#allocation27], 0
    %s46 = scalar_lea.sflag [#allocation27], 1
    %47 = vsyncpa %s46, 0
    %48 = vsyncpa [#allocation30], 0
    %49 = vsyncpa [#allocation33], 0
    %50 = vsyncpa [#allocation7], 0
    loop: start=0, step=1, limit=4
    $region2: #{tpu_custom_call.1} parent=1 // loop_pre_header
      _
    $region3: #{tpu_custom_call.1} parent=1 // loop_header
      %s52 = sphi 0, %s56
      %p53 = scmp.ge.s32.totalorder %s52, 4
      %s59 = sphi 0, %s71
      %s60 = sphi 0, %s67
      %s61 = sphi 0, %s59
      %s62 = sphi 0, %s60
      %s63 = sphi 0, %s61
      %s64 = sphi 0, %s62
      %s74 = sphi 0, %s76
      %s77 = sphi 0, %s74
      %s78 = sphi 0, %s77
      %s94 = sphi 0, %s78
      %s98 = sphi 0, %s98
      %s100 = sphi 0, %s98
      %s101 = sphi 0, %s100
      %s115 = sphi 0, %s101
      %s119 = sphi 0, %s119
      %s121 = sphi 0, %s119
      %s122 = sphi 0, %s121
      %s136 = sphi 0, %s122
      %s142 = sphi 0, %s144
      %s145 = sphi 0, %s142
      %s146 = sphi 0, %s145
      %s162 = sphi 0, %s146
      %s168 = sphi 0, %s170
      %s171 = sphi 0, %s168
      %s172 = sphi 0, %s171
      %s188 = sphi 0, %s172
      %s194 = sphi 0, %s196
      %s197 = sphi 0, %s194
      %s198 = sphi 0, %s197
      %s214 = sphi 0, %s198
      %s220 = sphi 0, %s222
      %s223 = sphi 0, %s220
      %s224 = sphi 0, %s223
      %s240 = sphi 0, %s224
      %s246 = sphi 0, %s248
      %s249 = sphi 0, %s246
      %s250 = sphi 0, %s249
      %s266 = sphi 0, %s250
      %s272 = sphi 0, %s274
      %s275 = sphi 0, %s272
      %s276 = sphi 0, %s275
      %s292 = sphi 0, %s276
      %s298 = sphi 0, %s300
      %s301 = sphi 0, %s298
      %s302 = sphi 0, %s301
      %s318 = sphi 0, %s302
      %s324 = sphi 0, %s326
      %s327 = sphi 0, %s324
      %s328 = sphi 0, %s327
      %s344 = sphi 0, %s328
      %s350 = sphi 0, %s352
      %s353 = sphi 0, %s350
      %s354 = sphi 0, %s353
      %s370 = sphi 0, %s354
      %s376 = sphi 0, %s378
      %s379 = sphi 0, %s376
      %s380 = sphi 0, %s379
      %s396 = sphi 0, %s380
      %s402 = sphi 0, %s404
      %s405 = sphi 0, %s402
      %s406 = sphi 0, %s405
      %s422 = sphi 0, %s406
      %s428 = sphi 0, %s430
      %s431 = sphi 0, %s428
      %s432 = sphi 0, %s431
      %s448 = sphi 0, %s432
      %s452 = sphi 0, %s452
      %s454 = sphi 0, %s452
      %s455 = sphi 0, %s454
      %s469 = sphi 0, %s455
      %s473 = sphi 0, %s473
      %s475 = sphi 0, %s473
      %s476 = sphi 0, %s475
      %s490 = sphi 0, %s476
      %s494 = sphi 0, %s494
      %s496 = sphi 0, %s494
      %s497 = sphi 0, %s496
      %s511 = sphi 0, %s497
      %s517 = sphi 0, %s519
      %s520 = sphi 0, %s517
      %s521 = sphi 0, %s520
      %s537 = sphi 0, %s521
    $region4: #{tpu_custom_call.1} parent=1 // loop_header_branch
      %55 = sbr.rel (%p53) target = $region8
    $region5: #{tpu_custom_call.1} parent=1 // loop_body
      %s57 = ssub.s32 %s52, 1
      %s58 = ssub.s32 %s52, 2
      %s65 = sadd.s32 1, %s60
      %p66 = scmp.ge.s32.totalorder %s65, 2
      %s67 = scalar_select %p66, 0, %s65
      %s68 = sadd.s32 1, %s59
      %s69 = scalar_select %p66, %s68, %s59
      %p70 = scmp.ge.s32.totalorder %s69, 1
      %s71 = scalar_select %p70, 0, %s69
      %s72 = ssub.s32 %s59, %s71
      %p73 = scmp.eq.s32.totalorder %s72, 0
      %s75 = sadd.s32 %s74, 1
      %s76 = scalar_select %p73, %s74, %s75
      %p79 = pneg %p73
      %p80 = scmp.eq.s32.totalorder %s52, 1
      %p81 = por %p79, %p80
      %p82 = scmp.ne.s32.totalorder %s74, %s77
      %p83 = scmp.eq.s32.totalorder %s52, 0
      %p84 = por %p82, %p83
      %p85 = scmp.ne.s32.totalorder %s74, %s77
      %p86 = scmp.eq.s32.totalorder %s57, 1
      %p87 = por %p85, %p86
      %p88 = scmp.ne.s32.totalorder %s77, %s78
      %p89 = scmp.eq.s32.totalorder %s57, 0
      %p90 = por %p88, %p89
      %p91 = scmp.ne.s32.totalorder %s77, %s78
      %p92 = scmp.eq.s32.totalorder %s58, 1
      %p93 = por %p91, %p92
      %p95 = scmp.ne.s32.totalorder %s78, %s94
      %p96 = scmp.eq.s32.totalorder %s58, 0
      %p97 = por %p95, %p96
      %s99 = sadd.s32 %s98, 1
      %p102 = scmp.eq.s32.totalorder %s52, 1
      %p103 = scmp.ne.s32.totalorder %s98, %s100
      %p104 = scmp.eq.s32.totalorder %s52, 0
      %p105 = por %p103, %p104
      %p106 = scmp.ne.s32.totalorder %s98, %s100
      %p107 = scmp.eq.s32.totalorder %s57, 1
      %p108 = por %p106, %p107
      %p109 = scmp.ne.s32.totalorder %s100, %s101
      %p110 = scmp.eq.s32.totalorder %s57, 0
      %p111 = por %p109, %p110
      %p112 = scmp.ne.s32.totalorder %s100, %s101
      %p113 = scmp.eq.s32.totalorder %s58, 1
      %p114 = por %p112, %p113
      %p116 = scmp.ne.s32.totalorder %s101, %s115
      %p117 = scmp.eq.s32.totalorder %s58, 0
      %p118 = por %p116, %p117
      %s120 = sadd.s32 %s119, 1
      %p123 = scmp.eq.s32.totalorder %s52, 1
      %p124 = scmp.ne.s32.totalorder %s119, %s121
      %p125 = scmp.eq.s32.totalorder %s52, 0
      %p126 = por %p124, %p125
      %p127 = scmp.ne.s32.totalorder %s119, %s121
      %p128 = scmp.eq.s32.totalorder %s57, 1
      %p129 = por %p127, %p128
      %p130 = scmp.ne.s32.totalorder %s121, %s122
      %p131 = scmp.eq.s32.totalorder %s57, 0
      %p132 = por %p130, %p131
      %p133 = scmp.ne.s32.totalorder %s121, %s122
      %p134 = scmp.eq.s32.totalorder %s58, 1
      %p135 = por %p133, %p134
      %p137 = scmp.ne.s32.totalorder %s122, %s136
      %p138 = scmp.eq.s32.totalorder %s58, 0
      %p139 = por %p137, %p138
      %s140 = ssub.s32 %s60, %s67
      %p141 = scmp.eq.s32.totalorder %s140, 0
      %s143 = sadd.s32 %s142, 1
      %s144 = scalar_select %p141, %s142, %s143
      %p147 = pneg %p141
      %p148 = scmp.eq.s32.totalorder %s52, 1
      %p149 = por %p147, %p148
      %p150 = scmp.ne.s32.totalorder %s142, %s145
      %p151 = scmp.eq.s32.totalorder %s52, 0
      %p152 = por %p150, %p151
      %p153 = scmp.ne.s32.totalorder %s142, %s145
      %p154 = scmp.eq.s32.totalorder %s57, 1
      %p155 = por %p153, %p154
      %p156 = scmp.ne.s32.totalorder %s145, %s146
      %p157 = scmp.eq.s32.totalorder %s57, 0
      %p158 = por %p156, %p157
      %p159 = scmp.ne.s32.totalorder %s145, %s146
      %p160 = scmp.eq.s32.totalorder %s58, 1
      %p161 = por %p159, %p160
      %p163 = scmp.ne.s32.totalorder %s146, %s162
      %p164 = scmp.eq.s32.totalorder %s58, 0
      %p165 = por %p163, %p164
      %s166 = ssub.s32 %s60, %s67
      %p167 = scmp.eq.s32.totalorder %s166, 0
      %s169 = sadd.s32 %s168, 1
      %s170 = scalar_select %p167, %s168, %s169
      %p173 = pneg %p167
      %p174 = scmp.eq.s32.totalorder %s52, 1
      %p175 = por %p173, %p174
      %p176 = scmp.ne.s32.totalorder %s168, %s171
      %p177 = scmp.eq.s32.totalorder %s52, 0
      %p178 = por %p176, %p177
      %p179 = scmp.ne.s32.totalorder %s168, %s171
      %p180 = scmp.eq.s32.totalorder %s57, 1
      %p181 = por %p179, %p180
      %p182 = scmp.ne.s32.totalorder %s171, %s172
      %p183 = scmp.eq.s32.totalorder %s57, 0
      %p184 = por %p182, %p183
      %p185 = scmp.ne.s32.totalorder %s171, %s172
      %p186 = scmp.eq.s32.totalorder %s58, 1
      %p187 = por %p185, %p186
      %p189 = scmp.ne.s32.totalorder %s172, %s188
      %p190 = scmp.eq.s32.totalorder %s58, 0
      %p191 = por %p189, %p190
      %s192 = ssub.s32 %s60, %s67
      %p193 = scmp.eq.s32.totalorder %s192, 0
      %s195 = sadd.s32 %s194, 1
      %s196 = scalar_select %p193, %s194, %s195
      %p199 = pneg %p193
      %p200 = scmp.eq.s32.totalorder %s52, 1
      %p201 = por %p199, %p200
      %p202 = scmp.ne.s32.totalorder %s194, %s197
      %p203 = scmp.eq.s32.totalorder %s52, 0
      %p204 = por %p202, %p203
      %p205 = scmp.ne.s32.totalorder %s194, %s197
      %p206 = scmp.eq.s32.totalorder %s57, 1
      %p207 = por %p205, %p206
      %p208 = scmp.ne.s32.totalorder %s197, %s198
      %p209 = scmp.eq.s32.totalorder %s57, 0
      %p210 = por %p208, %p209
      %p211 = scmp.ne.s32.totalorder %s197, %s198
      %p212 = scmp.eq.s32.totalorder %s58, 1
      %p213 = por %p211, %p212
      %p215 = scmp.ne.s32.totalorder %s198, %s214
      %p216 = scmp.eq.s32.totalorder %s58, 0
      %p217 = por %p215, %p216
      %s218 = ssub.s32 %s60, %s67
      %p219 = scmp.eq.s32.totalorder %s218, 0
      %s221 = sadd.s32 %s220, 1
      %s222 = scalar_select %p219, %s220, %s221
      %p225 = pneg %p219
      %p226 = scmp.eq.s32.totalorder %s52, 1
      %p227 = por %p225, %p226
      %p228 = scmp.ne.s32.totalorder %s220, %s223
      %p229 = scmp.eq.s32.totalorder %s52, 0
      %p230 = por %p228, %p229
      %p231 = scmp.ne.s32.totalorder %s220, %s223
      %p232 = scmp.eq.s32.totalorder %s57, 1
      %p233 = por %p231, %p232
      %p234 = scmp.ne.s32.totalorder %s223, %s224
      %p235 = scmp.eq.s32.totalorder %s57, 0
      %p236 = por %p234, %p235
      %p237 = scmp.ne.s32.totalorder %s223, %s224
      %p238 = scmp.eq.s32.totalorder %s58, 1
      %p239 = por %p237, %p238
      %p241 = scmp.ne.s32.totalorder %s224, %s240
      %p242 = scmp.eq.s32.totalorder %s58, 0
      %p243 = por %p241, %p242
      %s244 = ssub.s32 %s60, %s67
      %p245 = scmp.eq.s32.totalorder %s244, 0
      %s247 = sadd.s32 %s246, 1
      %s248 = scalar_select %p245, %s246, %s247
      %p251 = pneg %p245
      %p252 = scmp.eq.s32.totalorder %s52, 1
      %p253 = por %p251, %p252
      %p254 = scmp.ne.s32.totalorder %s246, %s249
      %p255 = scmp.eq.s32.totalorder %s52, 0
      %p256 = por %p254, %p255
      %p257 = scmp.ne.s32.totalorder %s246, %s249
      %p258 = scmp.eq.s32.totalorder %s57, 1
      %p259 = por %p257, %p258
      %p260 = scmp.ne.s32.totalorder %s249, %s250
      %p261 = scmp.eq.s32.totalorder %s57, 0
      %p262 = por %p260, %p261
      %p263 = scmp.ne.s32.totalorder %s249, %s250
      %p264 = scmp.eq.s32.totalorder %s58, 1
      %p265 = por %p263, %p264
      %p267 = scmp.ne.s32.totalorder %s250, %s266
      %p268 = scmp.eq.s32.totalorder %s58, 0
      %p269 = por %p267, %p268
      %s270 = ssub.s32 %s60, %s67
      %p271 = scmp.eq.s32.totalorder %s270, 0
      %s273 = sadd.s32 %s272, 1
      %s274 = scalar_select %p271, %s272, %s273
      %p277 = pneg %p271
      %p278 = scmp.eq.s32.totalorder %s52, 1
      %p279 = por %p277, %p278
      %p280 = scmp.ne.s32.totalorder %s272, %s275
      %p281 = scmp.eq.s32.totalorder %s52, 0
      %p282 = por %p280, %p281
      %p283 = scmp.ne.s32.totalorder %s272, %s275
      %p284 = scmp.eq.s32.totalorder %s57, 1
      %p285 = por %p283, %p284
      %p286 = scmp.ne.s32.totalorder %s275, %s276
      %p287 = scmp.eq.s32.totalorder %s57, 0
      %p288 = por %p286, %p287
      %p289 = scmp.ne.s32.totalorder %s275, %s276
      %p290 = scmp.eq.s32.totalorder %s58, 1
      %p291 = por %p289, %p290
      %p293 = scmp.ne.s32.totalorder %s276, %s292
      %p294 = scmp.eq.s32.totalorder %s58, 0
      %p295 = por %p293, %p294
      %s296 = ssub.s32 %s60, %s67
      %p297 = scmp.eq.s32.totalorder %s296, 0
      %s299 = sadd.s32 %s298, 1
      %s300 = scalar_select %p297, %s298, %s299
      %p303 = pneg %p297
      %p304 = scmp.eq.s32.totalorder %s52, 1
      %p305 = por %p303, %p304
      %p306 = scmp.ne.s32.totalorder %s298, %s301
      %p307 = scmp.eq.s32.totalorder %s52, 0
      %p308 = por %p306, %p307
      %p309 = scmp.ne.s32.totalorder %s298, %s301
      %p310 = scmp.eq.s32.totalorder %s57, 1
      %p311 = por %p309, %p310
      %p312 = scmp.ne.s32.totalorder %s301, %s302
      %p313 = scmp.eq.s32.totalorder %s57, 0
      %p314 = por %p312, %p313
      %p315 = scmp.ne.s32.totalorder %s301, %s302
      %p316 = scmp.eq.s32.totalorder %s58, 1
      %p317 = por %p315, %p316
      %p319 = scmp.ne.s32.totalorder %s302, %s318
      %p320 = scmp.eq.s32.totalorder %s58, 0
      %p321 = por %p319, %p320
      %s322 = ssub.s32 %s60, %s67
      %p323 = scmp.eq.s32.totalorder %s322, 0
      %s325 = sadd.s32 %s324, 1
      %s326 = scalar_select %p323, %s324, %s325
      %p329 = pneg %p323
      %p330 = scmp.eq.s32.totalorder %s52, 1
      %p331 = por %p329, %p330
      %p332 = scmp.ne.s32.totalorder %s324, %s327
      %p333 = scmp.eq.s32.totalorder %s52, 0
      %p334 = por %p332, %p333
      %p335 = scmp.ne.s32.totalorder %s324, %s327
      %p336 = scmp.eq.s32.totalorder %s57, 1
      %p337 = por %p335, %p336
      %p338 = scmp.ne.s32.totalorder %s327, %s328
      %p339 = scmp.eq.s32.totalorder %s57, 0
      %p340 = por %p338, %p339
      %p341 = scmp.ne.s32.totalorder %s327, %s328
      %p342 = scmp.eq.s32.totalorder %s58, 1
      %p343 = por %p341, %p342
      %p345 = scmp.ne.s32.totalorder %s328, %s344
      %p346 = scmp.eq.s32.totalorder %s58, 0
      %p347 = por %p345, %p346
      %s348 = ssub.s32 %s60, %s67
      %p349 = scmp.eq.s32.totalorder %s348, 0
      %s351 = sadd.s32 %s350, 1
      %s352 = scalar_select %p349, %s350, %s351
      %p355 = pneg %p349
      %p356 = scmp.eq.s32.totalorder %s52, 1
      %p357 = por %p355, %p356
      %p358 = scmp.ne.s32.totalorder %s350, %s353
      %p359 = scmp.eq.s32.totalorder %s52, 0
      %p360 = por %p358, %p359
      %p361 = scmp.ne.s32.totalorder %s350, %s353
      %p362 = scmp.eq.s32.totalorder %s57, 1
      %p363 = por %p361, %p362
      %p364 = scmp.ne.s32.totalorder %s353, %s354
      %p365 = scmp.eq.s32.totalorder %s57, 0
      %p366 = por %p364, %p365
      %p367 = scmp.ne.s32.totalorder %s353, %s354
      %p368 = scmp.eq.s32.totalorder %s58, 1
      %p369 = por %p367, %p368
      %p371 = scmp.ne.s32.totalorder %s354, %s370
      %p372 = scmp.eq.s32.totalorder %s58, 0
      %p373 = por %p371, %p372
      %s374 = ssub.s32 %s60, %s67
      %p375 = scmp.eq.s32.totalorder %s374, 0
      %s377 = sadd.s32 %s376, 1
      %s378 = scalar_select %p375, %s376, %s377
      %p381 = pneg %p375
      %p382 = scmp.eq.s32.totalorder %s52, 1
      %p383 = por %p381, %p382
      %p384 = scmp.ne.s32.totalorder %s376, %s379
      %p385 = scmp.eq.s32.totalorder %s52, 0
      %p386 = por %p384, %p385
      %p387 = scmp.ne.s32.totalorder %s376, %s379
      %p388 = scmp.eq.s32.totalorder %s57, 1
      %p389 = por %p387, %p388
      %p390 = scmp.ne.s32.totalorder %s379, %s380
      %p391 = scmp.eq.s32.totalorder %s57, 0
      %p392 = por %p390, %p391
      %p393 = scmp.ne.s32.totalorder %s379, %s380
      %p394 = scmp.eq.s32.totalorder %s58, 1
      %p395 = por %p393, %p394
      %p397 = scmp.ne.s32.totalorder %s380, %s396
      %p398 = scmp.eq.s32.totalorder %s58, 0
      %p399 = por %p397, %p398
      %s400 = ssub.s32 %s60, %s67
      %p401 = scmp.eq.s32.totalorder %s400, 0
      %s403 = sadd.s32 %s402, 1
      %s404 = scalar_select %p401, %s402, %s403
      %p407 = pneg %p401
      %p408 = scmp.eq.s32.totalorder %s52, 1
      %p409 = por %p407, %p408
      %p410 = scmp.ne.s32.totalorder %s402, %s405
      %p411 = scmp.eq.s32.totalorder %s52, 0
      %p412 = por %p410, %p411
      %p413 = scmp.ne.s32.totalorder %s402, %s405
      %p414 = scmp.eq.s32.totalorder %s57, 1
      %p415 = por %p413, %p414
      %p416 = scmp.ne.s32.totalorder %s405, %s406
      %p417 = scmp.eq.s32.totalorder %s57, 0
      %p418 = por %p416, %p417
      %p419 = scmp.ne.s32.totalorder %s405, %s406
      %p420 = scmp.eq.s32.totalorder %s58, 1
      %p421 = por %p419, %p420
      %p423 = scmp.ne.s32.totalorder %s406, %s422
      %p424 = scmp.eq.s32.totalorder %s58, 0
      %p425 = por %p423, %p424
      %s426 = ssub.s32 %s60, %s67
      %p427 = scmp.eq.s32.totalorder %s426, 0
      %s429 = sadd.s32 %s428, 1
      %s430 = scalar_select %p427, %s428, %s429
      %p433 = pneg %p427
      %p434 = scmp.eq.s32.totalorder %s52, 1
      %p435 = por %p433, %p434
      %p436 = scmp.ne.s32.totalorder %s428, %s431
      %p437 = scmp.eq.s32.totalorder %s52, 0
      %p438 = por %p436, %p437
      %p439 = scmp.ne.s32.totalorder %s428, %s431
      %p440 = scmp.eq.s32.totalorder %s57, 1
      %p441 = por %p439, %p440
      %p442 = scmp.ne.s32.totalorder %s431, %s432
      %p443 = scmp.eq.s32.totalorder %s57, 0
      %p444 = por %p442, %p443
      %p445 = scmp.ne.s32.totalorder %s431, %s432
      %p446 = scmp.eq.s32.totalorder %s58, 1
      %p447 = por %p445, %p446
      %p449 = scmp.ne.s32.totalorder %s432, %s448
      %p450 = scmp.eq.s32.totalorder %s58, 0
      %p451 = por %p449, %p450
      %s453 = sadd.s32 %s452, 1
      %p456 = scmp.eq.s32.totalorder %s52, 1
      %p457 = scmp.ne.s32.totalorder %s452, %s454
      %p458 = scmp.eq.s32.totalorder %s52, 0
      %p459 = por %p457, %p458
      %p460 = scmp.ne.s32.totalorder %s452, %s454
      %p461 = scmp.eq.s32.totalorder %s57, 1
      %p462 = por %p460, %p461
      %p463 = scmp.ne.s32.totalorder %s454, %s455
      %p464 = scmp.eq.s32.totalorder %s57, 0
      %p465 = por %p463, %p464
      %p466 = scmp.ne.s32.totalorder %s454, %s455
      %p467 = scmp.eq.s32.totalorder %s58, 1
      %p468 = por %p466, %p467
      %p470 = scmp.ne.s32.totalorder %s455, %s469
      %p471 = scmp.eq.s32.totalorder %s58, 0
      %p472 = por %p470, %p471
      %s474 = sadd.s32 %s473, 1
      %p477 = scmp.eq.s32.totalorder %s52, 1
      %p478 = scmp.ne.s32.totalorder %s473, %s475
      %p479 = scmp.eq.s32.totalorder %s52, 0
      %p480 = por %p478, %p479
      %p481 = scmp.ne.s32.totalorder %s473, %s475
      %p482 = scmp.eq.s32.totalorder %s57, 1
      %p483 = por %p481, %p482
      %p484 = scmp.ne.s32.totalorder %s475, %s476
      %p485 = scmp.eq.s32.totalorder %s57, 0
      %p486 = por %p484, %p485
      %p487 = scmp.ne.s32.totalorder %s475, %s476
      %p488 = scmp.eq.s32.totalorder %s58, 1
      %p489 = por %p487, %p488
      %p491 = scmp.ne.s32.totalorder %s476, %s490
      %p492 = scmp.eq.s32.totalorder %s58, 0
      %p493 = por %p491, %p492
      %s495 = sadd.s32 %s494, 1
      %p498 = scmp.eq.s32.totalorder %s52, 1
      %p499 = scmp.ne.s32.totalorder %s494, %s496
      %p500 = scmp.eq.s32.totalorder %s52, 0
      %p501 = por %p499, %p500
      %p502 = scmp.ne.s32.totalorder %s494, %s496
      %p503 = scmp.eq.s32.totalorder %s57, 1
      %p504 = por %p502, %p503
      %p505 = scmp.ne.s32.totalorder %s496, %s497
      %p506 = scmp.eq.s32.totalorder %s57, 0
      %p507 = por %p505, %p506
      %p508 = scmp.ne.s32.totalorder %s496, %s497
      %p509 = scmp.eq.s32.totalorder %s58, 1
      %p510 = por %p508, %p509
      %p512 = scmp.ne.s32.totalorder %s497, %s511
      %p513 = scmp.eq.s32.totalorder %s58, 0
      %p514 = por %p512, %p513
      %s515 = ssub.s32 %s59, %s71
      %p516 = scmp.eq.s32.totalorder %s515, 0
      %s518 = sadd.s32 %s517, 1
      %s519 = scalar_select %p516, %s517, %s518
      %p522 = pneg %p516
      %p523 = scmp.eq.s32.totalorder %s52, 1
      %p524 = por %p522, %p523
      %p525 = scmp.ne.s32.totalorder %s517, %s520
      %p526 = scmp.eq.s32.totalorder %s52, 0
      %p527 = por %p525, %p526
      %p528 = scmp.ne.s32.totalorder %s517, %s520
      %p529 = scmp.eq.s32.totalorder %s57, 1
      %p530 = por %p528, %p529
      %p531 = scmp.ne.s32.totalorder %s520, %s521
      %p532 = scmp.eq.s32.totalorder %s57, 0
      %p533 = por %p531, %p532
      %p534 = scmp.ne.s32.totalorder %s520, %s521
      %p535 = scmp.eq.s32.totalorder %s58, 1
      %p536 = por %p534, %p535
      %p538 = scmp.ne.s32.totalorder %s521, %s537
      %p539 = scmp.eq.s32.totalorder %s58, 0
      %p540 = por %p538, %p539
      %p541 = scmp.le.s32.totalorder 1, %s52
      %p542 = scmp.lt.s32.totalorder %s52, 3
      %p543 = pnand %p541, %p542
      %p544 = pneg %p543
      // Predicated region
      $region9: #{tpu_custom_call.1} parent=5 // pred_check
        _
      $region10: #{tpu_custom_call.1} parent=5 // pred_check_branch
        %546 = sbr.rel (%p543) target = $region12
      $region11: #{tpu_custom_call.1} parent=5 // pred_region
        %s547 = ssub.s32 %s52, 1
        // Predicated region
        $region13: #{tpu_custom_call.1} parent=11 // pred_check
          %p548 = pneg %p90
        $region14: #{tpu_custom_call.1} parent=11 // pred_check_branch
          %550 = sbr.rel (%p548) target = $region16
        $region15: #{tpu_custom_call.1} parent=11 // pred_region
          %s551 = smul.u32 2, %s61
          %s553 = ssub.s32 256, 256
          %554 = vsyncadd [#allocation6], %s553
          %s555 = smul.addr %s551, 128
          %s556 = scalar_lea.hbm %s1, %s555
          %s557 = sshll.u32 [#allocation5], 4
          %s558 = int_to_ptr.vmem [resolvable:$true] %s557
          %563 = dma.hbm_to_vmem [thread:$0]  %s556, 256, %s558, [#allocation6], 128, 128, 8
        $region16: #{tpu_custom_call.1} parent=11 // pred_fallthru
          _
        // Predicated region
        $region17: #{tpu_custom_call.1} parent=11 // pred_check
          %p564 = pneg %p111
        $region18: #{tpu_custom_call.1} parent=11 // pred_check_branch
          %566 = sbr.rel (%p564) target = $region20
        $region19: #{tpu_custom_call.1} parent=11 // pred_region
          %s568 = ssub.s32 128, 128
          %569 = vsyncadd [#allocation9], %s568
          %s571 = sshll.u32 [#allocation8], 4
          %s572 = int_to_ptr.vmem [resolvable:$true] %s571
          %574 = dma.hbm_to_vmem [thread:$0]  %s2, 128, %s572, [#allocation9]
        $region20: #{tpu_custom_call.1} parent=11 // pred_fallthru
          _
        // Predicated region
        $region21: #{tpu_custom_call.1} parent=11 // pred_check
          %p575 = pneg %p132
        $region22: #{tpu_custom_call.1} parent=11 // pred_check_branch
          %577 = sbr.rel (%p575) target = $region24
        $region23: #{tpu_custom_call.1} parent=11 // pred_region
          %s579 = ssub.s32 128, 128
          %580 = vsyncadd [#allocation9], %s579
          %s582 = sshll.u32 [#allocation10], 4
          %s583 = int_to_ptr.vmem [resolvable:$true] %s582
          %585 = dma.hbm_to_vmem [thread:$0]  %s3, 128, %s583, [#allocation9]
        $region24: #{tpu_custom_call.1} parent=11 // pred_fallthru
          _
        // Predicated region
        $region25: #{tpu_custom_call.1} parent=11 // pred_check
          %p586 = pneg %p465
        $region26: #{tpu_custom_call.1} parent=11 // pred_check_branch
          %588 = sbr.rel (%p586) target = $region28
        $region27: #{tpu_custom_call.1} parent=11 // pred_region
          %s590 = ssub.s32 16, 16
          %591 = vsyncadd [#allocation30], %s590
          %s593 = sshll.u32 [#allocation29], 4
          %s594 = int_to_ptr.vmem [resolvable:$true] %s593
          %596 = dma.hbm_to_vmem [thread:$0]  %s16, 16, %s594, [#allocation30]
        $region28: #{tpu_custom_call.1} parent=11 // pred_fallthru
          _
        // Predicated region
        $region29: #{tpu_custom_call.1} parent=11 // pred_check
          %p597 = pneg %p486
        $region30: #{tpu_custom_call.1} parent=11 // pred_check_branch
          %599 = sbr.rel (%p597) target = $region32
        $region31: #{tpu_custom_call.1} parent=11 // pred_region
          %s601 = ssub.s32 16, 16
          %602 = vsyncadd [#allocation30], %s601
          %s604 = sshll.u32 [#allocation31], 4
          %s605 = int_to_ptr.vmem [resolvable:$true] %s604
          %607 = dma.hbm_to_vmem [thread:$0]  %s17, 16, %s605, [#allocation30]
        $region32: #{tpu_custom_call.1} parent=11 // pred_fallthru
          _
        // Predicated region
        $region33: #{tpu_custom_call.1} parent=11 // pred_check
          %p608 = pneg %p507
        $region34: #{tpu_custom_call.1} parent=11 // pred_check_branch
          %610 = sbr.rel (%p608) target = $region36
        $region35: #{tpu_custom_call.1} parent=11 // pred_region
          %s612 = ssub.s32 256, 256
          %613 = vsyncadd [#allocation33], %s612
          %s614 = sshll.u32 [#allocation32], 4
          %s615 = int_to_ptr.vmem [resolvable:$true] %s614
          %620 = dma.hbm_to_vmem [thread:$0]  %s18, 256, %s615, [#allocation33], 64, 64, 4
        $region36: #{tpu_custom_call.1} parent=11 // pred_fallthru
          _
      $region12: #{tpu_custom_call.1} parent=5 // pred_fallthru
        _
      %p621 = scmp.lt.s32.totalorder %s52, 2
      // Predicated region
      $region37: #{tpu_custom_call.1} parent=5 // pred_check
        %p622 = pneg %p621
      $region38: #{tpu_custom_call.1} parent=5 // pred_check_branch
        %624 = sbr.rel (%p622) target = $region40
      $region39: #{tpu_custom_call.1} parent=5 // pred_region
        // Predicated region
        $region41: #{tpu_custom_call.1} parent=39 // pred_check
          %p625 = pneg %p152
        $region42: #{tpu_custom_call.1} parent=39 // pred_check_branch
          %627 = sbr.rel (%p625) target = $region44
        $region43: #{tpu_custom_call.1} parent=39 // pred_region
          %s628 = sand.u32 %s52, 1
          %s629 = scalar_lea.sflag [#allocation12], %s628
          %s630 = sand.u32 %s142, 1
          %s631 = scalar_lea.vmem [#allocation11], %s630
          %s633 = ssub.s32 16, 16
          %634 = vsyncadd %s629, %s633
          %s635 = smul.addr %s60, 16
          %s636 = scalar_lea.hbm %s4, %s635
          %s638 = sshll.u32 %s631, 4
          %s639 = int_to_ptr.vmem [resolvable:$true] %s638
          %641 = dma.hbm_to_vmem [thread:$0]  %s636, 16, %s639, %s629
        $region44: #{tpu_custom_call.1} parent=39 // pred_fallthru
          _
        // Predicated region
        $region45: #{tpu_custom_call.1} parent=39 // pred_check
          %p642 = pneg %p178
        $region46: #{tpu_custom_call.1} parent=39 // pred_check_branch
          %644 = sbr.rel (%p642) target = $region48
        $region47: #{tpu_custom_call.1} parent=39 // pred_region
          %s645 = sand.u32 %s52, 1
          %s646 = scalar_lea.sflag [#allocation12], %s645
          %s647 = sand.u32 %s168, 1
          %s648 = scalar_lea.vmem [#allocation13], %s647
          %s650 = ssub.s32 16, 16
          %651 = vsyncadd %s646, %s650
          %s652 = smul.addr %s60, 16
          %s653 = scalar_lea.hbm %s5, %s652
          %s655 = sshll.u32 %s648, 4
          %s656 = int_to_ptr.vmem [resolvable:$true] %s655
          %658 = dma.hbm_to_vmem [thread:$0]  %s653, 16, %s656, %s646
        $region48: #{tpu_custom_call.1} parent=39 // pred_fallthru
          _
        // Predicated region
        $region49: #{tpu_custom_call.1} parent=39 // pred_check
          %p659 = pneg %p204
        $region50: #{tpu_custom_call.1} parent=39 // pred_check_branch
          %661 = sbr.rel (%p659) target = $region52
        $region51: #{tpu_custom_call.1} parent=39 // pred_region
          %s662 = sand.u32 %s52, 1
          %s663 = scalar_lea.sflag [#allocation15], %s662
          %s664 = sand.u32 %s194, 1
          %s665 = smul.addr %s664, 16
          %s666 = scalar_lea.vmem [#allocation14], %s665
          %s668 = ssub.s32 256, 256
          %669 = vsyncadd %s663, %s668
          %s670 = smul.addr %s60, 4
          %s671 = smul.addr %s670, 64
          %s672 = scalar_lea.hbm %s6, %s671
          %s673 = sshll.u32 %s666, 4
          %s674 = int_to_ptr.vmem [resolvable:$true] %s673
          %679 = dma.hbm_to_vmem [thread:$0]  %s672, 256, %s674, %s663, 64, 64, 4
        $region52: #{tpu_custom_call.1} parent=39 // pred_fallthru
          _
        // Predicated region
        $region53: #{tpu_custom_call.1} parent=39 // pred_check
          %p680 = pneg %p230
        $region54: #{tpu_custom_call.1} parent=39 // pred_check_branch
          %682 = sbr.rel (%p680) target = $region56
        $region55: #{tpu_custom_call.1} parent=39 // pred_region
          %s683 = sand.u32 %s52, 1
          %s684 = scalar_lea.sflag [#allocation15], %s683
          %s685 = sand.u32 %s220, 1
          %s686 = scalar_lea.vmem [#allocation16], %s685
          %s688 = ssub.s32 16, 16
          %689 = vsyncadd %s684, %s688
          %s690 = smul.addr %s60, 16
          %s691 = scalar_lea.hbm %s7, %s690
          %s693 = sshll.u32 %s686, 4
          %s694 = int_to_ptr.vmem [resolvable:$true] %s693
          %696 = dma.hbm_to_vmem [thread:$0]  %s691, 16, %s694, %s684
        $region56: #{tpu_custom_call.1} parent=39 // pred_fallthru
          _
        // Predicated region
        $region57: #{tpu_custom_call.1} parent=39 // pred_check
          %p697 = pneg %p256
        $region58: #{tpu_custom_call.1} parent=39 // pred_check_branch
          %699 = sbr.rel (%p697) target = $region60
        $region59: #{tpu_custom_call.1} parent=39 // pred_region
          %s700 = sand.u32 %s52, 1
          %s701 = scalar_lea.sflag [#allocation18], %s700
          %s702 = sand.u32 %s246, 1
          %s703 = smul.addr %s702, 16
          %s704 = scalar_lea.vmem [#allocation17], %s703
          %s706 = ssub.s32 256, 256
          %707 = vsyncadd %s701, %s706
          %s708 = smul.addr %s60, 4
          %s709 = smul.addr %s708, 64
          %s710 = scalar_lea.hbm %s8, %s709
          %s711 = sshll.u32 %s704, 4
          %s712 = int_to_ptr.vmem [resolvable:$true] %s711
          %717 = dma.hbm_to_vmem [thread:$0]  %s710, 256, %s712, %s701, 64, 64, 4
        $region60: #{tpu_custom_call.1} parent=39 // pred_fallthru
          _
        // Predicated region
        $region61: #{tpu_custom_call.1} parent=39 // pred_check
          %p718 = pneg %p282
        $region62: #{tpu_custom_call.1} parent=39 // pred_check_branch
          %720 = sbr.rel (%p718) target = $region64
        $region63: #{tpu_custom_call.1} parent=39 // pred_region
          %s721 = sand.u32 %s52, 1
          %s722 = scalar_lea.sflag [#allocation18], %s721
          %s723 = sand.u32 %s272, 1
          %s724 = scalar_lea.vmem [#allocation19], %s723
          %s726 = ssub.s32 16, 16
          %727 = vsyncadd %s722, %s726
          %s728 = smul.addr %s60, 16
          %s729 = scalar_lea.hbm %s9, %s728
          %s731 = sshll.u32 %s724, 4
          %s732 = int_to_ptr.vmem [resolvable:$true] %s731
          %734 = dma.hbm_to_vmem [thread:$0]  %s729, 16, %s732, %s722
        $region64: #{tpu_custom_call.1} parent=39 // pred_fallthru
          _
        // Predicated region
        $region65: #{tpu_custom_call.1} parent=39 // pred_check
          %p735 = pneg %p308
        $region66: #{tpu_custom_call.1} parent=39 // pred_check_branch
          %737 = sbr.rel (%p735) target = $region68
        $region67: #{tpu_custom_call.1} parent=39 // pred_region
          %s738 = sand.u32 %s52, 1
          %s739 = scalar_lea.sflag [#allocation21], %s738
          %s740 = sand.u32 %s298, 1
          %s741 = scalar_lea.vmem [#allocation20], %s740
          %s743 = ssub.s32 16, 16
          %744 = vsyncadd %s739, %s743
          %s745 = smul.addr %s60, 16
          %s746 = scalar_lea.hbm %s10, %s745
          %s748 = sshll.u32 %s741, 4
          %s749 = int_to_ptr.vmem [resolvable:$true] %s748
          %751 = dma.hbm_to_vmem [thread:$0]  %s746, 16, %s749, %s739
        $region68: #{tpu_custom_call.1} parent=39 // pred_fallthru
          _
        // Predicated region
        $region69: #{tpu_custom_call.1} parent=39 // pred_check
          %p752 = pneg %p334
        $region70: #{tpu_custom_call.1} parent=39 // pred_check_branch
          %754 = sbr.rel (%p752) target = $region72
        $region71: #{tpu_custom_call.1} parent=39 // pred_region
          %s755 = sand.u32 %s52, 1
          %s756 = scalar_lea.sflag [#allocation21], %s755
          %s757 = sand.u32 %s324, 1
          %s758 = scalar_lea.vmem [#allocation22], %s757
          %s760 = ssub.s32 16, 16
          %761 = vsyncadd %s756, %s760
          %s762 = smul.addr %s60, 16
          %s763 = scalar_lea.hbm %s11, %s762
          %s765 = sshll.u32 %s758, 4
          %s766 = int_to_ptr.vmem [resolvable:$true] %s765
          %768 = dma.hbm_to_vmem [thread:$0]  %s763, 16, %s766, %s756
        $region72: #{tpu_custom_call.1} parent=39 // pred_fallthru
          _
        // Predicated region
        $region73: #{tpu_custom_call.1} parent=39 // pred_check
          %p769 = pneg %p360
        $region74: #{tpu_custom_call.1} parent=39 // pred_check_branch
          %771 = sbr.rel (%p769) target = $region76
        $region75: #{tpu_custom_call.1} parent=39 // pred_region
          %s772 = sand.u32 %s52, 1
          %s773 = scalar_lea.sflag [#allocation24], %s772
          %s774 = sand.u32 %s350, 1
          %s775 = smul.addr %s774, 16
          %s776 = scalar_lea.vmem [#allocation23], %s775
          %s778 = ssub.s32 256, 256
          %779 = vsyncadd %s773, %s778
          %s780 = smul.addr %s60, 4
          %s781 = smul.addr %s780, 64
          %s782 = scalar_lea.hbm %s12, %s781
          %s783 = sshll.u32 %s776, 4
          %s784 = int_to_ptr.vmem [resolvable:$true] %s783
          %789 = dma.hbm_to_vmem [thread:$0]  %s782, 256, %s784, %s773, 64, 64, 4
        $region76: #{tpu_custom_call.1} parent=39 // pred_fallthru
          _
        // Predicated region
        $region77: #{tpu_custom_call.1} parent=39 // pred_check
          %p790 = pneg %p386
        $region78: #{tpu_custom_call.1} parent=39 // pred_check_branch
          %792 = sbr.rel (%p790) target = $region80
        $region79: #{tpu_custom_call.1} parent=39 // pred_region
          %s793 = sand.u32 %s52, 1
          %s794 = scalar_lea.sflag [#allocation24], %s793
          %s795 = sand.u32 %s376, 1
          %s796 = scalar_lea.vmem [#allocation25], %s795
          %s798 = ssub.s32 16, 16
          %799 = vsyncadd %s794, %s798
          %s800 = smul.addr %s60, 16
          %s801 = scalar_lea.hbm %s13, %s800
          %s803 = sshll.u32 %s796, 4
          %s804 = int_to_ptr.vmem [resolvable:$true] %s803
          %806 = dma.hbm_to_vmem [thread:$0]  %s801, 16, %s804, %s794
        $region80: #{tpu_custom_call.1} parent=39 // pred_fallthru
          _
        // Predicated region
        $region81: #{tpu_custom_call.1} parent=39 // pred_check
          %p807 = pneg %p412
        $region82: #{tpu_custom_call.1} parent=39 // pred_check_branch
          %809 = sbr.rel (%p807) target = $region84
        $region83: #{tpu_custom_call.1} parent=39 // pred_region
          %s810 = sand.u32 %s52, 1
          %s811 = scalar_lea.sflag [#allocation27], %s810
          %s812 = sand.u32 %s402, 1
          %s813 = smul.addr %s812, 64
          %s814 = scalar_lea.vmem [#allocation26], %s813
          %s816 = ssub.s32 1024, 1024
          %817 = vsyncadd %s811, %s816
          %s818 = smul.addr %s60, 16
          %s819 = smul.addr %s818, 64
          %s820 = scalar_lea.hbm %s14, %s819
          %s821 = sshll.u32 %s814, 4
          %s822 = int_to_ptr.vmem [resolvable:$true] %s821
          %827 = dma.hbm_to_vmem [thread:$0]  %s820, 1024, %s822, %s811, 64, 64, 4
        $region84: #{tpu_custom_call.1} parent=39 // pred_fallthru
          _
        // Predicated region
        $region85: #{tpu_custom_call.1} parent=39 // pred_check
          %p828 = pneg %p438
        $region86: #{tpu_custom_call.1} parent=39 // pred_check_branch
          %830 = sbr.rel (%p828) target = $region88
        $region87: #{tpu_custom_call.1} parent=39 // pred_region
          %s831 = sand.u32 %s52, 1
          %s832 = scalar_lea.sflag [#allocation27], %s831
          %s833 = sand.u32 %s428, 1
          %s834 = scalar_lea.vmem [#allocation28], %s833
          %s836 = ssub.s32 16, 16
          %837 = vsyncadd %s832, %s836
          %s838 = smul.addr %s60, 16
          %s839 = scalar_lea.hbm %s15, %s838
          %s841 = sshll.u32 %s834, 4
          %s842 = int_to_ptr.vmem [resolvable:$true] %s841
          %844 = dma.hbm_to_vmem [thread:$0]  %s839, 16, %s842, %s832
        $region88: #{tpu_custom_call.1} parent=39 // pred_fallthru
          _
      $region40: #{tpu_custom_call.1} parent=5 // pred_fallthru
        _
      %p845 = scmp.le.s32.totalorder 1, %s52
      %p846 = scmp.lt.s32.totalorder %s52, 3
      %p847 = pnand %p845, %p846
      %p848 = pneg %p847
      // Predicated region
      $region89: #{tpu_custom_call.1} parent=5 // pred_check
        _
      $region90: #{tpu_custom_call.1} parent=5 // pred_check_branch
        %850 = sbr.rel (%p847) target = $region92
      $region91: #{tpu_custom_call.1} parent=5 // pred_region
        %s851 = ssub.s32 %s52, 1
        // Predicated region
        $region93: #{tpu_custom_call.1} parent=91 // pred_check
          %p852 = pneg %p90
        $region94: #{tpu_custom_call.1} parent=91 // pred_check_branch
          %854 = sbr.rel (%p852) target = $region96
        $region95: #{tpu_custom_call.1} parent=91 // pred_region
          %855 = dma.done [#allocation6], 256
        $region96: #{tpu_custom_call.1} parent=91 // pred_fallthru
          _
        // Predicated region
        $region97: #{tpu_custom_call.1} parent=91 // pred_check
          %p856 = pneg %p111
        $region98: #{tpu_custom_call.1} parent=91 // pred_check_branch
          %858 = sbr.rel (%p856) target = $region100
        $region99: #{tpu_custom_call.1} parent=91 // pred_region
          %859 = dma.done [#allocation9], 128
        $region100: #{tpu_custom_call.1} parent=91 // pred_fallthru
          _
        // Predicated region
        $region101: #{tpu_custom_call.1} parent=91 // pred_check
          %p860 = pneg %p132
        $region102: #{tpu_custom_call.1} parent=91 // pred_check_branch
          %862 = sbr.rel (%p860) target = $region104
        $region103: #{tpu_custom_call.1} parent=91 // pred_region
          %863 = dma.done [#allocation9], 128
        $region104: #{tpu_custom_call.1} parent=91 // pred_fallthru
          _
        %s864 = sand.u32 %s57, 1
        %s865 = scalar_lea.sflag [#allocation12], %s864
        %s866 = sand.u32 %s145, 1
        %s867 = scalar_lea.vmem [#allocation11], %s866
        // Predicated region
        $region105: #{tpu_custom_call.1} parent=91 // pred_check
          %p868 = pneg %p158
        $region106: #{tpu_custom_call.1} parent=91 // pred_check_branch
          %870 = sbr.rel (%p868) target = $region108
        $region107: #{tpu_custom_call.1} parent=91 // pred_region
          %871 = dma.done %s865, 16
        $region108: #{tpu_custom_call.1} parent=91 // pred_fallthru
          _
        %s872 = sand.u32 %s57, 1
        %s873 = scalar_lea.sflag [#allocation12], %s872
        %s874 = sand.u32 %s171, 1
        %s875 = scalar_lea.vmem [#allocation13], %s874
        // Predicated region
        $region109: #{tpu_custom_call.1} parent=91 // pred_check
          %p876 = pneg %p184
        $region110: #{tpu_custom_call.1} parent=91 // pred_check_branch
          %878 = sbr.rel (%p876) target = $region112
        $region111: #{tpu_custom_call.1} parent=91 // pred_region
          %879 = dma.done %s873, 16
        $region112: #{tpu_custom_call.1} parent=91 // pred_fallthru
          _
        %s880 = sand.u32 %s57, 1
        %s881 = scalar_lea.sflag [#allocation15], %s880
        %s882 = sand.u32 %s197, 1
        %s883 = smul.addr %s882, 16
        %s884 = scalar_lea.vmem [#allocation14], %s883
        // Predicated region
        $region113: #{tpu_custom_call.1} parent=91 // pred_check
          %p885 = pneg %p210
        $region114: #{tpu_custom_call.1} parent=91 // pred_check_branch
          %887 = sbr.rel (%p885) target = $region116
        $region115: #{tpu_custom_call.1} parent=91 // pred_region
          %888 = dma.done %s881, 256
        $region116: #{tpu_custom_call.1} parent=91 // pred_fallthru
          _
        %s889 = sand.u32 %s57, 1
        %s890 = scalar_lea.sflag [#allocation15], %s889
        %s891 = sand.u32 %s223, 1
        %s892 = scalar_lea.vmem [#allocation16], %s891
        // Predicated region
        $region117: #{tpu_custom_call.1} parent=91 // pred_check
          %p893 = pneg %p236
        $region118: #{tpu_custom_call.1} parent=91 // pred_check_branch
          %895 = sbr.rel (%p893) target = $region120
        $region119: #{tpu_custom_call.1} parent=91 // pred_region
          %896 = dma.done %s890, 16
        $region120: #{tpu_custom_call.1} parent=91 // pred_fallthru
          _
        %s897 = sand.u32 %s57, 1
        %s898 = scalar_lea.sflag [#allocation18], %s897
        %s899 = sand.u32 %s249, 1
        %s900 = smul.addr %s899, 16
        %s901 = scalar_lea.vmem [#allocation17], %s900
        // Predicated region
        $region121: #{tpu_custom_call.1} parent=91 // pred_check
          %p902 = pneg %p262
        $region122: #{tpu_custom_call.1} parent=91 // pred_check_branch
          %904 = sbr.rel (%p902) target = $region124
        $region123: #{tpu_custom_call.1} parent=91 // pred_region
          %905 = dma.done %s898, 256
        $region124: #{tpu_custom_call.1} parent=91 // pred_fallthru
          _
        %s906 = sand.u32 %s57, 1
        %s907 = scalar_lea.sflag [#allocation18], %s906
        %s908 = sand.u32 %s275, 1
        %s909 = scalar_lea.vmem [#allocation19], %s908
        // Predicated region
        $region125: #{tpu_custom_call.1} parent=91 // pred_check
          %p910 = pneg %p288
        $region126: #{tpu_custom_call.1} parent=91 // pred_check_branch
          %912 = sbr.rel (%p910) target = $region128
        $region127: #{tpu_custom_call.1} parent=91 // pred_region
          %913 = dma.done %s907, 16
        $region128: #{tpu_custom_call.1} parent=91 // pred_fallthru
          _
        %s914 = sand.u32 %s57, 1
        %s915 = scalar_lea.sflag [#allocation21], %s914
        %s916 = sand.u32 %s301, 1
        %s917 = scalar_lea.vmem [#allocation20], %s916
        // Predicated region
        $region129: #{tpu_custom_call.1} parent=91 // pred_check
          %p918 = pneg %p314
        $region130: #{tpu_custom_call.1} parent=91 // pred_check_branch
          %920 = sbr.rel (%p918) target = $region132
        $region131: #{tpu_custom_call.1} parent=91 // pred_region
          %921 = dma.done %s915, 16
        $region132: #{tpu_custom_call.1} parent=91 // pred_fallthru
          _
        %s922 = sand.u32 %s57, 1
        %s923 = scalar_lea.sflag [#allocation21], %s922
        %s924 = sand.u32 %s327, 1
        %s925 = scalar_lea.vmem [#allocation22], %s924
        // Predicated region
        $region133: #{tpu_custom_call.1} parent=91 // pred_check
          %p926 = pneg %p340
        $region134: #{tpu_custom_call.1} parent=91 // pred_check_branch
          %928 = sbr.rel (%p926) target = $region136
        $region135: #{tpu_custom_call.1} parent=91 // pred_region
          %929 = dma.done %s923, 16
        $region136: #{tpu_custom_call.1} parent=91 // pred_fallthru
          _
        %s930 = sand.u32 %s57, 1
        %s931 = scalar_lea.sflag [#allocation24], %s930
        %s932 = sand.u32 %s353, 1
        %s933 = smul.addr %s932, 16
        %s934 = scalar_lea.vmem [#allocation23], %s933
        // Predicated region
        $region137: #{tpu_custom_call.1} parent=91 // pred_check
          %p935 = pneg %p366
        $region138: #{tpu_custom_call.1} parent=91 // pred_check_branch
          %937 = sbr.rel (%p935) target = $region140
        $region139: #{tpu_custom_call.1} parent=91 // pred_region
          %938 = dma.done %s931, 256
        $region140: #{tpu_custom_call.1} parent=91 // pred_fallthru
          _
        %s939 = sand.u32 %s57, 1
        %s940 = scalar_lea.sflag [#allocation24], %s939
        %s941 = sand.u32 %s379, 1
        %s942 = scalar_lea.vmem [#allocation25], %s941
        // Predicated region
        $region141: #{tpu_custom_call.1} parent=91 // pred_check
          %p943 = pneg %p392
        $region142: #{tpu_custom_call.1} parent=91 // pred_check_branch
          %945 = sbr.rel (%p943) target = $region144
        $region143: #{tpu_custom_call.1} parent=91 // pred_region
          %946 = dma.done %s940, 16
        $region144: #{tpu_custom_call.1} parent=91 // pred_fallthru
          _
        %s947 = sand.u32 %s57, 1
        %s948 = scalar_lea.sflag [#allocation27], %s947
        %s949 = sand.u32 %s405, 1
        %s950 = smul.addr %s949, 64
        %s951 = scalar_lea.vmem [#allocation26], %s950
        // Predicated region
        $region145: #{tpu_custom_call.1} parent=91 // pred_check
          %p952 = pneg %p418
        $region146: #{tpu_custom_call.1} parent=91 // pred_check_branch
          %954 = sbr.rel (%p952) target = $region148
        $region147: #{tpu_custom_call.1} parent=91 // pred_region
          %955 = dma.done %s948, 1024
        $region148: #{tpu_custom_call.1} parent=91 // pred_fallthru
          _
        %s956 = sand.u32 %s57, 1
        %s957 = scalar_lea.sflag [#allocation27], %s956
        %s958 = sand.u32 %s431, 1
        %s959 = scalar_lea.vmem [#allocation28], %s958
        // Predicated region
        $region149: #{tpu_custom_call.1} parent=91 // pred_check
          %p960 = pneg %p444
        $region150: #{tpu_custom_call.1} parent=91 // pred_check_branch
          %962 = sbr.rel (%p960) target = $region152
        $region151: #{tpu_custom_call.1} parent=91 // pred_region
          %963 = dma.done %s957, 16
        $region152: #{tpu_custom_call.1} parent=91 // pred_fallthru
          _
        // Predicated region
        $region153: #{tpu_custom_call.1} parent=91 // pred_check
          %p964 = pneg %p465
        $region154: #{tpu_custom_call.1} parent=91 // pred_check_branch
          %966 = sbr.rel (%p964) target = $region156
        $region155: #{tpu_custom_call.1} parent=91 // pred_region
          %967 = dma.done [#allocation30], 16
        $region156: #{tpu_custom_call.1} parent=91 // pred_fallthru
          _
        // Predicated region
        $region157: #{tpu_custom_call.1} parent=91 // pred_check
          %p968 = pneg %p486
        $region158: #{tpu_custom_call.1} parent=91 // pred_check_branch
          %970 = sbr.rel (%p968) target = $region160
        $region159: #{tpu_custom_call.1} parent=91 // pred_region
          %971 = dma.done [#allocation30], 16
        $region160: #{tpu_custom_call.1} parent=91 // pred_fallthru
          _
        // Predicated region
        $region161: #{tpu_custom_call.1} parent=91 // pred_check
          %p972 = pneg %p507
        $region162: #{tpu_custom_call.1} parent=91 // pred_check_branch
          %974 = sbr.rel (%p972) target = $region164
        $region163: #{tpu_custom_call.1} parent=91 // pred_region
          %975 = dma.done [#allocation33], 256
        $region164: #{tpu_custom_call.1} parent=91 // pred_fallthru
          _
        %p976 = pneg %p90
        %p977 = pneg %p87
        %p978 = pneg %p111
        %p979 = pneg %p108
        %p980 = pneg %p132
        %p981 = pneg %p129
        %s982 = sand.u32 %s57, 1
        %s983 = scalar_lea.sflag [#allocation12], %s982
        %s984 = sand.u32 %s145, 1
        %s985 = scalar_lea.vmem [#allocation11], %s984
        %p986 = pneg %p158
        %p987 = pneg %p155
        %s988 = sand.u32 %s57, 1
        %s989 = scalar_lea.sflag [#allocation12], %s988
        %s990 = sand.u32 %s171, 1
        %s991 = scalar_lea.vmem [#allocation13], %s990
        %p992 = pneg %p184
        %p993 = pneg %p181
        %s994 = sand.u32 %s57, 1
        %s995 = scalar_lea.sflag [#allocation15], %s994
        %s996 = sand.u32 %s197, 1
        %s997 = smul.addr %s996, 16
        %s998 = scalar_lea.vmem [#allocation14], %s997
        %p999 = pneg %p210
        %p1000 = pneg %p207
        %s1001 = sand.u32 %s57, 1
        %s1002 = scalar_lea.sflag [#allocation15], %s1001
        %s1003 = sand.u32 %s223, 1
        %s1004 = scalar_lea.vmem [#allocation16], %s1003
        %p1005 = pneg %p236
        %p1006 = pneg %p233
        %s1007 = sand.u32 %s57, 1
        %s1008 = scalar_lea.sflag [#allocation18], %s1007
        %s1009 = sand.u32 %s249, 1
        %s1010 = smul.addr %s1009, 16
        %s1011 = scalar_lea.vmem [#allocation17], %s1010
        %p1012 = pneg %p262
        %p1013 = pneg %p259
        %s1014 = sand.u32 %s57, 1
        %s1015 = scalar_lea.sflag [#allocation18], %s1014
        %s1016 = sand.u32 %s275, 1
        %s1017 = scalar_lea.vmem [#allocation19], %s1016
        %p1018 = pneg %p288
        %p1019 = pneg %p285
        %s1020 = sand.u32 %s57, 1
        %s1021 = scalar_lea.sflag [#allocation21], %s1020
        %s1022 = sand.u32 %s301, 1
        %s1023 = scalar_lea.vmem [#allocation20], %s1022
        %p1024 = pneg %p314
        %p1025 = pneg %p311
        %s1026 = sand.u32 %s57, 1
        %s1027 = scalar_lea.sflag [#allocation21], %s1026
        %s1028 = sand.u32 %s327, 1
        %s1029 = scalar_lea.vmem [#allocation22], %s1028
        %p1030 = pneg %p340
        %p1031 = pneg %p337
        %s1032 = sand.u32 %s57, 1
        %s1033 = scalar_lea.sflag [#allocation24], %s1032
        %s1034 = sand.u32 %s353, 1
        %s1035 = smul.addr %s1034, 16
        %s1036 = scalar_lea.vmem [#allocation23], %s1035
        %p1037 = pneg %p366
        %p1038 = pneg %p363
        %s1039 = sand.u32 %s57, 1
        %s1040 = scalar_lea.sflag [#allocation24], %s1039
        %s1041 = sand.u32 %s379, 1
        %s1042 = scalar_lea.vmem [#allocation25], %s1041
        %p1043 = pneg %p392
        %p1044 = pneg %p389
        %s1045 = sand.u32 %s57, 1
        %s1046 = scalar_lea.sflag [#allocation27], %s1045
        %s1047 = sand.u32 %s405, 1
        %s1048 = smul.addr %s1047, 64
        %s1049 = scalar_lea.vmem [#allocation26], %s1048
        %p1050 = pneg %p418
        %p1051 = pneg %p415
        %s1052 = sand.u32 %s57, 1
        %s1053 = scalar_lea.sflag [#allocation27], %s1052
        %s1054 = sand.u32 %s431, 1
        %s1055 = scalar_lea.vmem [#allocation28], %s1054
        %p1056 = pneg %p444
        %p1057 = pneg %p441
        %p1058 = pneg %p465
        %p1059 = pneg %p462
        %p1060 = pneg %p486
        %p1061 = pneg %p483
        %p1062 = pneg %p507
        %p1063 = pneg %p504
        %p1064 = pneg %p533
        %p1065 = pneg %p530
        %s1066 = smul.u32 2, %s61
        %p1068 = scmp.eq.s32.totalorder %s62, 0
        // Predicated region
        $region165: #{tpu_custom_call.1} parent=91 // pred_check
          %p1069 = pneg %p1068
        $region166: #{tpu_custom_call.1} parent=91 // pred_check_branch
          %1071 = sbr.rel (%p1069) target = $region168
        $region167: #{tpu_custom_call.1} parent=91 // pred_region
          %v1072 = vld [vmem:[#allocation5] sm:$0xff]
          %v1073 = vld [vmem:[#allocation5 + $0x8] sm:$0xff]
          %v1074 = vld [vmem:[#allocation8] sm:$0xff]
          %v1075 = vadd.f32 %v1072, %v1074
          %v1076 = vadd.f32 %v1073, %v1074
          %vm1077 = vcmask 261120
          %1078 = vst.msk [vmem:[#allocation2] sm:$0xff] %vm1077, %v1075
          %1079 = vst.msk [vmem:[#allocation2 + $0x8] sm:$0xff] %vm1077, %v1076
        $region168: #{tpu_custom_call.1} parent=91 // pred_fallthru
          _
        %v1080 = vld [vmem:[#allocation2] sm:$0xff]
        %v1081 = vld [vmem:[#allocation2 + $0x8] sm:$0xff]
        %v1082 = vld [vmem:[%s867] sm:$0x1]
        %v1083 = vld [vmem:[%s875] sm:$0x1]
        %vm1084 = vcmask 261120
        %v1085 = vsel %vm1084, %v1080, 0.0
        %1086 = vadd.xlane.f32.xlu0 %v1085
        %v1087 = vpop.xlane.xlu0 %1086
        %v1088 = vsel %vm1084, %v1081, 0.0
        %1089 = vadd.xlane.f32.xlu0 %v1088
        %v1090 = vpop.xlane.xlu0 %1089
        %v1091 = vrcp.pop 32.0
        %v1092 = vmul.f32 %v1087, %v1091
        %v1093 = vmul.f32 %v1090, %v1091
        %v1094 = vsub.f32 %v1080, %v1092
        %v1095 = vsub.f32 %v1081, %v1093
        %v1096 = vmul.f32 %v1094, %v1094
        %v1097 = vmul.f32 %v1095, %v1095
        %v1098 = vsel %vm1084, %v1096, 0.0
        %1099 = vadd.xlane.f32.xlu0 %v1098
        %v1100 = vpop.xlane.xlu0 %1099
        %v1101 = vsel %vm1084, %v1097, 0.0
        %1102 = vadd.xlane.f32.xlu0 %v1101
        %v1103 = vpop.xlane.xlu0 %1102
        %v1104 = vmul.f32 %v1100, %v1091
        %v1105 = vmul.f32 %v1103, %v1091
        %v1106 = vadd.f32 %v1104, 1e-05
        %v1107 = vadd.f32 %v1105, 1e-05
        %v1108 = vrsqrt.pop %v1106
        %v1109 = vrsqrt.pop %v1107
        %v1110 = vmul.f32 %v1094, %v1108
        %v1111 = vmul.f32 %v1095, %v1109
        %v1113 = vlaneseq
        %v1114 = vshrl.u32 %v1113, 7
        %v1115 = vsub.s32 0, %v1114
        %v1116 = vrot.slane %v1082, %v1115
        %v1118 = vmul.f32 %v1110, %v1116
        %v1119 = vmul.f32 %v1111, %v1116
        %v1121 = vlaneseq
        %v1122 = vshrl.u32 %v1121, 7
        %v1123 = vsub.s32 0, %v1122
        %v1124 = vrot.slane %v1083, %v1123
        %v1126 = vadd.f32 %v1118, %v1124
        %v1127 = vadd.f32 %v1119, %v1124
        %v1128 = vpack.c.bf16 %v1127, %v1126
        %v1129 = vld [vmem:[%s884] sm:$0xf]
        %v1130 = vld [vmem:[%s884 + $0x4] sm:$0xf]
        %v1131 = vld [vmem:[%s884 + $0x8] sm:$0xf]
        %v1132 = vld [vmem:[%s884 + $0xc] sm:$0xf]
        %v1133 = vld [vmem:[%s892] sm:$0x1]
        %v1135 = vlaneseq
        %v1136 = vshrl.u32 %v1135, 7
        %v1137 = vsub.s32 0, %v1136
        %v1138 = vrot.slane %v1133, %v1137
        %v1144 = vunpack.c.l.b16 %v1129
        %v1145 = vunpack.c.l.b16 %v1130
        %v1146 = vunpack.c.l.b16 %v1131
        %v1147 = vunpack.c.l.b16 %v1132
        %v1148 = vpack.c.b16 %v1145, %v1144
        %v1149 = vpack.c.b16 %v1147, %v1146
        %v1153 = vsel %vm1084, %v1128, 0
        %1155 = vmatprep.subr.bf16.mxu0 0
        %1156 = vmatpush1.bf16.msra.mxu0 %v1148
        %1157 = vmatprep.subr.bf16.mxu0 0
        %1158 = vmatpush1.bf16.msra.mxu0 %v1149
        %1159 = vmatprep.subr.bf16.mxu0 0
        %1160 = vmatpush1.bf16.msra.mxu0 0
        %1161 = vmatprep.subr.bf16.mxu0 0
        %1162 = vmatpush1.bf16.msra.mxu0 0
        %1163 = vmatprep.subr.bf16.mxu0 0
        %1164 = vmatpush1.bf16.msra.mxu0 0
        %1165 = vmatprep.subr.bf16.mxu0 0
        %1166 = vmatpush1.bf16.msra.mxu0 0
        %1167 = vmatprep.subr.bf16.mxu0 0
        %1168 = vmatpush1.bf16.msra.mxu0 0
        %1169 = vmatprep.subr.bf16.mxu0 0
        %1170 = vmatpush1.bf16.msra.mxu0 0
        %1171 = vmatprep.subr.bf16.mxu0 0
        %1172 = vmatpush1.bf16.msra.mxu0 0
        %1173 = vmatprep.subr.bf16.mxu0 0
        %1174 = vmatpush1.bf16.msra.mxu0 0
        %1175 = vmatprep.subr.bf16.mxu0 0
        %1176 = vmatpush1.bf16.msra.mxu0 0
        %1177 = vmatprep.subr.bf16.mxu0 0
        %1178 = vmatpush1.bf16.msra.mxu0 0
        %1179 = vmatprep.subr.bf16.mxu0 0
        %1180 = vmatpush1.bf16.msra.mxu0 0
        %1181 = vmatprep.subr.bf16.mxu0 0
        %1182 = vmatpush1.bf16.msra.mxu0 0
        %1183 = vmatprep.subr.bf16.mxu0 0
        %1184 = vmatpush1.bf16.msra.mxu0 0
        %1185 = vmatprep.subr.bf16.mxu0 0
        %1186 = vmatpush1.bf16.msra.mxu0 0
        %1187 = vmatprep.mubr.bf16.mxu0 0
        %1188 = vmatmul.mubr.bf16.gmra.mrb[0].mxu0 %v1153
        %v1189 = vpop.f32.mrb[0].mxu0
        %v1190 = vadd.f32 %v1138, %v1189
        %v1191 = vpop.f32.mrb[0].mxu0
        %v1192 = vpop.f32.mrb[0].mxu0
        %v1193 = vadd.f32 %v1138, %v1192
        %v1194 = vpop.f32.mrb[0].mxu0
        %1195 = vdwg.mxu0
        %v1196 = vmul.f32 %v1190, 0.35355338
        %v1197 = vmul.f32 %v1193, 0.35355338
        %v1198 = vpack.c.bf16 %v1197, %v1196
        %v1200 = vunpack.c.l.b16 %v1198
        %v1201 = vunpack.c.h.b16 %v1198
        %v1202 = vpack.c.b16 %v1200, %v1200
        %v1203 = vpack.c.b16 %v1201, %v1201
        %v1204 = vpack.c.bf16 %v1193, %v1190
        %v1206 = vunpack.c.l.b16 %v1204
        %v1207 = vunpack.c.h.b16 %v1204
        %v1208 = vld [vmem:[#allocation10] sm:$0xff]
        %v1209 = vpack.c.b16 %v1206, %v1206
        %1210 = vrot.lane.b32.xlu0 %v1209, 96
        %v1211 = vpop.permute.xlu0 %1210
        %vm1212 = vcmask 64512
        %v1214 = vsel %vm1212, %v1202, 0
        %v1217 = vsel %vm1212, %v1211, 0
        %1219 = vmatprep.subr.bf16.mxu0 0
        %1220 = vmatpush1.bf16.xpose.msra.mxu0 %v1217
        %1221 = vmatprep.subr.bf16.mxu0 0
        %1222 = vmatpush1.bf16.xpose.msra.mxu0 0
        %1223 = vmatprep.subr.bf16.mxu0 0
        %1224 = vmatpush1.bf16.xpose.msra.mxu0 0
        %1225 = vmatprep.subr.bf16.mxu0 0
        %1226 = vmatpush1.bf16.xpose.msra.mxu0 0
        %1227 = vmatprep.subr.bf16.mxu0 0
        %1228 = vmatpush1.bf16.xpose.msra.mxu0 0
        %1229 = vmatprep.subr.bf16.mxu0 0
        %1230 = vmatpush1.bf16.xpose.msra.mxu0 0
        %1231 = vmatprep.subr.bf16.mxu0 0
        %1232 = vmatpush1.bf16.xpose.msra.mxu0 0
        %1233 = vmatprep.subr.bf16.mxu0 0
        %1234 = vmatpush1.bf16.xpose.msra.mxu0 0
        %1235 = vmatprep.subr.bf16.mxu0 0
        %1236 = vmatpush1.bf16.xpose.msra.mxu0 0
        %1237 = vmatprep.subr.bf16.mxu0 0
        %1238 = vmatpush1.bf16.xpose.msra.mxu0 0
        %1239 = vmatprep.subr.bf16.mxu0 0
        %1240 = vmatpush1.bf16.xpose.msra.mxu0 0
        %1241 = vmatprep.subr.bf16.mxu0 0
        %1242 = vmatpush1.bf16.xpose.msra.mxu0 0
        %1243 = vmatprep.subr.bf16.mxu0 0
        %1244 = vmatpush1.bf16.xpose.msra.mxu0 0
        %1245 = vmatprep.subr.bf16.mxu0 0
        %1246 = vmatpush1.bf16.xpose.msra.mxu0 0
        %1247 = vmatprep.subr.bf16.mxu0 0
        %1248 = vmatpush1.bf16.xpose.msra.mxu0 0
        %1249 = vmatprep.subr.bf16.mxu0 0
        %1250 = vmatpush1.bf16.xpose.msra.mxu0 0
        %1251 = vmatprep.mubr.bf16.mxu0 0
        %1252 = vmatmul.mubr.bf16.gmra.mrb[0].mxu0 %v1214
        %v1253 = vpop.f32.mrb[0].mxu0
        %v1254 = vadd.f32 %v1208, %v1253
        %v1255 = vpop.f32.mrb[0].mxu0
        %v1256 = vpop.f32.mrb[0].mxu0
        %v1257 = vpop.f32.mrb[0].mxu0
        %1258 = vdwg.mxu0
        %v1259 = vpack.c.b16 %v1207, %v1207
        %1260 = vrot.lane.b32.xlu0 %v1259, 96
        %v1261 = vpop.permute.xlu0 %1260
        %v1263 = vsel %vm1212, %v1203, 0
        %v1266 = vsel %vm1212, %v1261, 0
        %1268 = vmatprep.subr.bf16.mxu0 0
        %1269 = vmatpush1.bf16.xpose.msra.mxu0 %v1266
        %1270 = vmatprep.subr.bf16.mxu0 0
        %1271 = vmatpush1.bf16.xpose.msra.mxu0 0
        %1272 = vmatprep.subr.bf16.mxu0 0
        %1273 = vmatpush1.bf16.xpose.msra.mxu0 0
        %1274 = vmatprep.subr.bf16.mxu0 0
        %1275 = vmatpush1.bf16.xpose.msra.mxu0 0
        %1276 = vmatprep.subr.bf16.mxu0 0
        %1277 = vmatpush1.bf16.xpose.msra.mxu0 0
        %1278 = vmatprep.subr.bf16.mxu0 0
        %1279 = vmatpush1.bf16.xpose.msra.mxu0 0
        %1280 = vmatprep.subr.bf16.mxu0 0
        %1281 = vmatpush1.bf16.xpose.msra.mxu0 0
        %1282 = vmatprep.subr.bf16.mxu0 0
        %1283 = vmatpush1.bf16.xpose.msra.mxu0 0
        %1284 = vmatprep.subr.bf16.mxu0 0
        %1285 = vmatpush1.bf16.xpose.msra.mxu0 0
        %1286 = vmatprep.subr.bf16.mxu0 0
        %1287 = vmatpush1.bf16.xpose.msra.mxu0 0
        %1288 = vmatprep.subr.bf16.mxu0 0
        %1289 = vmatpush1.bf16.xpose.msra.mxu0 0
        %1290 = vmatprep.subr.bf16.mxu0 0
        %1291 = vmatpush1.bf16.xpose.msra.mxu0 0
        %1292 = vmatprep.subr.bf16.mxu0 0
        %1293 = vmatpush1.bf16.xpose.msra.mxu0 0
        %1294 = vmatprep.subr.bf16.mxu0 0
        %1295 = vmatpush1.bf16.xpose.msra.mxu0 0
        %1296 = vmatprep.subr.bf16.mxu0 0
        %1297 = vmatpush1.bf16.xpose.msra.mxu0 0
        %1298 = vmatprep.subr.bf16.mxu0 0
        %1299 = vmatpush1.bf16.xpose.msra.mxu0 0
        %1300 = vmatprep.mubr.bf16.mxu0 0
        %1301 = vmatmul.mubr.bf16.gmra.mrb[0].mxu0 %v1263
        %v1302 = vpop.f32.mrb[0].mxu0
        %v1303 = vadd.f32 %v1208, %v1302
        %v1304 = vpop.f32.mrb[0].mxu0
        %v1305 = vpop.f32.mrb[0].mxu0
        %v1306 = vpop.f32.mrb[0].mxu0
        %1307 = vdwg.mxu0
        %v1308 = vsel %vm1212, %v1254, -inf
        %1309 = vmax.xlane.f32.xlu0 %v1308
        %v1310 = vpop.xlane.xlu0 %1309
        %v1311 = vsel %vm1212, %v1303, -inf
        %1312 = vmax.xlane.f32.xlu0 %v1311
        %v1313 = vpop.xlane.xlu0 %1312
        %v1314 = vsub.f32 %v1254, %v1310
        %v1315 = vsub.f32 %v1303, %v1313
        %v1316 = vmul.f32 %v1314, 1.442695
        %v1317 = vpow.pop %v1316
        %v1318 = vmul.f32 %v1315, 1.442695
        %v1319 = vpow.pop %v1318
        %v1320 = vsel %vm1212, %v1317, 0.0
        %1321 = vadd.xlane.f32.xlu0 %v1320
        %v1322 = vpop.xlane.xlu0 %1321
        %v1323 = vsel %vm1212, %v1319, 0.0
        %1324 = vadd.xlane.f32.xlu0 %v1323
        %v1325 = vpop.xlane.xlu0 %1324
        %v1326 = vrcp.pop %v1322
        %v1327 = vrcp.pop %v1325
        %v1328 = vmul.f32 %v1317, %v1326
        %v1329 = vmul.f32 %v1319, %v1327
        %v1330 = vpack.c.bf16 %v1328, %v1328
        %v1331 = vpack.c.bf16 %v1329, %v1329
        %1332 = vrot.lane.b32.xlu0 %v1209, 64
        %v1333 = vpop.permute.xlu0 %1332
        %v1335 = vsel %vm1212, %v1330, 0
        %vm1337 = vcmask 1043456
        %v1339 = vsel %vm1337, %v1333, 0
        %1341 = vmatprep.subr.bf16.mxu0 0
        %1342 = vmatpush1.bf16.msra.mxu0 %v1339
        %1343 = vmatprep.subr.bf16.mxu0 0
        %1344 = vmatpush1.bf16.msra.mxu0 0
        %1345 = vmatprep.subr.bf16.mxu0 0
        %1346 = vmatpush1.bf16.msra.mxu0 0
        %1347 = vmatprep.subr.bf16.mxu0 0
        %1348 = vmatpush1.bf16.msra.mxu0 0
        %1349 = vmatprep.subr.bf16.mxu0 0
        %1350 = vmatpush1.bf16.msra.mxu0 0
        %1351 = vmatprep.subr.bf16.mxu0 0
        %1352 = vmatpush1.bf16.msra.mxu0 0
        %1353 = vmatprep.subr.bf16.mxu0 0
        %1354 = vmatpush1.bf16.msra.mxu0 0
        %1355 = vmatprep.subr.bf16.mxu0 0
        %1356 = vmatpush1.bf16.msra.mxu0 0
        %1357 = vmatprep.subr.bf16.mxu0 0
        %1358 = vmatpush1.bf16.msra.mxu0 0
        %1359 = vmatprep.subr.bf16.mxu0 0
        %1360 = vmatpush1.bf16.msra.mxu0 0
        %1361 = vmatprep.subr.bf16.mxu0 0
        %1362 = vmatpush1.bf16.msra.mxu0 0
        %1363 = vmatprep.subr.bf16.mxu0 0
        %1364 = vmatpush1.bf16.msra.mxu0 0
        %1365 = vmatprep.subr.bf16.mxu0 0
        %1366 = vmatpush1.bf16.msra.mxu0 0
        %1367 = vmatprep.subr.bf16.mxu0 0
        %1368 = vmatpush1.bf16.msra.mxu0 0
        %1369 = vmatprep.subr.bf16.mxu0 0
        %1370 = vmatpush1.bf16.msra.mxu0 0
        %1371 = vmatprep.subr.bf16.mxu0 0
        %1372 = vmatpush1.bf16.msra.mxu0 0
        %1373 = vmatprep.mubr.bf16.mxu0 0
        %1374 = vmatmul.mubr.bf16.gmra.mrb[0].mxu0 %v1335
        %v1375 = vpop.f32.mrb[0].mxu0
        %v1376 = vadd.f32 0.0, %v1375
        %v1377 = vpop.f32.mrb[0].mxu0
        %v1378 = vpop.f32.mrb[0].mxu0
        %v1379 = vpop.f32.mrb[0].mxu0
        %1380 = vdwg.mxu0
        %1381 = vrot.lane.b32.xlu0 %v1259, 64
        %v1382 = vpop.permute.xlu0 %1381
        %v1384 = vsel %vm1212, %v1331, 0
        %v1387 = vsel %vm1337, %v1382, 0
        %1389 = vmatprep.subr.bf16.mxu0 0
        %1390 = vmatpush1.bf16.msra.mxu0 %v1387
        %1391 = vmatprep.subr.bf16.mxu0 0
        %1392 = vmatpush1.bf16.msra.mxu0 0
        %1393 = vmatprep.subr.bf16.mxu0 0
        %1394 = vmatpush1.bf16.msra.mxu0 0
        %1395 = vmatprep.subr.bf16.mxu0 0
        %1396 = vmatpush1.bf16.msra.mxu0 0
        %1397 = vmatprep.subr.bf16.mxu0 0
        %1398 = vmatpush1.bf16.msra.mxu0 0
        %1399 = vmatprep.subr.bf16.mxu0 0
        %1400 = vmatpush1.bf16.msra.mxu0 0
        %1401 = vmatprep.subr.bf16.mxu0 0
        %1402 = vmatpush1.bf16.msra.mxu0 0
        %1403 = vmatprep.subr.bf16.mxu0 0
        %1404 = vmatpush1.bf16.msra.mxu0 0
        %1405 = vmatprep.subr.bf16.mxu0 0
        %1406 = vmatpush1.bf16.msra.mxu0 0
        %1407 = vmatprep.subr.bf16.mxu0 0
        %1408 = vmatpush1.bf16.msra.mxu0 0
        %1409 = vmatprep.subr.bf16.mxu0 0
        %1410 = vmatpush1.bf16.msra.mxu0 0
        %1411 = vmatprep.subr.bf16.mxu0 0
        %1412 = vmatpush1.bf16.msra.mxu0 0
        %1413 = vmatprep.subr.bf16.mxu0 0
        %1414 = vmatpush1.bf16.msra.mxu0 0
        %1415 = vmatprep.subr.bf16.mxu0 0
        %1416 = vmatpush1.bf16.msra.mxu0 0
        %1417 = vmatprep.subr.bf16.mxu0 0
        %1418 = vmatpush1.bf16.msra.mxu0 0
        %1419 = vmatprep.subr.bf16.mxu0 0
        %1420 = vmatpush1.bf16.msra.mxu0 0
        %1421 = vmatprep.mubr.bf16.mxu0 0
        %1422 = vmatmul.mubr.bf16.gmra.mrb[0].mxu0 %v1384
        %v1423 = vpop.f32.mrb[0].mxu0
        %v1424 = vadd.f32 0.0, %v1423
        %v1425 = vpop.f32.mrb[0].mxu0
        %v1426 = vpop.f32.mrb[0].mxu0
        %v1427 = vpop.f32.mrb[0].mxu0
        %1428 = vdwg.mxu0
        %1429 = vrot.lane.b32.xlu0 %v1202, 120
        %v1430 = vpop.permute.xlu0 %1429
        %1431 = vrot.lane.b32.xlu0 %v1209, 88
        %v1432 = vpop.permute.xlu0 %1431
        %v1434 = vsel %vm1212, %v1430, 0
        %v1437 = vsel %vm1212, %v1432, 0
        %1439 = vmatprep.subr.bf16.mxu0 0
        %1440 = vmatpush1.bf16.xpose.msra.mxu0 %v1437
        %1441 = vmatprep.subr.bf16.mxu0 0
        %1442 = vmatpush1.bf16.xpose.msra.mxu0 0
        %1443 = vmatprep.subr.bf16.mxu0 0
        %1444 = vmatpush1.bf16.xpose.msra.mxu0 0
        %1445 = vmatprep.subr.bf16.mxu0 0
        %1446 = vmatpush1.bf16.xpose.msra.mxu0 0
        %1447 = vmatprep.subr.bf16.mxu0 0
        %1448 = vmatpush1.bf16.xpose.msra.mxu0 0
        %1449 = vmatprep.subr.bf16.mxu0 0
        %1450 = vmatpush1.bf16.xpose.msra.mxu0 0
        %1451 = vmatprep.subr.bf16.mxu0 0
        %1452 = vmatpush1.bf16.xpose.msra.mxu0 0
        %1453 = vmatprep.subr.bf16.mxu0 0
        %1454 = vmatpush1.bf16.xpose.msra.mxu0 0
        %1455 = vmatprep.subr.bf16.mxu0 0
        %1456 = vmatpush1.bf16.xpose.msra.mxu0 0
        %1457 = vmatprep.subr.bf16.mxu0 0
        %1458 = vmatpush1.bf16.xpose.msra.mxu0 0
        %1459 = vmatprep.subr.bf16.mxu0 0
        %1460 = vmatpush1.bf16.xpose.msra.mxu0 0
        %1461 = vmatprep.subr.bf16.mxu0 0
        %1462 = vmatpush1.bf16.xpose.msra.mxu0 0
        %1463 = vmatprep.subr.bf16.mxu0 0
        %1464 = vmatpush1.bf16.xpose.msra.mxu0 0
        %1465 = vmatprep.subr.bf16.mxu0 0
        %1466 = vmatpush1.bf16.xpose.msra.mxu0 0
        %1467 = vmatprep.subr.bf16.mxu0 0
        %1468 = vmatpush1.bf16.xpose.msra.mxu0 0
        %1469 = vmatprep.subr.bf16.mxu0 0
        %1470 = vmatpush1.bf16.xpose.msra.mxu0 0
        %1471 = vmatprep.mubr.bf16.mxu0 0
        %1472 = vmatmul.mubr.bf16.gmra.mrb[0].mxu0 %v1434
        %v1473 = vpop.f32.mrb[0].mxu0
        %v1474 = vadd.f32 %v1208, %v1473
        %v1475 = vpop.f32.mrb[0].mxu0
        %v1476 = vpop.f32.mrb[0].mxu0
        %v1477 = vpop.f32.mrb[0].mxu0
        %1478 = vdwg.mxu0
        %1479 = vrot.lane.b32.xlu0 %v1203, 120
        %v1480 = vpop.permute.xlu0 %1479
        %1481 = vrot.lane.b32.xlu0 %v1259, 88
        %v1482 = vpop.permute.xlu0 %1481
        %v1484 = vsel %vm1212, %v1480, 0
        %v1487 = vsel %vm1212, %v1482, 0
        %1489 = vmatprep.subr.bf16.mxu0 0
        %1490 = vmatpush1.bf16.xpose.msra.mxu0 %v1487
        %1491 = vmatprep.subr.bf16.mxu0 0
        %1492 = vmatpush1.bf16.xpose.msra.mxu0 0
        %1493 = vmatprep.subr.bf16.mxu0 0
        %1494 = vmatpush1.bf16.xpose.msra.mxu0 0
        %1495 = vmatprep.subr.bf16.mxu0 0
        %1496 = vmatpush1.bf16.xpose.msra.mxu0 0
        %1497 = vmatprep.subr.bf16.mxu0 0
        %1498 = vmatpush1.bf16.xpose.msra.mxu0 0
        %1499 = vmatprep.subr.bf16.mxu0 0
        %1500 = vmatpush1.bf16.xpose.msra.mxu0 0
        %1501 = vmatprep.subr.bf16.mxu0 0
        %1502 = vmatpush1.bf16.xpose.msra.mxu0 0
        %1503 = vmatprep.subr.bf16.mxu0 0
        %1504 = vmatpush1.bf16.xpose.msra.mxu0 0
        %1505 = vmatprep.subr.bf16.mxu0 0
        %1506 = vmatpush1.bf16.xpose.msra.mxu0 0
        %1507 = vmatprep.subr.bf16.mxu0 0
        %1508 = vmatpush1.bf16.xpose.msra.mxu0 0
        %1509 = vmatprep.subr.bf16.mxu0 0
        %1510 = vmatpush1.bf16.xpose.msra.mxu0 0
        %1511 = vmatprep.subr.bf16.mxu0 0
        %1512 = vmatpush1.bf16.xpose.msra.mxu0 0
        %1513 = vmatprep.subr.bf16.mxu0 0
        %1514 = vmatpush1.bf16.xpose.msra.mxu0 0
        %1515 = vmatprep.subr.bf16.mxu0 0
        %1516 = vmatpush1.bf16.xpose.msra.mxu0 0
        %1517 = vmatprep.subr.bf16.mxu0 0
        %1518 = vmatpush1.bf16.xpose.msra.mxu0 0
        %1519 = vmatprep.subr.bf16.mxu0 0
        %1520 = vmatpush1.bf16.xpose.msra.mxu0 0
        %1521 = vmatprep.mubr.bf16.mxu0 0
        %1522 = vmatmul.mubr.bf16.gmra.mrb[0].mxu0 %v1484
        %v1523 = vpop.f32.mrb[0].mxu0
        %v1524 = vadd.f32 %v1208, %v1523
        %v1525 = vpop.f32.mrb[0].mxu0
        %v1526 = vpop.f32.mrb[0].mxu0
        %v1527 = vpop.f32.mrb[0].mxu0
        %1528 = vdwg.mxu0
        %v1529 = vsel %vm1212, %v1474, -inf
        %1530 = vmax.xlane.f32.xlu0 %v1529
        %v1531 = vpop.xlane.xlu0 %1530
        %v1532 = vsel %vm1212, %v1524, -inf
        %1533 = vmax.xlane.f32.xlu0 %v1532
        %v1534 = vpop.xlane.xlu0 %1533
        %v1535 = vsub.f32 %v1474, %v1531
        %v1536 = vsub.f32 %v1524, %v1534
        %v1537 = vmul.f32 %v1535, 1.442695
        %v1538 = vpow.pop %v1537
        %v1539 = vmul.f32 %v1536, 1.442695
        %v1540 = vpow.pop %v1539
        %v1541 = vsel %vm1212, %v1538, 0.0
        %1542 = vadd.xlane.f32.xlu0 %v1541
        %v1543 = vpop.xlane.xlu0 %1542
        %v1544 = vsel %vm1212, %v1540, 0.0
        %1545 = vadd.xlane.f32.xlu0 %v1544
        %v1546 = vpop.xlane.xlu0 %1545
        %v1547 = vrcp.pop %v1543
        %v1548 = vrcp.pop %v1546
        %v1549 = vmul.f32 %v1538, %v1547
        %v1550 = vmul.f32 %v1540, %v1548
        %v1551 = vpack.c.bf16 %v1549, %v1549
        %v1552 = vpack.c.bf16 %v1550, %v1550
        %1553 = vrot.lane.b32.xlu0 %v1209, 56
        %v1554 = vpop.permute.xlu0 %1553
        %v1556 = vsel %vm1212, %v1551, 0
        %v1559 = vsel %vm1337, %v1554, 0
        %1561 = vmatprep.subr.bf16.mxu0 0
        %1562 = vmatpush1.bf16.msra.mxu0 %v1559
        %1563 = vmatprep.subr.bf16.mxu0 0
        %1564 = vmatpush1.bf16.msra.mxu0 0
        %1565 = vmatprep.subr.bf16.mxu0 0
        %1566 = vmatpush1.bf16.msra.mxu0 0
        %1567 = vmatprep.subr.bf16.mxu0 0
        %1568 = vmatpush1.bf16.msra.mxu0 0
        %1569 = vmatprep.subr.bf16.mxu0 0
        %1570 = vmatpush1.bf16.msra.mxu0 0
        %1571 = vmatprep.subr.bf16.mxu0 0
        %1572 = vmatpush1.bf16.msra.mxu0 0
        %1573 = vmatprep.subr.bf16.mxu0 0
        %1574 = vmatpush1.bf16.msra.mxu0 0
        %1575 = vmatprep.subr.bf16.mxu0 0
        %1576 = vmatpush1.bf16.msra.mxu0 0
        %1577 = vmatprep.subr.bf16.mxu0 0
        %1578 = vmatpush1.bf16.msra.mxu0 0
        %1579 = vmatprep.subr.bf16.mxu0 0
        %1580 = vmatpush1.bf16.msra.mxu0 0
        %1581 = vmatprep.subr.bf16.mxu0 0
        %1582 = vmatpush1.bf16.msra.mxu0 0
        %1583 = vmatprep.subr.bf16.mxu0 0
        %1584 = vmatpush1.bf16.msra.mxu0 0
        %1585 = vmatprep.subr.bf16.mxu0 0
        %1586 = vmatpush1.bf16.msra.mxu0 0
        %1587 = vmatprep.subr.bf16.mxu0 0
        %1588 = vmatpush1.bf16.msra.mxu0 0
        %1589 = vmatprep.subr.bf16.mxu0 0
        %1590 = vmatpush1.bf16.msra.mxu0 0
        %1591 = vmatprep.subr.bf16.mxu0 0
        %1592 = vmatpush1.bf16.msra.mxu0 0
        %1593 = vmatprep.mubr.bf16.mxu0 0
        %1594 = vmatmul.mubr.bf16.gmra.mrb[0].mxu0 %v1556
        %v1595 = vpop.f32.mrb[0].mxu0
        %v1596 = vadd.f32 0.0, %v1595
        %v1597 = vpop.f32.mrb[0].mxu0
        %v1598 = vpop.f32.mrb[0].mxu0
        %v1599 = vpop.f32.mrb[0].mxu0
        %1600 = vdwg.mxu0
        %1601 = vrot.lane.b32.xlu0 %v1259, 56
        %v1602 = vpop.permute.xlu0 %1601
        %v1604 = vsel %vm1212, %v1552, 0
        %v1607 = vsel %vm1337, %v1602, 0
        %1609 = vmatprep.subr.bf16.mxu0 0
        %1610 = vmatpush1.bf16.msra.mxu0 %v1607
        %1611 = vmatprep.subr.bf16.mxu0 0
        %1612 = vmatpush1.bf16.msra.mxu0 0
        %1613 = vmatprep.subr.bf16.mxu0 0
        %1614 = vmatpush1.bf16.msra.mxu0 0
        %1615 = vmatprep.subr.bf16.mxu0 0
        %1616 = vmatpush1.bf16.msra.mxu0 0
        %1617 = vmatprep.subr.bf16.mxu0 0
        %1618 = vmatpush1.bf16.msra.mxu0 0
        %1619 = vmatprep.subr.bf16.mxu0 0
        %1620 = vmatpush1.bf16.msra.mxu0 0
        %1621 = vmatprep.subr.bf16.mxu0 0
        %1622 = vmatpush1.bf16.msra.mxu0 0
        %1623 = vmatprep.subr.bf16.mxu0 0
        %1624 = vmatpush1.bf16.msra.mxu0 0
        %1625 = vmatprep.subr.bf16.mxu0 0
        %1626 = vmatpush1.bf16.msra.mxu0 0
        %1627 = vmatprep.subr.bf16.mxu0 0
        %1628 = vmatpush1.bf16.msra.mxu0 0
        %1629 = vmatprep.subr.bf16.mxu0 0
        %1630 = vmatpush1.bf16.msra.mxu0 0
        %1631 = vmatprep.subr.bf16.mxu0 0
        %1632 = vmatpush1.bf16.msra.mxu0 0
        %1633 = vmatprep.subr.bf16.mxu0 0
        %1634 = vmatpush1.bf16.msra.mxu0 0
        %1635 = vmatprep.subr.bf16.mxu0 0
        %1636 = vmatpush1.bf16.msra.mxu0 0
        %1637 = vmatprep.subr.bf16.mxu0 0
        %1638 = vmatpush1.bf16.msra.mxu0 0
        %1639 = vmatprep.subr.bf16.mxu0 0
        %1640 = vmatpush1.bf16.msra.mxu0 0
        %1641 = vmatprep.mubr.bf16.mxu0 0
        %1642 = vmatmul.mubr.bf16.gmra.mrb[0].mxu0 %v1604
        %v1643 = vpop.f32.mrb[0].mxu0
        %v1644 = vadd.f32 0.0, %v1643
        %v1645 = vpop.f32.mrb[0].mxu0
        %v1646 = vpop.f32.mrb[0].mxu0
        %v1647 = vpop.f32.mrb[0].mxu0
        %1648 = vdwg.mxu0
        %1649 = vrot.lane.b32.xlu0 %v1202, 112
        %v1650 = vpop.permute.xlu0 %1649
        %1651 = vrot.lane.b32.xlu0 %v1209, 80
        %v1652 = vpop.permute.xlu0 %1651
        %v1654 = vsel %vm1212, %v1650, 0
        %v1657 = vsel %vm1212, %v1652, 0
        %1659 = vmatprep.subr.bf16.mxu0 0
        %1660 = vmatpush1.bf16.xpose.msra.mxu0 %v1657
        %1661 = vmatprep.subr.bf16.mxu0 0
        %1662 = vmatpush1.bf16.xpose.msra.mxu0 0
        %1663 = vmatprep.subr.bf16.mxu0 0
        %1664 = vmatpush1.bf16.xpose.msra.mxu0 0
        %1665 = vmatprep.subr.bf16.mxu0 0
        %1666 = vmatpush1.bf16.xpose.msra.mxu0 0
        %1667 = vmatprep.subr.bf16.mxu0 0
        %1668 = vmatpush1.bf16.xpose.msra.mxu0 0
        %1669 = vmatprep.subr.bf16.mxu0 0
        %1670 = vmatpush1.bf16.xpose.msra.mxu0 0
        %1671 = vmatprep.subr.bf16.mxu0 0
        %1672 = vmatpush1.bf16.xpose.msra.mxu0 0
        %1673 = vmatprep.subr.bf16.mxu0 0
        %1674 = vmatpush1.bf16.xpose.msra.mxu0 0
        %1675 = vmatprep.subr.bf16.mxu0 0
        %1676 = vmatpush1.bf16.xpose.msra.mxu0 0
        %1677 = vmatprep.subr.bf16.mxu0 0
        %1678 = vmatpush1.bf16.xpose.msra.mxu0 0
        %1679 = vmatprep.subr.bf16.mxu0 0
        %1680 = vmatpush1.bf16.xpose.msra.mxu0 0
        %1681 = vmatprep.subr.bf16.mxu0 0
        %1682 = vmatpush1.bf16.xpose.msra.mxu0 0
        %1683 = vmatprep.subr.bf16.mxu0 0
        %1684 = vmatpush1.bf16.xpose.msra.mxu0 0
        %1685 = vmatprep.subr.bf16.mxu0 0
        %1686 = vmatpush1.bf16.xpose.msra.mxu0 0
        %1687 = vmatprep.subr.bf16.mxu0 0
        %1688 = vmatpush1.bf16.xpose.msra.mxu0 0
        %1689 = vmatprep.subr.bf16.mxu0 0
        %1690 = vmatpush1.bf16.xpose.msra.mxu0 0
        %1691 = vmatprep.mubr.bf16.mxu0 0
        %1692 = vmatmul.mubr.bf16.gmra.mrb[0].mxu0 %v1654
        %v1693 = vpop.f32.mrb[0].mxu0
        %v1694 = vadd.f32 %v1208, %v1693
        %v1695 = vpop.f32.mrb[0].mxu0
        %v1696 = vpop.f32.mrb[0].mxu0
        %v1697 = vpop.f32.mrb[0].mxu0
        %1698 = vdwg.mxu0
        %1699 = vrot.lane.b32.xlu0 %v1203, 112
        %v1700 = vpop.permute.xlu0 %1699
        %1701 = vrot.lane.b32.xlu0 %v1259, 80
        %v1702 = vpop.permute.xlu0 %1701
        %v1704 = vsel %vm1212, %v1700, 0
        %v1707 = vsel %vm1212, %v1702, 0
        %1709 = vmatprep.subr.bf16.mxu0 0
        %1710 = vmatpush1.bf16.xpose.msra.mxu0 %v1707
        %1711 = vmatprep.subr.bf16.mxu0 0
        %1712 = vmatpush1.bf16.xpose.msra.mxu0 0
        %1713 = vmatprep.subr.bf16.mxu0 0
        %1714 = vmatpush1.bf16.xpose.msra.mxu0 0
        %1715 = vmatprep.subr.bf16.mxu0 0
        %1716 = vmatpush1.bf16.xpose.msra.mxu0 0
        %1717 = vmatprep.subr.bf16.mxu0 0
        %1718 = vmatpush1.bf16.xpose.msra.mxu0 0
        %1719 = vmatprep.subr.bf16.mxu0 0
        %1720 = vmatpush1.bf16.xpose.msra.mxu0 0
        %1721 = vmatprep.subr.bf16.mxu0 0
        %1722 = vmatpush1.bf16.xpose.msra.mxu0 0
        %1723 = vmatprep.subr.bf16.mxu0 0
        %1724 = vmatpush1.bf16.xpose.msra.mxu0 0
        %1725 = vmatprep.subr.bf16.mxu0 0
        %1726 = vmatpush1.bf16.xpose.msra.mxu0 0
        %1727 = vmatprep.subr.bf16.mxu0 0
        %1728 = vmatpush1.bf16.xpose.msra.mxu0 0
        %1729 = vmatprep.subr.bf16.mxu0 0
        %1730 = vmatpush1.bf16.xpose.msra.mxu0 0
        %1731 = vmatprep.subr.bf16.mxu0 0
        %1732 = vmatpush1.bf16.xpose.msra.mxu0 0
        %1733 = vmatprep.subr.bf16.mxu0 0
        %1734 = vmatpush1.bf16.xpose.msra.mxu0 0
        %1735 = vmatprep.subr.bf16.mxu0 0
        %1736 = vmatpush1.bf16.xpose.msra.mxu0 0
        %1737 = vmatprep.subr.bf16.mxu0 0
        %1738 = vmatpush1.bf16.xpose.msra.mxu0 0
        %1739 = vmatprep.subr.bf16.mxu0 0
        %1740 = vmatpush1.bf16.xpose.msra.mxu0 0
        %1741 = vmatprep.mubr.bf16.mxu0 0
        %1742 = vmatmul.mubr.bf16.gmra.mrb[0].mxu0 %v1704
        %v1743 = vpop.f32.mrb[0].mxu0
        %v1744 = vadd.f32 %v1208, %v1743
        %v1745 = vpop.f32.mrb[0].mxu0
        %v1746 = vpop.f32.mrb[0].mxu0
        %v1747 = vpop.f32.mrb[0].mxu0
        %1748 = vdwg.mxu0
        %v1749 = vsel %vm1212, %v1694, -inf
        %1750 = vmax.xlane.f32.xlu0 %v1749
        %v1751 = vpop.xlane.xlu0 %1750
        %v1752 = vsel %vm1212, %v1744, -inf
        %1753 = vmax.xlane.f32.xlu0 %v1752
        %v1754 = vpop.xlane.xlu0 %1753
        %v1755 = vsub.f32 %v1694, %v1751
        %v1756 = vsub.f32 %v1744, %v1754
        %v1757 = vmul.f32 %v1755, 1.442695
        %v1758 = vpow.pop %v1757
        %v1759 = vmul.f32 %v1756, 1.442695
        %v1760 = vpow.pop %v1759
        %v1761 = vsel %vm1212, %v1758, 0.0
        %1762 = vadd.xlane.f32.xlu0 %v1761
        %v1763 = vpop.xlane.xlu0 %1762
        %v1764 = vsel %vm1212, %v1760, 0.0
        %1765 = vadd.xlane.f32.xlu0 %v1764
        %v1766 = vpop.xlane.xlu0 %1765
        %v1767 = vrcp.pop %v1763
        %v1768 = vrcp.pop %v1766
        %v1769 = vmul.f32 %v1758, %v1767
        %v1770 = vmul.f32 %v1760, %v1768
        %v1771 = vpack.c.bf16 %v1769, %v1769
        %v1772 = vpack.c.bf16 %v1770, %v1770
        %1773 = vrot.lane.b32.xlu0 %v1209, 48
        %v1774 = vpop.permute.xlu0 %1773
        %v1776 = vsel %vm1212, %v1771, 0
        %v1779 = vsel %vm1337, %v1774, 0
        %1781 = vmatprep.subr.bf16.mxu0 0
        %1782 = vmatpush1.bf16.msra.mxu0 %v1779
        %1783 = vmatprep.subr.bf16.mxu0 0
        %1784 = vmatpush1.bf16.msra.mxu0 0
        %1785 = vmatprep.subr.bf16.mxu0 0
        %1786 = vmatpush1.bf16.msra.mxu0 0
        %1787 = vmatprep.subr.bf16.mxu0 0
        %1788 = vmatpush1.bf16.msra.mxu0 0
        %1789 = vmatprep.subr.bf16.mxu0 0
        %1790 = vmatpush1.bf16.msra.mxu0 0
        %1791 = vmatprep.subr.bf16.mxu0 0
        %1792 = vmatpush1.bf16.msra.mxu0 0
        %1793 = vmatprep.subr.bf16.mxu0 0
        %1794 = vmatpush1.bf16.msra.mxu0 0
        %1795 = vmatprep.subr.bf16.mxu0 0
        %1796 = vmatpush1.bf16.msra.mxu0 0
        %1797 = vmatprep.subr.bf16.mxu0 0
        %1798 = vmatpush1.bf16.msra.mxu0 0
        %1799 = vmatprep.subr.bf16.mxu0 0
        %1800 = vmatpush1.bf16.msra.mxu0 0
        %1801 = vmatprep.subr.bf16.mxu0 0
        %1802 = vmatpush1.bf16.msra.mxu0 0
        %1803 = vmatprep.subr.bf16.mxu0 0
        %1804 = vmatpush1.bf16.msra.mxu0 0
        %1805 = vmatprep.subr.bf16.mxu0 0
        %1806 = vmatpush1.bf16.msra.mxu0 0
        %1807 = vmatprep.subr.bf16.mxu0 0
        %1808 = vmatpush1.bf16.msra.mxu0 0
        %1809 = vmatprep.subr.bf16.mxu0 0
        %1810 = vmatpush1.bf16.msra.mxu0 0
        %1811 = vmatprep.subr.bf16.mxu0 0
        %1812 = vmatpush1.bf16.msra.mxu0 0
        %1813 = vmatprep.mubr.bf16.mxu0 0
        %1814 = vmatmul.mubr.bf16.gmra.mrb[0].mxu0 %v1776
        %v1815 = vpop.f32.mrb[0].mxu0
        %v1816 = vadd.f32 0.0, %v1815
        %v1817 = vpop.f32.mrb[0].mxu0
        %v1818 = vpop.f32.mrb[0].mxu0
        %v1819 = vpop.f32.mrb[0].mxu0
        %1820 = vdwg.mxu0
        %1821 = vrot.lane.b32.xlu0 %v1259, 48
        %v1822 = vpop.permute.xlu0 %1821
        %v1824 = vsel %vm1212, %v1772, 0
        %v1827 = vsel %vm1337, %v1822, 0
        %1829 = vmatprep.subr.bf16.mxu0 0
        %1830 = vmatpush1.bf16.msra.mxu0 %v1827
        %1831 = vmatprep.subr.bf16.mxu0 0
        %1832 = vmatpush1.bf16.msra.mxu0 0
        %1833 = vmatprep.subr.bf16.mxu0 0
        %1834 = vmatpush1.bf16.msra.mxu0 0
        %1835 = vmatprep.subr.bf16.mxu0 0
        %1836 = vmatpush1.bf16.msra.mxu0 0
        %1837 = vmatprep.subr.bf16.mxu0 0
        %1838 = vmatpush1.bf16.msra.mxu0 0
        %1839 = vmatprep.subr.bf16.mxu0 0
        %1840 = vmatpush1.bf16.msra.mxu0 0
        %1841 = vmatprep.subr.bf16.mxu0 0
        %1842 = vmatpush1.bf16.msra.mxu0 0
        %1843 = vmatprep.subr.bf16.mxu0 0
        %1844 = vmatpush1.bf16.msra.mxu0 0
        %1845 = vmatprep.subr.bf16.mxu0 0
        %1846 = vmatpush1.bf16.msra.mxu0 0
        %1847 = vmatprep.subr.bf16.mxu0 0
        %1848 = vmatpush1.bf16.msra.mxu0 0
        %1849 = vmatprep.subr.bf16.mxu0 0
        %1850 = vmatpush1.bf16.msra.mxu0 0
        %1851 = vmatprep.subr.bf16.mxu0 0
        %1852 = vmatpush1.bf16.msra.mxu0 0
        %1853 = vmatprep.subr.bf16.mxu0 0
        %1854 = vmatpush1.bf16.msra.mxu0 0
        %1855 = vmatprep.subr.bf16.mxu0 0
        %1856 = vmatpush1.bf16.msra.mxu0 0
        %1857 = vmatprep.subr.bf16.mxu0 0
        %1858 = vmatpush1.bf16.msra.mxu0 0
        %1859 = vmatprep.subr.bf16.mxu0 0
        %1860 = vmatpush1.bf16.msra.mxu0 0
        %1861 = vmatprep.mubr.bf16.mxu0 0
        %1862 = vmatmul.mubr.bf16.gmra.mrb[0].mxu0 %v1824
        %v1863 = vpop.f32.mrb[0].mxu0
        %v1864 = vadd.f32 0.0, %v1863
        %v1865 = vpop.f32.mrb[0].mxu0
        %v1866 = vpop.f32.mrb[0].mxu0
        %v1867 = vpop.f32.mrb[0].mxu0
        %1868 = vdwg.mxu0
        %1869 = vrot.lane.b32.xlu0 %v1202, 104
        %v1870 = vpop.permute.xlu0 %1869
        %1871 = vrot.lane.b32.xlu0 %v1209, 72
        %v1872 = vpop.permute.xlu0 %1871
        %v1874 = vsel %vm1212, %v1870, 0
        %v1877 = vsel %vm1212, %v1872, 0
        %1879 = vmatprep.subr.bf16.mxu0 0
        %1880 = vmatpush1.bf16.xpose.msra.mxu0 %v1877
        %1881 = vmatprep.subr.bf16.mxu0 0
        %1882 = vmatpush1.bf16.xpose.msra.mxu0 0
        %1883 = vmatprep.subr.bf16.mxu0 0
        %1884 = vmatpush1.bf16.xpose.msra.mxu0 0
        %1885 = vmatprep.subr.bf16.mxu0 0
        %1886 = vmatpush1.bf16.xpose.msra.mxu0 0
        %1887 = vmatprep.subr.bf16.mxu0 0
        %1888 = vmatpush1.bf16.xpose.msra.mxu0 0
        %1889 = vmatprep.subr.bf16.mxu0 0
        %1890 = vmatpush1.bf16.xpose.msra.mxu0 0
        %1891 = vmatprep.subr.bf16.mxu0 0
        %1892 = vmatpush1.bf16.xpose.msra.mxu0 0
        %1893 = vmatprep.subr.bf16.mxu0 0
        %1894 = vmatpush1.bf16.xpose.msra.mxu0 0
        %1895 = vmatprep.subr.bf16.mxu0 0
        %1896 = vmatpush1.bf16.xpose.msra.mxu0 0
        %1897 = vmatprep.subr.bf16.mxu0 0
        %1898 = vmatpush1.bf16.xpose.msra.mxu0 0
        %1899 = vmatprep.subr.bf16.mxu0 0
        %1900 = vmatpush1.bf16.xpose.msra.mxu0 0
        %1901 = vmatprep.subr.bf16.mxu0 0
        %1902 = vmatpush1.bf16.xpose.msra.mxu0 0
        %1903 = vmatprep.subr.bf16.mxu0 0
        %1904 = vmatpush1.bf16.xpose.msra.mxu0 0
        %1905 = vmatprep.subr.bf16.mxu0 0
        %1906 = vmatpush1.bf16.xpose.msra.mxu0 0
        %1907 = vmatprep.subr.bf16.mxu0 0
        %1908 = vmatpush1.bf16.xpose.msra.mxu0 0
        %1909 = vmatprep.subr.bf16.mxu0 0
        %1910 = vmatpush1.bf16.xpose.msra.mxu0 0
        %1911 = vmatprep.mubr.bf16.mxu0 0
        %1912 = vmatmul.mubr.bf16.gmra.mrb[0].mxu0 %v1874
        %v1913 = vpop.f32.mrb[0].mxu0
        %v1914 = vadd.f32 %v1208, %v1913
        %v1915 = vpop.f32.mrb[0].mxu0
        %v1916 = vpop.f32.mrb[0].mxu0
        %v1917 = vpop.f32.mrb[0].mxu0
        %1918 = vdwg.mxu0
        %1919 = vrot.lane.b32.xlu0 %v1203, 104
        %v1920 = vpop.permute.xlu0 %1919
        %1921 = vrot.lane.b32.xlu0 %v1259, 72
        %v1922 = vpop.permute.xlu0 %1921
        %v1924 = vsel %vm1212, %v1920, 0
        %v1927 = vsel %vm1212, %v1922, 0
        %1929 = vmatprep.subr.bf16.mxu0 0
        %1930 = vmatpush1.bf16.xpose.msra.mxu0 %v1927
        %1931 = vmatprep.subr.bf16.mxu0 0
        %1932 = vmatpush1.bf16.xpose.msra.mxu0 0
        %1933 = vmatprep.subr.bf16.mxu0 0
        %1934 = vmatpush1.bf16.xpose.msra.mxu0 0
        %1935 = vmatprep.subr.bf16.mxu0 0
        %1936 = vmatpush1.bf16.xpose.msra.mxu0 0
        %1937 = vmatprep.subr.bf16.mxu0 0
        %1938 = vmatpush1.bf16.xpose.msra.mxu0 0
        %1939 = vmatprep.subr.bf16.mxu0 0
        %1940 = vmatpush1.bf16.xpose.msra.mxu0 0
        %1941 = vmatprep.subr.bf16.mxu0 0
        %1942 = vmatpush1.bf16.xpose.msra.mxu0 0
        %1943 = vmatprep.subr.bf16.mxu0 0
        %1944 = vmatpush1.bf16.xpose.msra.mxu0 0
        %1945 = vmatprep.subr.bf16.mxu0 0
        %1946 = vmatpush1.bf16.xpose.msra.mxu0 0
        %1947 = vmatprep.subr.bf16.mxu0 0
        %1948 = vmatpush1.bf16.xpose.msra.mxu0 0
        %1949 = vmatprep.subr.bf16.mxu0 0
        %1950 = vmatpush1.bf16.xpose.msra.mxu0 0
        %1951 = vmatprep.subr.bf16.mxu0 0
        %1952 = vmatpush1.bf16.xpose.msra.mxu0 0
        %1953 = vmatprep.subr.bf16.mxu0 0
        %1954 = vmatpush1.bf16.xpose.msra.mxu0 0
        %1955 = vmatprep.subr.bf16.mxu0 0
        %1956 = vmatpush1.bf16.xpose.msra.mxu0 0
        %1957 = vmatprep.subr.bf16.mxu0 0
        %1958 = vmatpush1.bf16.xpose.msra.mxu0 0
        %1959 = vmatprep.subr.bf16.mxu0 0
        %1960 = vmatpush1.bf16.xpose.msra.mxu0 0
        %1961 = vmatprep.mubr.bf16.mxu0 0
        %1962 = vmatmul.mubr.bf16.gmra.mrb[0].mxu0 %v1924
        %v1963 = vpop.f32.mrb[0].mxu0
        %v1964 = vadd.f32 %v1208, %v1963
        %v1965 = vpop.f32.mrb[0].mxu0
        %v1966 = vpop.f32.mrb[0].mxu0
        %v1967 = vpop.f32.mrb[0].mxu0
        %1968 = vdwg.mxu0
        %v1969 = vsel %vm1212, %v1914, -inf
        %1970 = vmax.xlane.f32.xlu0 %v1969
        %v1971 = vpop.xlane.xlu0 %1970
        %v1972 = vsel %vm1212, %v1964, -inf
        %1973 = vmax.xlane.f32.xlu0 %v1972
        %v1974 = vpop.xlane.xlu0 %1973
        %v1975 = vsub.f32 %v1914, %v1971
        %v1976 = vsub.f32 %v1964, %v1974
        %v1977 = vmul.f32 %v1975, 1.442695
        %v1978 = vpow.pop %v1977
        %v1979 = vmul.f32 %v1976, 1.442695
        %v1980 = vpow.pop %v1979
        %v1981 = vsel %vm1212, %v1978, 0.0
        %1982 = vadd.xlane.f32.xlu0 %v1981
        %v1983 = vpop.xlane.xlu0 %1982
        %v1984 = vsel %vm1212, %v1980, 0.0
        %1985 = vadd.xlane.f32.xlu0 %v1984
        %v1986 = vpop.xlane.xlu0 %1985
        %v1987 = vrcp.pop %v1983
        %v1988 = vrcp.pop %v1986
        %v1989 = vmul.f32 %v1978, %v1987
        %v1990 = vmul.f32 %v1980, %v1988
        %v1991 = vpack.c.bf16 %v1989, %v1989
        %v1992 = vpack.c.bf16 %v1990, %v1990
        %1993 = vrot.lane.b32.xlu0 %v1209, 40
        %v1994 = vpop.permute.xlu0 %1993
        %v1996 = vsel %vm1212, %v1991, 0
        %v1999 = vsel %vm1337, %v1994, 0
        %2001 = vmatprep.subr.bf16.mxu0 0
        %2002 = vmatpush1.bf16.msra.mxu0 %v1999
        %2003 = vmatprep.subr.bf16.mxu0 0
        %2004 = vmatpush1.bf16.msra.mxu0 0
        %2005 = vmatprep.subr.bf16.mxu0 0
        %2006 = vmatpush1.bf16.msra.mxu0 0
        %2007 = vmatprep.subr.bf16.mxu0 0
        %2008 = vmatpush1.bf16.msra.mxu0 0
        %2009 = vmatprep.subr.bf16.mxu0 0
        %2010 = vmatpush1.bf16.msra.mxu0 0
        %2011 = vmatprep.subr.bf16.mxu0 0
        %2012 = vmatpush1.bf16.msra.mxu0 0
        %2013 = vmatprep.subr.bf16.mxu0 0
        %2014 = vmatpush1.bf16.msra.mxu0 0
        %2015 = vmatprep.subr.bf16.mxu0 0
        %2016 = vmatpush1.bf16.msra.mxu0 0
        %2017 = vmatprep.subr.bf16.mxu0 0
        %2018 = vmatpush1.bf16.msra.mxu0 0
        %2019 = vmatprep.subr.bf16.mxu0 0
        %2020 = vmatpush1.bf16.msra.mxu0 0
        %2021 = vmatprep.subr.bf16.mxu0 0
        %2022 = vmatpush1.bf16.msra.mxu0 0
        %2023 = vmatprep.subr.bf16.mxu0 0
        %2024 = vmatpush1.bf16.msra.mxu0 0
        %2025 = vmatprep.subr.bf16.mxu0 0
        %2026 = vmatpush1.bf16.msra.mxu0 0
        %2027 = vmatprep.subr.bf16.mxu0 0
        %2028 = vmatpush1.bf16.msra.mxu0 0
        %2029 = vmatprep.subr.bf16.mxu0 0
        %2030 = vmatpush1.bf16.msra.mxu0 0
        %2031 = vmatprep.subr.bf16.mxu0 0
        %2032 = vmatpush1.bf16.msra.mxu0 0
        %2033 = vmatprep.mubr.bf16.mxu0 0
        %2034 = vmatmul.mubr.bf16.gmra.mrb[0].mxu0 %v1996
        %v2035 = vpop.f32.mrb[0].mxu0
        %v2036 = vadd.f32 0.0, %v2035
        %v2037 = vpop.f32.mrb[0].mxu0
        %v2038 = vpop.f32.mrb[0].mxu0
        %v2039 = vpop.f32.mrb[0].mxu0
        %2040 = vdwg.mxu0
        %2041 = vrot.lane.b32.xlu0 %v1259, 40
        %v2042 = vpop.permute.xlu0 %2041
        %v2044 = vsel %vm1212, %v1992, 0
        %v2047 = vsel %vm1337, %v2042, 0
        %2049 = vmatprep.subr.bf16.mxu0 0
        %2050 = vmatpush1.bf16.msra.mxu0 %v2047
        %2051 = vmatprep.subr.bf16.mxu0 0
        %2052 = vmatpush1.bf16.msra.mxu0 0
        %2053 = vmatprep.subr.bf16.mxu0 0
        %2054 = vmatpush1.bf16.msra.mxu0 0
        %2055 = vmatprep.subr.bf16.mxu0 0
        %2056 = vmatpush1.bf16.msra.mxu0 0
        %2057 = vmatprep.subr.bf16.mxu0 0
        %2058 = vmatpush1.bf16.msra.mxu0 0
        %2059 = vmatprep.subr.bf16.mxu0 0
        %2060 = vmatpush1.bf16.msra.mxu0 0
        %2061 = vmatprep.subr.bf16.mxu0 0
        %2062 = vmatpush1.bf16.msra.mxu0 0
        %2063 = vmatprep.subr.bf16.mxu0 0
        %2064 = vmatpush1.bf16.msra.mxu0 0
        %2065 = vmatprep.subr.bf16.mxu0 0
        %2066 = vmatpush1.bf16.msra.mxu0 0
        %2067 = vmatprep.subr.bf16.mxu0 0
        %2068 = vmatpush1.bf16.msra.mxu0 0
        %2069 = vmatprep.subr.bf16.mxu0 0
        %2070 = vmatpush1.bf16.msra.mxu0 0
        %2071 = vmatprep.subr.bf16.mxu0 0
        %2072 = vmatpush1.bf16.msra.mxu0 0
        %2073 = vmatprep.subr.bf16.mxu0 0
        %2074 = vmatpush1.bf16.msra.mxu0 0
        %2075 = vmatprep.subr.bf16.mxu0 0
        %2076 = vmatpush1.bf16.msra.mxu0 0
        %2077 = vmatprep.subr.bf16.mxu0 0
        %2078 = vmatpush1.bf16.msra.mxu0 0
        %2079 = vmatprep.subr.bf16.mxu0 0
        %2080 = vmatpush1.bf16.msra.mxu0 0
        %2081 = vmatprep.mubr.bf16.mxu0 0
        %2082 = vmatmul.mubr.bf16.gmra.mrb[0].mxu0 %v2044
        %v2083 = vpop.f32.mrb[0].mxu0
        %v2084 = vadd.f32 0.0, %v2083
        %v2085 = vpop.f32.mrb[0].mxu0
        %v2086 = vpop.f32.mrb[0].mxu0
        %v2087 = vpop.f32.mrb[0].mxu0
        %2088 = vdwg.mxu0
        %2091 = vrot.lane.b32.xlu0 %v1596, 8
        %v2092 = vpop.permute.xlu0 %2091
        %2093 = vrot.lane.b32.xlu0 %v1644, 8
        %v2094 = vpop.permute.xlu0 %2093
        %2099 = vrot.lane.b32.xlu0 %v1816, 16
        %v2100 = vpop.permute.xlu0 %2099
        %2101 = vrot.lane.b32.xlu0 %v1864, 16
        %v2102 = vpop.permute.xlu0 %2101
        %2107 = vrot.lane.b32.xlu0 %v2036, 24
        %v2108 = vpop.permute.xlu0 %2107
        %2109 = vrot.lane.b32.xlu0 %v2084, 24
        %v2110 = vpop.permute.xlu0 %2109
        %v2113 = vsel %vm1212, %v1376, %v2092
        %v2114 = vsel %vm1212, %v1424, %v2094
        %vm2115 = vcmask 130048
        %v2116 = vsel %vm2115, %v2113, %v2100
        %v2117 = vsel %vm2115, %v2114, %v2102
        %vm2118 = vcmask 195584
        %v2119 = vsel %vm2118, %v2116, %v2108
        %v2120 = vsel %vm2118, %v2117, %v2110
        %v2121 = vpack.c.bf16 %v2120, %v2119
        %v2122 = vld [vmem:[%s901] sm:$0xf]
        %v2123 = vld [vmem:[%s901 + $0x4] sm:$0xf]
        %v2124 = vld [vmem:[%s901 + $0x8] sm:$0xf]
        %v2125 = vld [vmem:[%s901 + $0xc] sm:$0xf]
        %v2126 = vld [vmem:[%s909] sm:$0x1]
        %v2128 = vlaneseq
        %v2129 = vshrl.u32 %v2128, 7
        %v2130 = vsub.s32 0, %v2129
        %v2131 = vrot.slane %v2126, %v2130
        %v2137 = vunpack.c.l.b16 %v2122
        %v2138 = vunpack.c.l.b16 %v2123
        %v2139 = vunpack.c.l.b16 %v2124
        %v2140 = vunpack.c.l.b16 %v2125
        %v2141 = vpack.c.b16 %v2138, %v2137
        %v2142 = vpack.c.b16 %v2140, %v2139
        %v2146 = vsel %vm1084, %v2121, 0
        %2148 = vmatprep.subr.bf16.mxu0 0
        %2149 = vmatpush1.bf16.msra.mxu0 %v2141
        %2150 = vmatprep.subr.bf16.mxu0 0
        %2151 = vmatpush1.bf16.msra.mxu0 %v2142
        %2152 = vmatprep.subr.bf16.mxu0 0
        %2153 = vmatpush1.bf16.msra.mxu0 0
        %2154 = vmatprep.subr.bf16.mxu0 0
        %2155 = vmatpush1.bf16.msra.mxu0 0
        %2156 = vmatprep.subr.bf16.mxu0 0
        %2157 = vmatpush1.bf16.msra.mxu0 0
        %2158 = vmatprep.subr.bf16.mxu0 0
        %2159 = vmatpush1.bf16.msra.mxu0 0
        %2160 = vmatprep.subr.bf16.mxu0 0
        %2161 = vmatpush1.bf16.msra.mxu0 0
        %2162 = vmatprep.subr.bf16.mxu0 0
        %2163 = vmatpush1.bf16.msra.mxu0 0
        %2164 = vmatprep.subr.bf16.mxu0 0
        %2165 = vmatpush1.bf16.msra.mxu0 0
        %2166 = vmatprep.subr.bf16.mxu0 0
        %2167 = vmatpush1.bf16.msra.mxu0 0
        %2168 = vmatprep.subr.bf16.mxu0 0
        %2169 = vmatpush1.bf16.msra.mxu0 0
        %2170 = vmatprep.subr.bf16.mxu0 0
        %2171 = vmatpush1.bf16.msra.mxu0 0
        %2172 = vmatprep.subr.bf16.mxu0 0
        %2173 = vmatpush1.bf16.msra.mxu0 0
        %2174 = vmatprep.subr.bf16.mxu0 0
        %2175 = vmatpush1.bf16.msra.mxu0 0
        %2176 = vmatprep.subr.bf16.mxu0 0
        %2177 = vmatpush1.bf16.msra.mxu0 0
        %2178 = vmatprep.subr.bf16.mxu0 0
        %2179 = vmatpush1.bf16.msra.mxu0 0
        %2180 = vmatprep.mubr.bf16.mxu0 0
        %2181 = vmatmul.mubr.bf16.gmra.mrb[0].mxu0 %v2146
        %v2182 = vpop.f32.mrb[0].mxu0
        %v2183 = vadd.f32 %v2131, %v2182
        %v2184 = vpop.f32.mrb[0].mxu0
        %v2185 = vpop.f32.mrb[0].mxu0
        %v2186 = vadd.f32 %v2131, %v2185
        %v2187 = vpop.f32.mrb[0].mxu0
        %2188 = vdwg.mxu0
        %v2189 = vadd.f32 %v1080, %v2183
        %v2190 = vadd.f32 %v1081, %v2186
        %2191 = vst.msk [vmem:[#allocation2] sm:$0xff] %vm1084, %v2189
        %2192 = vst.msk [vmem:[#allocation2 + $0x8] sm:$0xff] %vm1084, %v2190
        %v2193 = vld [vmem:[#allocation2] sm:$0xff]
        %v2194 = vld [vmem:[#allocation2 + $0x8] sm:$0xff]
        %v2195 = vld [vmem:[%s917] sm:$0x1]
        %v2196 = vld [vmem:[%s925] sm:$0x1]
        %v2197 = vsel %vm1084, %v2193, 0.0
        %2198 = vadd.xlane.f32.xlu0 %v2197
        %v2199 = vpop.xlane.xlu0 %2198
        %v2200 = vsel %vm1084, %v2194, 0.0
        %2201 = vadd.xlane.f32.xlu0 %v2200
        %v2202 = vpop.xlane.xlu0 %2201
        %v2203 = vmul.f32 %v2199, %v1091
        %v2204 = vmul.f32 %v2202, %v1091
        %v2205 = vsub.f32 %v2193, %v2203
        %v2206 = vsub.f32 %v2194, %v2204
        %v2207 = vmul.f32 %v2205, %v2205
        %v2208 = vmul.f32 %v2206, %v2206
        %v2209 = vsel %vm1084, %v2207, 0.0
        %2210 = vadd.xlane.f32.xlu0 %v2209
        %v2211 = vpop.xlane.xlu0 %2210
        %v2212 = vsel %vm1084, %v2208, 0.0
        %2213 = vadd.xlane.f32.xlu0 %v2212
        %v2214 = vpop.xlane.xlu0 %2213
        %v2215 = vmul.f32 %v2211, %v1091
        %v2216 = vmul.f32 %v2214, %v1091
        %v2217 = vadd.f32 %v2215, 1e-05
        %v2218 = vadd.f32 %v2216, 1e-05
        %v2219 = vrsqrt.pop %v2217
        %v2220 = vrsqrt.pop %v2218
        %v2221 = vmul.f32 %v2205, %v2219
        %v2222 = vmul.f32 %v2206, %v2220
        %v2224 = vlaneseq
        %v2225 = vshrl.u32 %v2224, 7
        %v2226 = vsub.s32 0, %v2225
        %v2227 = vrot.slane %v2195, %v2226
        %v2229 = vmul.f32 %v2221, %v2227
        %v2230 = vmul.f32 %v2222, %v2227
        %v2232 = vlaneseq
        %v2233 = vshrl.u32 %v2232, 7
        %v2234 = vsub.s32 0, %v2233
        %v2235 = vrot.slane %v2196, %v2234
        %v2237 = vadd.f32 %v2229, %v2235
        %v2238 = vadd.f32 %v2230, %v2235
        %v2239 = vpack.c.bf16 %v2238, %v2237
        %v2240 = vld [vmem:[%s934] sm:$0xf]
        %v2241 = vld [vmem:[%s934 + $0x4] sm:$0xf]
        %v2242 = vld [vmem:[%s934 + $0x8] sm:$0xf]
        %v2243 = vld [vmem:[%s934 + $0xc] sm:$0xf]
        %v2244 = vld [vmem:[%s942] sm:$0x1]
        %v2246 = vlaneseq
        %v2247 = vshrl.u32 %v2246, 7
        %v2248 = vsub.s32 0, %v2247
        %v2249 = vrot.slane %v2244, %v2248
        %v2255 = vunpack.c.l.b16 %v2240
        %v2256 = vunpack.c.l.b16 %v2241
        %v2257 = vunpack.c.l.b16 %v2242
        %v2258 = vunpack.c.l.b16 %v2243
        %v2259 = vpack.c.b16 %v2256, %v2255
        %v2260 = vpack.c.b16 %v2258, %v2257
        %v2264 = vsel %vm1084, %v2239, 0
        %2266 = vmatprep.subr.bf16.mxu0 0
        %2267 = vmatpush1.bf16.msra.mxu0 %v2259
        %2268 = vmatprep.subr.bf16.mxu0 0
        %2269 = vmatpush1.bf16.msra.mxu0 %v2260
        %2270 = vmatprep.subr.bf16.mxu0 0
        %2271 = vmatpush1.bf16.msra.mxu0 0
        %2272 = vmatprep.subr.bf16.mxu0 0
        %2273 = vmatpush1.bf16.msra.mxu0 0
        %2274 = vmatprep.subr.bf16.mxu0 0
        %2275 = vmatpush1.bf16.msra.mxu0 0
        %2276 = vmatprep.subr.bf16.mxu0 0
        %2277 = vmatpush1.bf16.msra.mxu0 0
        %2278 = vmatprep.subr.bf16.mxu0 0
        %2279 = vmatpush1.bf16.msra.mxu0 0
        %2280 = vmatprep.subr.bf16.mxu0 0
        %2281 = vmatpush1.bf16.msra.mxu0 0
        %2282 = vmatprep.subr.bf16.mxu0 0
        %2283 = vmatpush1.bf16.msra.mxu0 0
        %2284 = vmatprep.subr.bf16.mxu0 0
        %2285 = vmatpush1.bf16.msra.mxu0 0
        %2286 = vmatprep.subr.bf16.mxu0 0
        %2287 = vmatpush1.bf16.msra.mxu0 0
        %2288 = vmatprep.subr.bf16.mxu0 0
        %2289 = vmatpush1.bf16.msra.mxu0 0
        %2290 = vmatprep.subr.bf16.mxu0 0
        %2291 = vmatpush1.bf16.msra.mxu0 0
        %2292 = vmatprep.subr.bf16.mxu0 0
        %2293 = vmatpush1.bf16.msra.mxu0 0
        %2294 = vmatprep.subr.bf16.mxu0 0
        %2295 = vmatpush1.bf16.msra.mxu0 0
        %2296 = vmatprep.subr.bf16.mxu0 0
        %2297 = vmatpush1.bf16.msra.mxu0 0
        %2298 = vmatprep.mubr.bf16.mxu0 0
        %2299 = vmatmul.mubr.bf16.gmra.mrb[0].mxu0 %v2264
        %v2300 = vpop.f32.mrb[0].mxu0
        %v2301 = vadd.f32 %v2249, %v2300
        %v2302 = vpop.f32.mrb[0].mxu0
        %v2303 = vpop.f32.mrb[0].mxu0
        %v2304 = vadd.f32 %v2249, %v2303
        %v2305 = vpop.f32.mrb[0].mxu0
        %2306 = vdwg.mxu0
        %v2307 = vmul.f32 %v2301, 1.702
        %v2308 = vmul.f32 %v2304, 1.702
        %v2309 = vxor.u32 %v2307, 2147483648
        %v2310 = vxor.u32 %v2308, 2147483648
        %v2311 = vmul.f32 %v2309, 1.442695
        %v2312 = vpow.pop %v2311
        %v2313 = vmul.f32 %v2310, 1.442695
        %v2314 = vpow.pop %v2313
        %v2315 = vadd.f32 %v2312, 1.0
        %v2316 = vadd.f32 %v2314, 1.0
        %v2317 = vrcp.pop %v2315
        %v2318 = vmul.f32 1.0, %v2317
        %v2319 = vrcp.pop %v2316
        %v2320 = vmul.f32 1.0, %v2319
        %v2321 = vmul.f32 %v2301, %v2318
        %v2322 = vmul.f32 %v2304, %v2320
        %v2323 = vpack.c.bf16 %v2322, %v2321
        %v2324 = vld [vmem:[%s951] sm:$0xf]
        %v2325 = vld [vmem:[%s951 + $0x4] sm:$0xf]
        %v2326 = vld [vmem:[%s951 + $0x8] sm:$0xf]
        %v2327 = vld [vmem:[%s951 + $0xc] sm:$0xf]
        %v2328 = vld [vmem:[%s951 + $0x10] sm:$0xf]
        %v2329 = vld [vmem:[%s951 + $0x14] sm:$0xf]
        %v2330 = vld [vmem:[%s951 + $0x18] sm:$0xf]
        %v2331 = vld [vmem:[%s951 + $0x1c] sm:$0xf]
        %v2332 = vld [vmem:[%s951 + $0x20] sm:$0xf]
        %v2333 = vld [vmem:[%s951 + $0x24] sm:$0xf]
        %v2334 = vld [vmem:[%s951 + $0x28] sm:$0xf]
        %v2335 = vld [vmem:[%s951 + $0x2c] sm:$0xf]
        %v2336 = vld [vmem:[%s951 + $0x30] sm:$0xf]
        %v2337 = vld [vmem:[%s951 + $0x34] sm:$0xf]
        %v2338 = vld [vmem:[%s951 + $0x38] sm:$0xf]
        %v2339 = vld [vmem:[%s951 + $0x3c] sm:$0xf]
        %v2340 = vld [vmem:[%s959] sm:$0x1]
        %v2342 = vlaneseq
        %v2343 = vshrl.u32 %v2342, 7
        %v2344 = vsub.s32 0, %v2343
        %v2345 = vrot.slane %v2340, %v2344
        %v2363 = vunpack.c.l.b16 %v2324
        %v2364 = vunpack.c.l.b16 %v2325
        %v2365 = vunpack.c.l.b16 %v2326
        %v2366 = vunpack.c.l.b16 %v2327
        %v2367 = vunpack.c.l.b16 %v2328
        %v2368 = vunpack.c.l.b16 %v2329
        %v2369 = vunpack.c.l.b16 %v2330
        %v2370 = vunpack.c.l.b16 %v2331
        %v2371 = vunpack.c.l.b16 %v2332
        %v2372 = vunpack.c.l.b16 %v2333
        %v2373 = vunpack.c.l.b16 %v2334
        %v2374 = vunpack.c.l.b16 %v2335
        %v2375 = vunpack.c.l.b16 %v2336
        %v2376 = vunpack.c.l.b16 %v2337
        %v2377 = vunpack.c.l.b16 %v2338
        %v2378 = vunpack.c.l.b16 %v2339
        %v2379 = vpack.c.b16 %v2364, %v2363
        %v2380 = vpack.c.b16 %v2366, %v2365
        %v2381 = vpack.c.b16 %v2368, %v2367
        %v2382 = vpack.c.b16 %v2370, %v2369
        %v2383 = vpack.c.b16 %v2372, %v2371
        %v2384 = vpack.c.b16 %v2374, %v2373
        %v2385 = vpack.c.b16 %v2376, %v2375
        %v2386 = vpack.c.b16 %v2378, %v2377
        %2395 = vmatprep.subr.bf16.mxu0 0
        %2396 = vmatpush1.bf16.msra.mxu0 %v2379
        %2397 = vmatprep.subr.bf16.mxu0 0
        %2398 = vmatpush1.bf16.msra.mxu0 %v2380
        %2399 = vmatprep.subr.bf16.mxu0 0
        %2400 = vmatpush1.bf16.msra.mxu0 %v2381
        %2401 = vmatprep.subr.bf16.mxu0 0
        %2402 = vmatpush1.bf16.msra.mxu0 %v2382
        %2403 = vmatprep.subr.bf16.mxu0 0
        %2404 = vmatpush1.bf16.msra.mxu0 %v2383
        %2405 = vmatprep.subr.bf16.mxu0 0
        %2406 = vmatpush1.bf16.msra.mxu0 %v2384
        %2407 = vmatprep.subr.bf16.mxu0 0
        %2408 = vmatpush1.bf16.msra.mxu0 %v2385
        %2409 = vmatprep.subr.bf16.mxu0 0
        %2410 = vmatpush1.bf16.msra.mxu0 %v2386
        %2411 = vmatprep.subr.bf16.mxu0 0
        %2412 = vmatpush1.bf16.msra.mxu0 0
        %2413 = vmatprep.subr.bf16.mxu0 0
        %2414 = vmatpush1.bf16.msra.mxu0 0
        %2415 = vmatprep.subr.bf16.mxu0 0
        %2416 = vmatpush1.bf16.msra.mxu0 0
        %2417 = vmatprep.subr.bf16.mxu0 0
        %2418 = vmatpush1.bf16.msra.mxu0 0
        %2419 = vmatprep.subr.bf16.mxu0 0
        %2420 = vmatpush1.bf16.msra.mxu0 0
        %2421 = vmatprep.subr.bf16.mxu0 0
        %2422 = vmatpush1.bf16.msra.mxu0 0
        %2423 = vmatprep.subr.bf16.mxu0 0
        %2424 = vmatpush1.bf16.msra.mxu0 0
        %2425 = vmatprep.subr.bf16.mxu0 0
        %2426 = vmatpush1.bf16.msra.mxu0 0
        %2427 = vmatprep.mubr.bf16.mxu0 0
        %2428 = vmatmul.mubr.bf16.gmra.mrb[0].mxu0 %v2323
        %v2429 = vpop.f32.mrb[0].mxu0
        %v2430 = vadd.f32 %v2345, %v2429
        %v2431 = vpop.f32.mrb[0].mxu0
        %v2432 = vpop.f32.mrb[0].mxu0
        %v2433 = vadd.f32 %v2345, %v2432
        %v2434 = vpop.f32.mrb[0].mxu0
        %2435 = vdwg.mxu0
        %v2436 = vadd.f32 %v2193, %v2430
        %v2437 = vadd.f32 %v2194, %v2433
        %2438 = vst.msk [vmem:[#allocation2] sm:$0xff] %vm1084, %v2436
        %2439 = vst.msk [vmem:[#allocation2 + $0x8] sm:$0xff] %vm1084, %v2437
        %p2440 = scmp.eq.s32.totalorder %s62, 1
        // Predicated region
        $region169: #{tpu_custom_call.1} parent=91 // pred_check
          %p2441 = pneg %p2440
        $region170: #{tpu_custom_call.1} parent=91 // pred_check_branch
          %2443 = sbr.rel (%p2441) target = $region172
        $region171: #{tpu_custom_call.1} parent=91 // pred_region
          %s2444 = smul.u32 %s61, 2
          %s2445 = sld [smem:[#allocation4 + %s2444]]
          %s2446 = scalar_lea.vmem [#allocation2], %s2445
          %v2447 = vld [vmem:[%s2446] sm:$0x1]
          %s2448 = sadd.s32 %s2444, 1
          %s2449 = sld [smem:[#allocation4 + %s2448]]
          %s2450 = sadd.s32 %s2449, 8
          %s2451 = scalar_lea.vmem [#allocation2], %s2450
          %v2452 = vld [vmem:[%s2451] sm:$0x1]
          %v2454 = vrot.slane %v2452, 7
          %vm2456 = vcmask 1040384
          %v2457 = vsel %vm2456, %v2447, %v2454
          %v2458 = vld [vmem:[#allocation29] sm:$0x1]
          %v2459 = vld [vmem:[#allocation31] sm:$0x1]
          %vm2460 = vcmask 254976
          %v2461 = vsel %vm2460, %v2457, 0.0
          %2462 = vadd.xlane.f32.xlu0 %v2461
          %v2463 = vpop.xlane.xlu0 %2462
          %v2464 = vmul.f32 %v2463, %v1091
          %v2465 = vsub.f32 %v2457, %v2464
          %v2466 = vmul.f32 %v2465, %v2465
          %v2467 = vsel %vm2460, %v2466, 0.0
          %2468 = vadd.xlane.f32.xlu0 %v2467
          %v2469 = vpop.xlane.xlu0 %2468
          %v2470 = vmul.f32 %v2469, %v1091
          %v2471 = vadd.f32 %v2470, 1e-05
          %v2472 = vrsqrt.pop %v2471
          %v2473 = vmul.f32 %v2465, %v2472
          %v2475 = vlaneseq
          %v2476 = vshrl.u32 %v2475, 7
          %v2477 = vsub.s32 0, %v2476
          %v2478 = vrot.slane %v2458, %v2477
          %v2480 = vmul.f32 %v2473, %v2478
          %v2482 = vlaneseq
          %v2483 = vshrl.u32 %v2482, 7
          %v2484 = vsub.s32 0, %v2483
          %v2485 = vrot.slane %v2459, %v2484
          %v2487 = vadd.f32 %v2480, %v2485
          %v2488 = vpack.c.bf16 %v2487, %v2487
          %v2489 = vld [vmem:[#allocation32] sm:$0xf]
          %v2490 = vld [vmem:[#allocation32 + $0x4] sm:$0xf]
          %v2491 = vld [vmem:[#allocation32 + $0x8] sm:$0xf]
          %v2492 = vld [vmem:[#allocation32 + $0xc] sm:$0xf]
          %v2497 = vunpack.c.l.b16 %v2489
          %v2498 = vunpack.c.l.b16 %v2490
          %v2499 = vunpack.c.l.b16 %v2491
          %v2500 = vunpack.c.l.b16 %v2492
          %v2501 = vpack.c.b16 %v2498, %v2497
          %v2502 = vpack.c.b16 %v2500, %v2499
          %v2506 = vsel %vm1084, %v2488, 0
          %2508 = vmatprep.subr.bf16.mxu0 0
          %2509 = vmatpush1.bf16.msra.mxu0 %v2501
          %2510 = vmatprep.subr.bf16.mxu0 0
          %2511 = vmatpush1.bf16.msra.mxu0 %v2502
          %2512 = vmatprep.subr.bf16.mxu0 0
          %2513 = vmatpush1.bf16.msra.mxu0 0
          %2514 = vmatprep.subr.bf16.mxu0 0
          %2515 = vmatpush1.bf16.msra.mxu0 0
          %2516 = vmatprep.subr.bf16.mxu0 0
          %2517 = vmatpush1.bf16.msra.mxu0 0
          %2518 = vmatprep.subr.bf16.mxu0 0
          %2519 = vmatpush1.bf16.msra.mxu0 0
          %2520 = vmatprep.subr.bf16.mxu0 0
          %2521 = vmatpush1.bf16.msra.mxu0 0
          %2522 = vmatprep.subr.bf16.mxu0 0
          %2523 = vmatpush1.bf16.msra.mxu0 0
          %2524 = vmatprep.subr.bf16.mxu0 0
          %2525 = vmatpush1.bf16.msra.mxu0 0
          %2526 = vmatprep.subr.bf16.mxu0 0
          %2527 = vmatpush1.bf16.msra.mxu0 0
          %2528 = vmatprep.subr.bf16.mxu0 0
          %2529 = vmatpush1.bf16.msra.mxu0 0
          %2530 = vmatprep.subr.bf16.mxu0 0
          %2531 = vmatpush1.bf16.msra.mxu0 0
          %2532 = vmatprep.subr.bf16.mxu0 0
          %2533 = vmatpush1.bf16.msra.mxu0 0
          %2534 = vmatprep.subr.bf16.mxu0 0
          %2535 = vmatpush1.bf16.msra.mxu0 0
          %2536 = vmatprep.subr.bf16.mxu0 0
          %2537 = vmatpush1.bf16.msra.mxu0 0
          %2538 = vmatprep.subr.bf16.mxu0 0
          %2539 = vmatpush1.bf16.msra.mxu0 0
          %2540 = vmatprep.mubr.bf16.mxu0 0
          %2541 = vmatmul.mubr.bf16.gmra.mrb[0].mxu0 %v2506
          %v2542 = vpop.f32.mrb[0].mxu0
          %v2543 = vadd.f32 0.0, %v2542
          %v2544 = vpop.f32.mrb[0].mxu0
          %v2545 = vpop.f32.mrb[0].mxu0
          %v2546 = vpop.f32.mrb[0].mxu0
          %2547 = vdwg.mxu0
          %vm2548 = vcmask 517120
          %2549 = vst.msk [vmem:[#allocation34] sm:$0x3] %vm2548, %v2543
        $region172: #{tpu_custom_call.1} parent=91 // pred_fallthru
          _
        // Predicated region
        $region173: #{tpu_custom_call.1} parent=91 // pred_check
          %p2550 = pneg %p530
        $region174: #{tpu_custom_call.1} parent=91 // pred_check_branch
          %2552 = sbr.rel (%p2550) target = $region176
        $region175: #{tpu_custom_call.1} parent=91 // pred_region
          %s2554 = ssub.s32 32, 32
          %2555 = vsyncadd [#allocation7], %s2554
          %s2556 = smul.addr %s61, 32
          %s2557 = scalar_lea.hbm %s19, %s2556
          %s2559 = sshll.u32 [#allocation34], 4
          %s2560 = int_to_ptr.vmem [resolvable:$true] %s2559
          %2562 = dma.vmem_to_hbm [thread:$0]  %s2560, 32, %s2557, [#allocation7]
        $region176: #{tpu_custom_call.1} parent=91 // pred_fallthru
          _
        // Predicated region
        $region177: #{tpu_custom_call.1} parent=91 // pred_check
          %p2563 = pneg %p530
        $region178: #{tpu_custom_call.1} parent=91 // pred_check_branch
          %2565 = sbr.rel (%p2563) target = $region180
        $region179: #{tpu_custom_call.1} parent=91 // pred_region
          %2566 = dma.done [#allocation7], 32
        $region180: #{tpu_custom_call.1} parent=91 // pred_fallthru
          _
      $region92: #{tpu_custom_call.1} parent=5 // pred_fallthru
        _
      %p2567 = scmp.le.s32.totalorder 2, %s52
      // Predicated region
      $region181: #{tpu_custom_call.1} parent=5 // pred_check
        %p2568 = pneg %p2567
      $region182: #{tpu_custom_call.1} parent=5 // pred_check_branch
        %2570 = sbr.rel (%p2568) target = $region184
      $region183: #{tpu_custom_call.1} parent=5 // pred_region
        %s2571 = ssub.s32 %s52, 2
      $region184: #{tpu_custom_call.1} parent=5 // pred_fallthru
        _
    $region6: #{tpu_custom_call.1} parent=1 // loop_footer
      %s56 = sadd.s32 1, %s52
    $region7: #{tpu_custom_call.1} parent=1 // loop_footer_branch
      %51 = sbr.rel target = $region3
    $region8: #{tpu_custom_call.1} parent=1 // loop_exit
      _
    %2572 = vsyncpa [#allocation6], 1
    %s2573 = scalar_lea.sflag [#allocation6], 1
    %2574 = vsyncpa %s2573, 1
    %2575 = vsyncpa [#allocation9], 1
    %2576 = vsyncpa [#allocation12], 1
    %s2577 = scalar_lea.sflag [#allocation12], 1
    %2578 = vsyncpa %s2577, 1
    %2579 = vsyncpa [#allocation15], 1
    %s2580 = scalar_lea.sflag [#allocation15], 1
    %2581 = vsyncpa %s2580, 1
    %2582 = vsyncpa [#allocation18], 1
    %s2583 = scalar_lea.sflag [#allocation18], 1
    %2584 = vsyncpa %s2583, 1
    %2585 = vsyncpa [#allocation21], 1
    %s2586 = scalar_lea.sflag [#allocation21], 1
    %2587 = vsyncpa %s2586, 1
    %2588 = vsyncpa [#allocation24], 1
    %s2589 = scalar_lea.sflag [#allocation24], 1
    %2590 = vsyncpa %s2589, 1
    %2591 = vsyncpa [#allocation27], 1
    %s2592 = scalar_lea.sflag [#allocation27], 1
    %2593 = vsyncpa %s2592, 1
    %2594 = vsyncpa [#allocation30], 1
    %2595 = vsyncpa [#allocation33], 1
    %2596 = vsyncpa [#allocation7], 1
    %s2597 = scalar_lea.sflag [#allocation7], 1
    %2598 = vsyncpa %s2597, 1

</llo_original>
